<compile_context>
chip_gen: v7x
topology: tpu7x:2x2x1
jax: 0.10.0
libtpu: 0.0.40
codegen_flags: <defaults>
</compile_context>

<pallas_src>
import functools
import math

import jax
import jax.numpy as jnp
from jax.experimental import pallas as pl
from jax.experimental.pallas import tpu as pltpu


def _layer_norm(h, gamma, beta, eps=1e-5):
    # LayerNorm over the feature dim, biased variance (matches torch.nn.LayerNorm), f32 math.
    mu = jnp.mean(h, axis=-1, keepdims=True)
    var = jnp.mean((h - mu) * (h - mu), axis=-1, keepdims=True)
    return (h - mu) * jax.lax.rsqrt(var + eps) * gamma + beta


def encoder_layer_kernel(bias_ref, x16_ref, xq_ref,
                         wq_ref, bq_ref, wk_ref, bk_ref, wv_ref, bv_ref,
                         wo_ref, bo_ref,
                         g1_ref, be1_ref,
                         w1_ref, bf1_ref, w2_ref, bf2_ref,
                         g2_ref, be2_ref,
                         o_ref,
                         kcache_ref, vcache_ref,
                         *, num_heads):
    d_model = wq_ref.shape[0]
    d_head = d_model // num_heads
    tq = o_ref.shape[1]
    qi = pl.program_id(1)
    bf16 = jnp.bfloat16

    # --- K/V projections: once per batch step, cached (bf16) across all query tiles. -----
    @pl.when(qi == 0)
    def _():
        x_full16 = x16_ref[0]                                         # (S, D) bf16
        k = jnp.dot(x_full16, wk_ref[...],
                    preferred_element_type=jnp.float32) + bk_ref[...]
        v = jnp.dot(x_full16, wv_ref[...],
                    preferred_element_type=jnp.float32) + bv_ref[...]
        kcache_ref[...] = k.astype(bf16)
        vcache_ref[...] = v.astype(bf16)

    # --- Q projection for this query tile (1/sqrt(d_head) pre-folded into Wq/bq). --------
    row0 = pl.multiple_of(qi * tq, tq)
    x_q16 = x16_ref[0, pl.ds(row0, tq), :]                            # (TQ, D) bf16
    x_q = xq_ref[0]                                                   # (TQ, D) f32 residual
    q_all = (jnp.dot(x_q16, wq_ref[...], preferred_element_type=jnp.float32)
             + bq_ref[...]).astype(bf16)                              # (TQ, D)

    k_all = kcache_ref[...]                                           # (S, D) bf16
    v_all = vcache_ref[...]                                           # (S, D) bf16
    bias = bias_ref[0]                                                # (1, S) additive mask

    # --- Per-head attention; pack contexts lane-dense, then one (TQ,D)@(D,D) Wo matmul. --
    ctx_parts = []
    for h in range(num_heads):
        lo = h * d_head
        q_h = q_all[:, lo:lo + d_head]                                # (TQ, Dh)
        k_h = k_all[:, lo:lo + d_head]                                # (S, Dh)
        v_h = v_all[:, lo:lo + d_head]                                # (S, Dh)
        s = jnp.einsum('qd,kd->qk', q_h, k_h,
                       preferred_element_type=jnp.float32) + bias     # (TQ, S) f32
        s = s - jnp.max(s, axis=-1, keepdims=True)
        p = jnp.exp(s)
        p = p * pl.reciprocal(jnp.sum(p, axis=-1, keepdims=True), approx=True)
        ctx_parts.append(jnp.dot(p.astype(bf16), v_h,
                                 preferred_element_type=jnp.float32))  # (TQ, Dh) f32
    ctx = jnp.concatenate(ctx_parts, axis=-1).astype(bf16)             # (TQ, D) lane-dense
    attn_out = jnp.dot(ctx, wo_ref[...],
                       preferred_element_type=jnp.float32) + bo_ref[...]

    # --- Add & Norm 1 (dropout = identity in eval mode). ---------------------------------
    x1 = _layer_norm(x_q + attn_out, g1_ref[...], be1_ref[...])

    # --- Position-wise feed-forward (bf16 matmuls, f32 accumulate). -----------------------
    ff = jnp.dot(x1.astype(bf16), w1_ref[...],
                 preferred_element_type=jnp.float32) + bf1_ref[...]
    ff = jnp.maximum(ff, 0.0)
    ff = jnp.dot(ff.astype(bf16), w2_ref[...],
                 preferred_element_type=jnp.float32) + bf2_ref[...]

    # --- Add & Norm 2. ---------------------------------------------------------------------
    out = _layer_norm(x1 + ff, g2_ref[...], be2_ref[...])
    o_ref[0] = out.astype(o_ref.dtype)


def encoder_layer(x, key_mask, params, num_heads, q_tile=128):
    """x: (B, S, D) f32.  key_mask: (B, 1, S) with 1 = attend, 0 = masked key position."""
    B, S, D = x.shape
    d_ff = params["w1"].shape[-1]
    d_head = D // num_heads
    tq = min(q_tile, S)
    assert S % tq == 0 and tq % 8 == 0 and D % num_heads == 0
    nq = S // tq

    bf16 = jnp.bfloat16
    f32 = jnp.float32
    scale = 1.0 / math.sqrt(d_head)

    # Host-side prep: bf16 activation copy for the matmul path, additive mask bias,
    # attention scale folded into Wq/bq, bf16 weights.
    x16 = x.astype(bf16)
    mask_bias = jnp.where(key_mask == 0.0, -1e9, 0.0).astype(f32)     # (B, 1, S)
    wq = (params["wq"] * scale).astype(bf16)
    bq = (params["bq"] * scale).astype(f32)
    wk = params["wk"].astype(bf16)
    wv = params["wv"].astype(bf16)
    wo = params["wo"].astype(bf16)
    w1 = params["w1"].astype(bf16)
    w2 = params["w2"].astype(bf16)

    rep = lambda shape: pl.BlockSpec(shape, lambda b, q: (0, 0))

    in_specs = [
        pl.BlockSpec((1, 1, S), lambda b, q: (b, 0, 0)),       # additive key-padding bias
        pl.BlockSpec((1, S, D), lambda b, q: (b, 0, 0)),       # x bf16, full sequence
        pl.BlockSpec((1, tq, D), lambda b, q: (b, q, 0)),      # x f32, query tile (residual)
        rep((D, D)), rep((1, D)),                              # Wq (pre-scaled), bq
        rep((D, D)), rep((1, D)),                              # Wk, bk
        rep((D, D)), rep((1, D)),                              # Wv, bv
        rep((D, D)), rep((1, D)),                              # Wo, bo
        rep((1, D)), rep((1, D)),                              # gamma1, beta1
        rep((D, d_ff)), rep((1, d_ff)),                        # W1, b1
        rep((d_ff, D)), rep((1, D)),                           # W2, b2
        rep((1, D)), rep((1, D)),                              # gamma2, beta2
    ]

    # FLOPs: QKV + Wo projections (8*S*D*D), scores + ctx (4*S*S*D), FFN (4*S*D*d_ff).
    flops = int(B * (8 * S * D * D + 4 * S * S * D + 4 * S * D * d_ff))
    transcendentals = int(B * num_heads * S * S)
    bytes_weights = 2 * (4 * D * D + 2 * D * d_ff) + 4 * (7 * D + d_ff)
    bytes_accessed = int(B * S * D * (2 + 4 + 4) + 4 * B * S + bytes_weights)

    kernel = functools.partial(encoder_layer_kernel, num_heads=num_heads)

    return pl.pallas_call(
        kernel,
        out_shape=jax.ShapeDtypeStruct((B, S, D), jnp.float32),
        grid=(B, nq),
        in_specs=in_specs,
        out_specs=pl.BlockSpec((1, tq, D), lambda b, q: (b, q, 0)),
        scratch_shapes=[pltpu.VMEM((S, D), bf16),     # K cache (all heads, lane-dense)
                        pltpu.VMEM((S, D), bf16)],    # V cache
        compiler_params=pltpu.CompilerParams(
            # q axis must be "arbitrary": the K/V cache written at qi==0 is reused by all
            # later q tiles of the same batch step; batch stays "parallel" for megacore.
            dimension_semantics=("parallel", "arbitrary"),
            vmem_limit_bytes=48 * 1024 * 1024),
        cost_estimate=pl.CostEstimate(flops=flops,
                                      transcendentals=transcendentals,
                                      bytes_accessed=bytes_accessed),
    )(mask_bias, x16, x,
      wq, bq, wk, params["bk"], wv, params["bv"], wo, params["bo"],
      params["g1"], params["be1"],
      w1, params["bf1"], w2, params["bf2"],
      params["g2"], params["be2"])


def init_params(key, d_model, d_ff):
    ks = jax.random.split(key, 6)
    s = 0.05
    return {
        "wq": jax.random.normal(ks[0], (d_model, d_model), jnp.float32) * s,
        "wk": jax.random.normal(ks[1], (d_model, d_model), jnp.float32) * s,
        "wv": jax.random.normal(ks[2], (d_model, d_model), jnp.float32) * s,
        "wo": jax.random.normal(ks[3], (d_model, d_model), jnp.float32) * s,
        "bq": jnp.zeros((1, d_model), jnp.float32),
        "bk": jnp.zeros((1, d_model), jnp.float32),
        "bv": jnp.zeros((1, d_model), jnp.float32),
        "bo": jnp.zeros((1, d_model), jnp.float32),
        "g1": jnp.ones((1, d_model), jnp.float32),
        "be1": jnp.zeros((1, d_model), jnp.float32),
        "w1": jax.random.normal(ks[4], (d_model, d_ff), jnp.float32) * s,
        "bf1": jnp.full((1, d_ff), 0.01, jnp.float32),
        "w2": jax.random.normal(ks[5], (d_ff, d_model), jnp.float32) * s,
        "bf2": jnp.full((1, d_model), 0.01, jnp.float32),
        "g2": jnp.ones((1, d_model), jnp.float32),
        "be2": jnp.zeros((1, d_model), jnp.float32),
    }


def reference(x, key_mask, params, num_heads):
    # Pure-JAX f32 reference matching the PyTorch forward (eval mode).
    B, S, D = x.shape
    dh = D // num_heads

    def ln(h, g, b):
        mu = jnp.mean(h, axis=-1, keepdims=True)
        var = jnp.mean((h - mu) ** 2, axis=-1, keepdims=True)
        return (h - mu) / jnp.sqrt(var + 1e-5) * g + b

    q = x @ params["wq"] + params["bq"]
    k = x @ params["wk"] + params["bk"]
    v = x @ params["wv"] + params["bv"]
    qh = q.reshape(B, S, num_heads, dh).transpose(0, 2, 1, 3)
    kh = k.reshape(B, S, num_heads, dh).transpose(0, 2, 1, 3)
    vh = v.reshape(B, S, num_heads, dh).transpose(0, 2, 1, 3)
    s = jnp.einsum('bhqd,bhkd->bhqk', qh, kh) / math.sqrt(dh)
    s = jnp.where(key_mask[:, :, None, :] == 0, -1e9, s)
    p = jax.nn.softmax(s, axis=-1)
    ctx = jnp.einsum('bhqk,bhkd->bhqd', p, vh).transpose(0, 2, 1, 3).reshape(B, S, D)
    attn = ctx @ params["wo"] + params["bo"]
    x1 = ln(x + attn, params["g1"], params["be1"])
    ff = jnp.maximum(x1 @ params["w1"] + params["bf1"], 0.0) @ params["w2"] + params["bf2"]
    return ln(x1 + ff, params["g2"], params["be2"])


if __name__ == "__main__":
    B, S, D, H, DFF = 2, 128, 128, 4, 256   # lane-dense (128-multiple) feature dims

    key = jax.random.PRNGKey(0)
    kx, kp = jax.random.split(key)
    x = jax.random.normal(kx, (B, S, D), jnp.float32)

    # key-padding mask (B, 1, S): batch 0 fully visible; batch 1 masks its last 16 keys
    mask = jnp.ones((B, 1, S), jnp.float32)
    mask = mask.at[1, :, -16:].set(0.0)

    params = init_params(kp, D, DFF)

    # q_tile=64 -> nq=2: exercises the K/V-cache-across-query-tiles path.
    out = encoder_layer(x, mask, params, num_heads=H, q_tile=64)
    out = jax.block_until_ready(out)

    assert out.shape == (B, S, D)
    assert bool(jnp.all(jnp.isfinite(out)))

    ref = reference(x, mask, params, H)
    max_err = float(jnp.max(jnp.abs(out - ref)))
    assert max_err < 0.1, f"max abs error vs f32 reference: {max_err}"

    print("KERNEL_OK")
</pallas_src>

<mosaic_0001>
module attributes {stable_mosaic.version = 11 : i64} {
  func.func @encoder_layer_kernel(%arg0: i32, %arg1: i32, %arg2: memref<1x1x128xf32, #tpu.memory_space<vmem>>, %arg3: memref<1x128x128xbf16, #tpu.memory_space<vmem>>, %arg4: memref<1x64x128xf32, #tpu.memory_space<vmem>>, %arg5: memref<128x128xbf16, #tpu.memory_space<vmem>>, %arg6: memref<1x128xf32, #tpu.memory_space<vmem>>, %arg7: memref<128x128xbf16, #tpu.memory_space<vmem>>, %arg8: memref<1x128xf32, #tpu.memory_space<vmem>>, %arg9: memref<128x128xbf16, #tpu.memory_space<vmem>>, %arg10: memref<1x128xf32, #tpu.memory_space<vmem>>, %arg11: memref<128x128xbf16, #tpu.memory_space<vmem>>, %arg12: memref<1x128xf32, #tpu.memory_space<vmem>>, %arg13: memref<1x128xf32, #tpu.memory_space<vmem>>, %arg14: memref<1x128xf32, #tpu.memory_space<vmem>>, %arg15: memref<128x256xbf16, #tpu.memory_space<vmem>>, %arg16: memref<1x256xf32, #tpu.memory_space<vmem>>, %arg17: memref<256x128xbf16, #tpu.memory_space<vmem>>, %arg18: memref<1x128xf32, #tpu.memory_space<vmem>>, %arg19: memref<1x128xf32, #tpu.memory_space<vmem>>, %arg20: memref<1x128xf32, #tpu.memory_space<vmem>>, %arg21: memref<1x64x128xf32, #tpu.memory_space<vmem>>, %arg22: memref<128x128xbf16, #tpu.memory_space<vmem>>, %arg23: memref<128x128xbf16, #tpu.memory_space<vmem>>) attributes {dimension_semantics = [#tpu.dimension_semantics<parallel>, #tpu.dimension_semantics<arbitrary>], iteration_bounds = array<i64: 2, 2>, scalar_prefetch = 0 : i64, scratch_operands = 2 : i64, tpu.core_type = #tpu.core_type<tc>, window_params = [{transform_indices = @transform_0, window_bounds = array<i64: 1, 1, 128>}, {transform_indices = @transform_1, window_bounds = array<i64: 1, 128, 128>}, {transform_indices = @transform_2, window_bounds = array<i64: 1, 64, 128>}, {pipeline_mode = #tpu.pipeline_mode<synchronous>, transform_indices = @transform_3, window_bounds = array<i64: 128, 128>}, {pipeline_mode = #tpu.pipeline_mode<synchronous>, transform_indices = @transform_4, window_bounds = array<i64: 1, 128>}, {pipeline_mode = #tpu.pipeline_mode<synchronous>, transform_indices = @transform_5, window_bounds = array<i64: 128, 128>}, {pipeline_mode = #tpu.pipeline_mode<synchronous>, transform_indices = @transform_6, window_bounds = array<i64: 1, 128>}, {pipeline_mode = #tpu.pipeline_mode<synchronous>, transform_indices = @transform_7, window_bounds = array<i64: 128, 128>}, {pipeline_mode = #tpu.pipeline_mode<synchronous>, transform_indices = @transform_8, window_bounds = array<i64: 1, 128>}, {pipeline_mode = #tpu.pipeline_mode<synchronous>, transform_indices = @transform_9, window_bounds = array<i64: 128, 128>}, {pipeline_mode = #tpu.pipeline_mode<synchronous>, transform_indices = @transform_10, window_bounds = array<i64: 1, 128>}, {pipeline_mode = #tpu.pipeline_mode<synchronous>, transform_indices = @transform_11, window_bounds = array<i64: 1, 128>}, {pipeline_mode = #tpu.pipeline_mode<synchronous>, transform_indices = @transform_12, window_bounds = array<i64: 1, 128>}, {pipeline_mode = #tpu.pipeline_mode<synchronous>, transform_indices = @transform_13, window_bounds = array<i64: 128, 256>}, {pipeline_mode = #tpu.pipeline_mode<synchronous>, transform_indices = @transform_14, window_bounds = array<i64: 1, 256>}, {pipeline_mode = #tpu.pipeline_mode<synchronous>, transform_indices = @transform_15, window_bounds = array<i64: 256, 128>}, {pipeline_mode = #tpu.pipeline_mode<synchronous>, transform_indices = @transform_16, window_bounds = array<i64: 1, 128>}, {pipeline_mode = #tpu.pipeline_mode<synchronous>, transform_indices = @transform_17, window_bounds = array<i64: 1, 128>}, {pipeline_mode = #tpu.pipeline_mode<synchronous>, transform_indices = @transform_18, window_bounds = array<i64: 1, 128>}, {transform_indices = @transform_19, window_bounds = array<i64: 1, 64, 128>}]} {
    %c0_i32 = arith.constant 0 : i32
    %0 = arith.cmpi eq, %arg1, %c0_i32 : i32
    %1 = arith.extui %0 : i1 to i32
    %c0_i32_0 = arith.constant 0 : i32
    %2 = arith.cmpi ne, %1, %c0_i32_0 : i32
    scf.if %2 {
      %c0_69 = arith.constant 0 : index
      %c0_70 = arith.constant 0 : index
      %c0_71 = arith.constant 0 : index
      %170 = vector.load %arg3[%c0_69, %c0_70, %c0_71] : memref<1x128x128xbf16, #tpu.memory_space<vmem>>, vector<1x128x128xbf16>
      %171 = vector.shape_cast %170 : vector<1x128x128xbf16> to vector<128x128xbf16>
      %c0_72 = arith.constant 0 : index
      %c0_73 = arith.constant 0 : index
      %172 = vector.load %arg7[%c0_72, %c0_73] : memref<128x128xbf16, #tpu.memory_space<vmem>>, vector<128x128xbf16>
      %cst_74 = arith.constant dense<0.000000e+00> : vector<128x128xf32>
      %173 = tpu.matmul %171, %172, %cst_74 {dimension_numbers = #tpu.dot_dimension_numbers<[1], [0], [0], [1], [0, 0, 1, 1], [], []>} : vector<128x128xbf16>, vector<128x128xbf16>, vector<128x128xf32> -> vector<128x128xf32>
      %c0_75 = arith.constant 0 : index
      %c0_76 = arith.constant 0 : index
      %174 = vector.load %arg8[%c0_75, %c0_76] : memref<1x128xf32, #tpu.memory_space<vmem>>, vector<1x128xf32>
      %175 = vector.broadcast %174 : vector<1x128xf32> to vector<128x128xf32>
      %176 = arith.addf %173, %175 : vector<128x128xf32>
      %c0_77 = arith.constant 0 : index
      %c0_78 = arith.constant 0 : index
      %177 = vector.load %arg9[%c0_77, %c0_78] : memref<128x128xbf16, #tpu.memory_space<vmem>>, vector<128x128xbf16>
      %cst_79 = arith.constant dense<0.000000e+00> : vector<128x128xf32>
      %178 = tpu.matmul %171, %177, %cst_79 {dimension_numbers = #tpu.dot_dimension_numbers<[1], [0], [0], [1], [0, 0, 1, 1], [], []>} : vector<128x128xbf16>, vector<128x128xbf16>, vector<128x128xf32> -> vector<128x128xf32>
      %c0_80 = arith.constant 0 : index
      %c0_81 = arith.constant 0 : index
      %179 = vector.load %arg10[%c0_80, %c0_81] : memref<1x128xf32, #tpu.memory_space<vmem>>, vector<1x128xf32>
      %180 = vector.broadcast %179 : vector<1x128xf32> to vector<128x128xf32>
      %181 = arith.addf %178, %180 : vector<128x128xf32>
      %182 = arith.truncf %176 : vector<128x128xf32> to vector<128x128xbf16>
      %c0_82 = arith.constant 0 : index
      %c0_83 = arith.constant 0 : index
      %183 = vector.load %arg22[%c0_82, %c0_83] : memref<128x128xbf16, #tpu.memory_space<vmem>>, vector<128x128xbf16>
      tpu.vector_store %arg22[%c0_82, %c0_83], %182 {strides = array<i32>} : memref<128x128xbf16, #tpu.memory_space<vmem>>, vector<128x128xbf16>,
      %184 = arith.truncf %181 : vector<128x128xf32> to vector<128x128xbf16>
      %c0_84 = arith.constant 0 : index
      %c0_85 = arith.constant 0 : index
      %185 = vector.load %arg23[%c0_84, %c0_85] : memref<128x128xbf16, #tpu.memory_space<vmem>>, vector<128x128xbf16>
      tpu.vector_store %arg23[%c0_84, %c0_85], %184 {strides = array<i32>} : memref<128x128xbf16, #tpu.memory_space<vmem>>, vector<128x128xbf16>,
    } else {
    }
    %c64_i32 = arith.constant 64 : i32
    %3 = arith.muli %arg1, %c64_i32 : i32
    %4 = tpu.assume_multiple %3, 64 : i32
    %c0 = arith.constant 0 : index
    %5 = arith.index_cast %4 : i32 to index
    %c0_1 = arith.constant 0 : index
    %6 = vector.load %arg3[%c0, %5, %c0_1] : memref<1x128x128xbf16, #tpu.memory_space<vmem>>, vector<1x64x128xbf16>
    %7 = vector.shape_cast %6 : vector<1x64x128xbf16> to vector<64x128xbf16>
    %c0_2 = arith.constant 0 : index
    %c0_3 = arith.constant 0 : index
    %c0_4 = arith.constant 0 : index
    %8 = vector.load %arg4[%c0_2, %c0_3, %c0_4] : memref<1x64x128xf32, #tpu.memory_space<vmem>>, vector<1x64x128xf32>
    %9 = vector.shape_cast %8 : vector<1x64x128xf32> to vector<64x128xf32>
    %c0_5 = arith.constant 0 : index
    %c0_6 = arith.constant 0 : index
    %10 = vector.load %arg5[%c0_5, %c0_6] : memref<128x128xbf16, #tpu.memory_space<vmem>>, vector<128x128xbf16>
    %cst = arith.constant dense<0.000000e+00> : vector<64x128xf32>
    %11 = tpu.matmul %7, %10, %cst {dimension_numbers = #tpu.dot_dimension_numbers<[1], [0], [0], [1], [0, 0, 1, 1], [], []>} : vector<64x128xbf16>, vector<128x128xbf16>, vector<64x128xf32> -> vector<64x128xf32>
    %c0_7 = arith.constant 0 : index
    %c0_8 = arith.constant 0 : index
    %12 = vector.load %arg6[%c0_7, %c0_8] : memref<1x128xf32, #tpu.memory_space<vmem>>, vector<1x128xf32>
    %13 = vector.broadcast %12 : vector<1x128xf32> to vector<64x128xf32>
    %14 = arith.addf %11, %13 : vector<64x128xf32>
    %15 = arith.truncf %14 : vector<64x128xf32> to vector<64x128xbf16>
    %c0_9 = arith.constant 0 : index
    %c0_10 = arith.constant 0 : index
    %16 = vector.load %arg22[%c0_9, %c0_10] : memref<128x128xbf16, #tpu.memory_space<vmem>>, vector<128x128xbf16>
    %c0_11 = arith.constant 0 : index
    %c0_12 = arith.constant 0 : index
    %17 = vector.load %arg23[%c0_11, %c0_12] : memref<128x128xbf16, #tpu.memory_space<vmem>>, vector<128x128xbf16>
    %c0_13 = arith.constant 0 : index
    %c0_14 = arith.constant 0 : index
    %c0_15 = arith.constant 0 : index
    %18 = vector.load %arg2[%c0_13, %c0_14, %c0_15] : memref<1x1x128xf32, #tpu.memory_space<vmem>>, vector<1x1x128xf32>
    %19 = vector.shape_cast %18 : vector<1x1x128xf32> to vector<1x128xf32>
    %20 = vector.extract_strided_slice %15 {offsets = [0, 0], sizes = [64, 32], strides = [1, 1]} : vector<64x128xbf16> to vector<64x32xbf16>
    %21 = vector.extract_strided_slice %16 {offsets = [0, 0], sizes = [128, 32], strides = [1, 1]} : vector<128x128xbf16> to vector<128x32xbf16>
    %22 = vector.extract_strided_slice %17 {offsets = [0, 0], sizes = [128, 32], strides = [1, 1]} : vector<128x128xbf16> to vector<128x32xbf16>
    "tpu.trace_start"() <{level = 10 : i32, message = "qd,kd->qk"}> : () -> ()
    %cst_16 = arith.constant dense<0.000000e+00> : vector<64x128xf32>
    %23 = tpu.matmul %20, %21, %cst_16 {dimension_numbers = #tpu.dot_dimension_numbers<[1], [1], [0], [0], [0, 0, 1, 0], [], []>} : vector<64x32xbf16>, vector<128x32xbf16>, vector<64x128xf32> -> vector<64x128xf32>
    "tpu.trace_stop"() : () -> ()
    %24 = vector.broadcast %19 : vector<1x128xf32> to vector<64x128xf32>
    %25 = arith.addf %23, %24 : vector<64x128xf32>
    %cst_17 = arith.constant dense<0xFF800000> : vector<64xf32>
    %26 = vector.multi_reduction <maximumf>, %25, %cst_17 [1] : vector<64x128xf32> to vector<64xf32>
    %27 = vector.shape_cast %26 : vector<64xf32> to vector<64x1xf32>
    %28 = vector.broadcast %27 : vector<64x1xf32> to vector<64x128xf32>
    %29 = arith.subf %25, %28 : vector<64x128xf32>
    %30 = math.exp %29 : vector<64x128xf32>
    %cst_18 = arith.constant dense<0.000000e+00> : vector<64xf32>
    %31 = vector.multi_reduction <add>, %30, %cst_18 [1] : vector<64x128xf32> to vector<64xf32>
    %32 = vector.shape_cast %31 : vector<64xf32> to vector<64x1xf32>
    %33 = tpu.reciprocal %32 {approx = true} : vector<64x1xf32> -> vector<64x1xf32>
    %34 = vector.broadcast %33 : vector<64x1xf32> to vector<64x128xf32>
    %35 = arith.mulf %30, %34 : vector<64x128xf32>
    %36 = arith.truncf %35 : vector<64x128xf32> to vector<64x128xbf16>
    %cst_19 = arith.constant dense<0.000000e+00> : vector<64x32xf32>
    %37 = tpu.matmul %36, %22, %cst_19 {dimension_numbers = #tpu.dot_dimension_numbers<[1], [0], [0], [1], [0, 0, 1, 1], [], []>} : vector<64x128xbf16>, vector<128x32xbf16>, vector<64x32xf32> -> vector<64x32xf32>
    %38 = vector.extract_strided_slice %15 {offsets = [0, 32], sizes = [64, 32], strides = [1, 1]} : vector<64x128xbf16> to vector<64x32xbf16>
    %39 = vector.extract_strided_slice %16 {offsets = [0, 32], sizes = [128, 32], strides = [1, 1]} : vector<128x128xbf16> to vector<128x32xbf16>
    %40 = vector.extract_strided_slice %17 {offsets = [0, 32], sizes = [128, 32], strides = [1, 1]} : vector<128x128xbf16> to vector<128x32xbf16>
    "tpu.trace_start"() <{level = 10 : i32, message = "qd,kd->qk"}> : () -> ()
    %cst_20 = arith.constant dense<0.000000e+00> : vector<64x128xf32>
    %41 = tpu.matmul %38, %39, %cst_20 {dimension_numbers = #tpu.dot_dimension_numbers<[1], [1], [0], [0], [0, 0, 1, 0], [], []>} : vector<64x32xbf16>, vector<128x32xbf16>, vector<64x128xf32> -> vector<64x128xf32>
    "tpu.trace_stop"() : () -> ()
    %42 = vector.broadcast %19 : vector<1x128xf32> to vector<64x128xf32>
    %43 = arith.addf %41, %42 : vector<64x128xf32>
    %cst_21 = arith.constant dense<0xFF800000> : vector<64xf32>
    %44 = vector.multi_reduction <maximumf>, %43, %cst_21 [1] : vector<64x128xf32> to vector<64xf32>
    %45 = vector.shape_cast %44 : vector<64xf32> to vector<64x1xf32>
    %46 = vector.broadcast %45 : vector<64x1xf32> to vector<64x128xf32>
    %47 = arith.subf %43, %46 : vector<64x128xf32>
    %48 = math.exp %47 : vector<64x128xf32>
    %cst_22 = arith.constant dense<0.000000e+00> : vector<64xf32>
    %49 = vector.multi_reduction <add>, %48, %cst_22 [1] : vector<64x128xf32> to vector<64xf32>
    %50 = vector.shape_cast %49 : vector<64xf32> to vector<64x1xf32>
    %51 = tpu.reciprocal %50 {approx = true} : vector<64x1xf32> -> vector<64x1xf32>
    %52 = vector.broadcast %51 : vector<64x1xf32> to vector<64x128xf32>
    %53 = arith.mulf %48, %52 : vector<64x128xf32>
    %54 = arith.truncf %53 : vector<64x128xf32> to vector<64x128xbf16>
    %cst_23 = arith.constant dense<0.000000e+00> : vector<64x32xf32>
    %55 = tpu.matmul %54, %40, %cst_23 {dimension_numbers = #tpu.dot_dimension_numbers<[1], [0], [0], [1], [0, 0, 1, 1], [], []>} : vector<64x128xbf16>, vector<128x32xbf16>, vector<64x32xf32> -> vector<64x32xf32>
    %56 = vector.extract_strided_slice %15 {offsets = [0, 64], sizes = [64, 32], strides = [1, 1]} : vector<64x128xbf16> to vector<64x32xbf16>
    %57 = vector.extract_strided_slice %16 {offsets = [0, 64], sizes = [128, 32], strides = [1, 1]} : vector<128x128xbf16> to vector<128x32xbf16>
    %58 = vector.extract_strided_slice %17 {offsets = [0, 64], sizes = [128, 32], strides = [1, 1]} : vector<128x128xbf16> to vector<128x32xbf16>
    "tpu.trace_start"() <{level = 10 : i32, message = "qd,kd->qk"}> : () -> ()
    %cst_24 = arith.constant dense<0.000000e+00> : vector<64x128xf32>
    %59 = tpu.matmul %56, %57, %cst_24 {dimension_numbers = #tpu.dot_dimension_numbers<[1], [1], [0], [0], [0, 0, 1, 0], [], []>} : vector<64x32xbf16>, vector<128x32xbf16>, vector<64x128xf32> -> vector<64x128xf32>
    "tpu.trace_stop"() : () -> ()
    %60 = vector.broadcast %19 : vector<1x128xf32> to vector<64x128xf32>
    %61 = arith.addf %59, %60 : vector<64x128xf32>
    %cst_25 = arith.constant dense<0xFF800000> : vector<64xf32>
    %62 = vector.multi_reduction <maximumf>, %61, %cst_25 [1] : vector<64x128xf32> to vector<64xf32>
    %63 = vector.shape_cast %62 : vector<64xf32> to vector<64x1xf32>
    %64 = vector.broadcast %63 : vector<64x1xf32> to vector<64x128xf32>
    %65 = arith.subf %61, %64 : vector<64x128xf32>
    %66 = math.exp %65 : vector<64x128xf32>
    %cst_26 = arith.constant dense<0.000000e+00> : vector<64xf32>
    %67 = vector.multi_reduction <add>, %66, %cst_26 [1] : vector<64x128xf32> to vector<64xf32>
    %68 = vector.shape_cast %67 : vector<64xf32> to vector<64x1xf32>
    %69 = tpu.reciprocal %68 {approx = true} : vector<64x1xf32> -> vector<64x1xf32>
    %70 = vector.broadcast %69 : vector<64x1xf32> to vector<64x128xf32>
    %71 = arith.mulf %66, %70 : vector<64x128xf32>
    %72 = arith.truncf %71 : vector<64x128xf32> to vector<64x128xbf16>
    %cst_27 = arith.constant dense<0.000000e+00> : vector<64x32xf32>
    %73 = tpu.matmul %72, %58, %cst_27 {dimension_numbers = #tpu.dot_dimension_numbers<[1], [0], [0], [1], [0, 0, 1, 1], [], []>} : vector<64x128xbf16>, vector<128x32xbf16>, vector<64x32xf32> -> vector<64x32xf32>
    %74 = vector.extract_strided_slice %15 {offsets = [0, 96], sizes = [64, 32], strides = [1, 1]} : vector<64x128xbf16> to vector<64x32xbf16>
    %75 = vector.extract_strided_slice %16 {offsets = [0, 96], sizes = [128, 32], strides = [1, 1]} : vector<128x128xbf16> to vector<128x32xbf16>
    %76 = vector.extract_strided_slice %17 {offsets = [0, 96], sizes = [128, 32], strides = [1, 1]} : vector<128x128xbf16> to vector<128x32xbf16>
    "tpu.trace_start"() <{level = 10 : i32, message = "qd,kd->qk"}> : () -> ()
    %cst_28 = arith.constant dense<0.000000e+00> : vector<64x128xf32>
    %77 = tpu.matmul %74, %75, %cst_28 {dimension_numbers = #tpu.dot_dimension_numbers<[1], [1], [0], [0], [0, 0, 1, 0], [], []>} : vector<64x32xbf16>, vector<128x32xbf16>, vector<64x128xf32> -> vector<64x128xf32>
    "tpu.trace_stop"() : () -> ()
    %78 = vector.broadcast %19 : vector<1x128xf32> to vector<64x128xf32>
    %79 = arith.addf %77, %78 : vector<64x128xf32>
    %cst_29 = arith.constant dense<0xFF800000> : vector<64xf32>
    %80 = vector.multi_reduction <maximumf>, %79, %cst_29 [1] : vector<64x128xf32> to vector<64xf32>
    %81 = vector.shape_cast %80 : vector<64xf32> to vector<64x1xf32>
    %82 = vector.broadcast %81 : vector<64x1xf32> to vector<64x128xf32>
    %83 = arith.subf %79, %82 : vector<64x128xf32>
    %84 = math.exp %83 : vector<64x128xf32>
    %cst_30 = arith.constant dense<0.000000e+00> : vector<64xf32>
    %85 = vector.multi_reduction <add>, %84, %cst_30 [1] : vector<64x128xf32> to vector<64xf32>
    %86 = vector.shape_cast %85 : vector<64xf32> to vector<64x1xf32>
    %87 = tpu.reciprocal %86 {approx = true} : vector<64x1xf32> -> vector<64x1xf32>
    %88 = vector.broadcast %87 : vector<64x1xf32> to vector<64x128xf32>
    %89 = arith.mulf %84, %88 : vector<64x128xf32>
    %90 = arith.truncf %89 : vector<64x128xf32> to vector<64x128xbf16>
    %cst_31 = arith.constant dense<0.000000e+00> : vector<64x32xf32>
    %91 = tpu.matmul %90, %76, %cst_31 {dimension_numbers = #tpu.dot_dimension_numbers<[1], [0], [0], [1], [0, 0, 1, 1], [], []>} : vector<64x128xbf16>, vector<128x32xbf16>, vector<64x32xf32> -> vector<64x32xf32>
    %92 = tpu.concatenate %37, %55, %73, %91 in 1 : vector<64x32xf32>, vector<64x32xf32>, vector<64x32xf32>, vector<64x32xf32> -> vector<64x128xf32>
    %93 = arith.truncf %92 : vector<64x128xf32> to vector<64x128xbf16>
    %c0_32 = arith.constant 0 : index
    %c0_33 = arith.constant 0 : index
    %94 = vector.load %arg11[%c0_32, %c0_33] : memref<128x128xbf16, #tpu.memory_space<vmem>>, vector<128x128xbf16>
    %cst_34 = arith.constant dense<0.000000e+00> : vector<64x128xf32>
    %95 = tpu.matmul %93, %94, %cst_34 {dimension_numbers = #tpu.dot_dimension_numbers<[1], [0], [0], [1], [0, 0, 1, 1], [], []>} : vector<64x128xbf16>, vector<128x128xbf16>, vector<64x128xf32> -> vector<64x128xf32>
    %c0_35 = arith.constant 0 : index
    %c0_36 = arith.constant 0 : index
    %96 = vector.load %arg12[%c0_35, %c0_36] : memref<1x128xf32, #tpu.memory_space<vmem>>, vector<1x128xf32>
    %97 = vector.broadcast %96 : vector<1x128xf32> to vector<64x128xf32>
    %98 = arith.addf %95, %97 : vector<64x128xf32>
    %99 = arith.addf %9, %98 : vector<64x128xf32>
    %c0_37 = arith.constant 0 : index
    %c0_38 = arith.constant 0 : index
    %100 = vector.load %arg13[%c0_37, %c0_38] : memref<1x128xf32, #tpu.memory_space<vmem>>, vector<1x128xf32>
    %c0_39 = arith.constant 0 : index
    %c0_40 = arith.constant 0 : index
    %101 = vector.load %arg14[%c0_39, %c0_40] : memref<1x128xf32, #tpu.memory_space<vmem>>, vector<1x128xf32>
    %cst_41 = arith.constant dense<0.000000e+00> : vector<64xf32>
    %102 = vector.multi_reduction <add>, %99, %cst_41 [1] : vector<64x128xf32> to vector<64xf32>
    %103 = vector.shape_cast %102 : vector<64xf32> to vector<64x1xf32>
    %cst_42 = arith.constant 1.280000e+02 : f32
    %104 = vector.broadcast %cst_42 : f32 to vector<64x1xf32>
    %105 = arith.divf %103, %104 : vector<64x1xf32>
    %106 = vector.broadcast %105 : vector<64x1xf32> to vector<64x128xf32>
    %107 = arith.subf %99, %106 : vector<64x128xf32>
    %108 = vector.broadcast %105 : vector<64x1xf32> to vector<64x128xf32>
    %109 = arith.subf %99, %108 : vector<64x128xf32>
    %110 = arith.mulf %107, %109 : vector<64x128xf32>
    %cst_43 = arith.constant dense<0.000000e+00> : vector<64xf32>
    %111 = vector.multi_reduction <add>, %110, %cst_43 [1] : vector<64x128xf32> to vector<64xf32>
    %112 = vector.shape_cast %111 : vector<64xf32> to vector<64x1xf32>
    %cst_44 = arith.constant 1.280000e+02 : f32
    %113 = vector.broadcast %cst_44 : f32 to vector<64x1xf32>
    %114 = arith.divf %112, %113 : vector<64x1xf32>
    %115 = vector.broadcast %105 : vector<64x1xf32> to vector<64x128xf32>
    %116 = arith.subf %99, %115 : vector<64x128xf32>
    %cst_45 = arith.constant 9.99999974E-6 : f32
    %117 = vector.broadcast %cst_45 : f32 to vector<64x1xf32>
    %118 = arith.addf %114, %117 : vector<64x1xf32>
    %119 = math.rsqrt %118 : vector<64x1xf32>
    %120 = vector.broadcast %119 : vector<64x1xf32> to vector<64x128xf32>
    %121 = arith.mulf %116, %120 : vector<64x128xf32>
    %122 = vector.broadcast %100 : vector<1x128xf32> to vector<64x128xf32>
    %123 = arith.mulf %121, %122 : vector<64x128xf32>
    %124 = vector.broadcast %101 : vector<1x128xf32> to vector<64x128xf32>
    %125 = arith.addf %123, %124 : vector<64x128xf32>
    %126 = arith.truncf %125 : vector<64x128xf32> to vector<64x128xbf16>
    %c0_46 = arith.constant 0 : index
    %c0_47 = arith.constant 0 : index
    %127 = vector.load %arg15[%c0_46, %c0_47] : memref<128x256xbf16, #tpu.memory_space<vmem>>, vector<128x256xbf16>
    %cst_48 = arith.constant dense<0.000000e+00> : vector<64x256xf32>
    %128 = tpu.matmul %126, %127, %cst_48 {dimension_numbers = #tpu.dot_dimension_numbers<[1], [0], [0], [1], [0, 0, 1, 1], [], []>} : vector<64x128xbf16>, vector<128x256xbf16>, vector<64x256xf32> -> vector<64x256xf32>
    %c0_49 = arith.constant 0 : index
    %c0_50 = arith.constant 0 : index
    %129 = vector.load %arg16[%c0_49, %c0_50] : memref<1x256xf32, #tpu.memory_space<vmem>>, vector<1x256xf32>
    %130 = vector.broadcast %129 : vector<1x256xf32> to vector<64x256xf32>
    %131 = arith.addf %128, %130 : vector<64x256xf32>
    %cst_51 = arith.constant 0.000000e+00 : f32
    %132 = vector.broadcast %cst_51 : f32 to vector<64x256xf32>
    %133 = arith.maximumf %131, %132 : vector<64x256xf32>
    %134 = arith.truncf %133 : vector<64x256xf32> to vector<64x256xbf16>
    %c0_52 = arith.constant 0 : index
    %c0_53 = arith.constant 0 : index
    %135 = vector.load %arg17[%c0_52, %c0_53] : memref<256x128xbf16, #tpu.memory_space<vmem>>, vector<256x128xbf16>
    %cst_54 = arith.constant dense<0.000000e+00> : vector<64x128xf32>
    %136 = tpu.matmul %134, %135, %cst_54 {dimension_numbers = #tpu.dot_dimension_numbers<[1], [0], [0], [1], [0, 0, 1, 1], [], []>} : vector<64x256xbf16>, vector<256x128xbf16>, vector<64x128xf32> -> vector<64x128xf32>
    %c0_55 = arith.constant 0 : index
    %c0_56 = arith.constant 0 : index
    %137 = vector.load %arg18[%c0_55, %c0_56] : memref<1x128xf32, #tpu.memory_space<vmem>>, vector<1x128xf32>
    %138 = vector.broadcast %137 : vector<1x128xf32> to vector<64x128xf32>
    %139 = arith.addf %136, %138 : vector<64x128xf32>
    %140 = arith.addf %125, %139 : vector<64x128xf32>
    %c0_57 = arith.constant 0 : index
    %c0_58 = arith.constant 0 : index
    %141 = vector.load %arg19[%c0_57, %c0_58] : memref<1x128xf32, #tpu.memory_space<vmem>>, vector<1x128xf32>
    %c0_59 = arith.constant 0 : index
    %c0_60 = arith.constant 0 : index
    %142 = vector.load %arg20[%c0_59, %c0_60] : memref<1x128xf32, #tpu.memory_space<vmem>>, vector<1x128xf32>
    %cst_61 = arith.constant dense<0.000000e+00> : vector<64xf32>
    %143 = vector.multi_reduction <add>, %140, %cst_61 [1] : vector<64x128xf32> to vector<64xf32>
    %144 = vector.shape_cast %143 : vector<64xf32> to vector<64x1xf32>
    %cst_62 = arith.constant 1.280000e+02 : f32
    %145 = vector.broadcast %cst_62 : f32 to vector<64x1xf32>
    %146 = arith.divf %144, %145 : vector<64x1xf32>
    %147 = vector.broadcast %146 : vector<64x1xf32> to vector<64x128xf32>
    %148 = arith.subf %140, %147 : vector<64x128xf32>
    %149 = vector.broadcast %146 : vector<64x1xf32> to vector<64x128xf32>
    %150 = arith.subf %140, %149 : vector<64x128xf32>
    %151 = arith.mulf %148, %150 : vector<64x128xf32>
    %cst_63 = arith.constant dense<0.000000e+00> : vector<64xf32>
    %152 = vector.multi_reduction <add>, %151, %cst_63 [1] : vector<64x128xf32> to vector<64xf32>
    %153 = vector.shape_cast %152 : vector<64xf32> to vector<64x1xf32>
    %cst_64 = arith.constant 1.280000e+02 : f32
    %154 = vector.broadcast %cst_64 : f32 to vector<64x1xf32>
    %155 = arith.divf %153, %154 : vector<64x1xf32>
    %156 = vector.broadcast %146 : vector<64x1xf32> to vector<64x128xf32>
    %157 = arith.subf %140, %156 : vector<64x128xf32>
    %cst_65 = arith.constant 9.99999974E-6 : f32
    %158 = vector.broadcast %cst_65 : f32 to vector<64x1xf32>
    %159 = arith.addf %155, %158 : vector<64x1xf32>
    %160 = math.rsqrt %159 : vector<64x1xf32>
    %161 = vector.broadcast %160 : vector<64x1xf32> to vector<64x128xf32>
    %162 = arith.mulf %157, %161 : vector<64x128xf32>
    %163 = vector.broadcast %141 : vector<1x128xf32> to vector<64x128xf32>
    %164 = arith.mulf %162, %163 : vector<64x128xf32>
    %165 = vector.broadcast %142 : vector<1x128xf32> to vector<64x128xf32>
    %166 = arith.addf %164, %165 : vector<64x128xf32>
    %c0_66 = arith.constant 0 : index
    %c0_67 = arith.constant 0 : index
    %c0_68 = arith.constant 0 : index
    %167 = vector.load %arg21[%c0_66, %c0_67, %c0_68] : memref<1x64x128xf32, #tpu.memory_space<vmem>>, vector<1x64x128xf32>
    %168 = vector.shape_cast %167 : vector<1x64x128xf32> to vector<64x128xf32>
    %169 = vector.shape_cast %166 : vector<64x128xf32> to vector<1x64x128xf32>
    tpu.vector_store %arg21[%c0_66, %c0_67, %c0_68], %169 {strides = array<i32>} : memref<1x64x128xf32, #tpu.memory_space<vmem>>, vector<1x64x128xf32>,
    return
  }
  func.func @transform_0(%arg0: i32, %arg1: i32) -> (i32, i32, i32) {
    %c0_i32 = arith.constant 0 : i32
    %c0_i32_0 = arith.constant 0 : i32
    %c0_i32_1 = arith.constant 0 : i32
    return %arg0, %c0_i32, %c0_i32_0 : i32, i32, i32
  }
  func.func @transform_1(%arg0: i32, %arg1: i32) -> (i32, i32, i32) {
    %c0_i32 = arith.constant 0 : i32
    %c0_i32_0 = arith.constant 0 : i32
    %c0_i32_1 = arith.constant 0 : i32
    return %arg0, %c0_i32, %c0_i32_0 : i32, i32, i32
  }
  func.func @transform_2(%arg0: i32, %arg1: i32) -> (i32, i32, i32) {
    %c0_i32 = arith.constant 0 : i32
    %c0_i32_0 = arith.constant 0 : i32
    return %arg0, %arg1, %c0_i32 : i32, i32, i32
  }
  func.func @transform_3(%arg0: i32, %arg1: i32) -> (i32, i32) {
    %c0_i32 = arith.constant 0 : i32
    %c0_i32_0 = arith.constant 0 : i32
    %c0_i32_1 = arith.constant 0 : i32
    return %c0_i32, %c0_i32_0 : i32, i32
  }
  func.func @transform_4(%arg0: i32, %arg1: i32) -> (i32, i32) {
    %c0_i32 = arith.constant 0 : i32
    %c0_i32_0 = arith.constant 0 : i32
    %c0_i32_1 = arith.constant 0 : i32
    return %c0_i32, %c0_i32_0 : i32, i32
  }
  func.func @transform_5(%arg0: i32, %arg1: i32) -> (i32, i32) {
    %c0_i32 = arith.constant 0 : i32
    %c0_i32_0 = arith.constant 0 : i32
    %c0_i32_1 = arith.constant 0 : i32
    return %c0_i32, %c0_i32_0 : i32, i32
  }
  func.func @transform_6(%arg0: i32, %arg1: i32) -> (i32, i32) {
    %c0_i32 = arith.constant 0 : i32
    %c0_i32_0 = arith.constant 0 : i32
    %c0_i32_1 = arith.constant 0 : i32
    return %c0_i32, %c0_i32_0 : i32, i32
  }
  func.func @transform_7(%arg0: i32, %arg1: i32) -> (i32, i32) {
    %c0_i32 = arith.constant 0 : i32
    %c0_i32_0 = arith.constant 0 : i32
    %c0_i32_1 = arith.constant 0 : i32
    return %c0_i32, %c0_i32_0 : i32, i32
  }
  func.func @transform_8(%arg0: i32, %arg1: i32) -> (i32, i32) {
    %c0_i32 = arith.constant 0 : i32
    %c0_i32_0 = arith.constant 0 : i32
    %c0_i32_1 = arith.constant 0 : i32
    return %c0_i32, %c0_i32_0 : i32, i32
  }
  func.func @transform_9(%arg0: i32, %arg1: i32) -> (i32, i32) {
    %c0_i32 = arith.constant 0 : i32
    %c0_i32_0 = arith.constant 0 : i32
    %c0_i32_1 = arith.constant 0 : i32
    return %c0_i32, %c0_i32_0 : i32, i32
  }
  func.func @transform_10(%arg0: i32, %arg1: i32) -> (i32, i32) {
    %c0_i32 = arith.constant 0 : i32
    %c0_i32_0 = arith.constant 0 : i32
    %c0_i32_1 = arith.constant 0 : i32
    return %c0_i32, %c0_i32_0 : i32, i32
  }
  func.func @transform_11(%arg0: i32, %arg1: i32) -> (i32, i32) {
    %c0_i32 = arith.constant 0 : i32
    %c0_i32_0 = arith.constant 0 : i32
    %c0_i32_1 = arith.constant 0 : i32
    return %c0_i32, %c0_i32_0 : i32, i32
  }
  func.func @transform_12(%arg0: i32, %arg1: i32) -> (i32, i32) {
    %c0_i32 = arith.constant 0 : i32
    %c0_i32_0 = arith.constant 0 : i32
    %c0_i32_1 = arith.constant 0 : i32
    return %c0_i32, %c0_i32_0 : i32, i32
  }
  func.func @transform_13(%arg0: i32, %arg1: i32) -> (i32, i32) {
    %c0_i32 = arith.constant 0 : i32
    %c0_i32_0 = arith.constant 0 : i32
    %c0_i32_1 = arith.constant 0 : i32
    return %c0_i32, %c0_i32_0 : i32, i32
  }
  func.func @transform_14(%arg0: i32, %arg1: i32) -> (i32, i32) {
    %c0_i32 = arith.constant 0 : i32
    %c0_i32_0 = arith.constant 0 : i32
    %c0_i32_1 = arith.constant 0 : i32
    return %c0_i32, %c0_i32_0 : i32, i32
  }
  func.func @transform_15(%arg0: i32, %arg1: i32) -> (i32, i32) {
    %c0_i32 = arith.constant 0 : i32
    %c0_i32_0 = arith.constant 0 : i32
    %c0_i32_1 = arith.constant 0 : i32
    return %c0_i32, %c0_i32_0 : i32, i32
  }
  func.func @transform_16(%arg0: i32, %arg1: i32) -> (i32, i32) {
    %c0_i32 = arith.constant 0 : i32
    %c0_i32_0 = arith.constant 0 : i32
    %c0_i32_1 = arith.constant 0 : i32
    return %c0_i32, %c0_i32_0 : i32, i32
  }
  func.func @transform_17(%arg0: i32, %arg1: i32) -> (i32, i32) {
    %c0_i32 = arith.constant 0 : i32
    %c0_i32_0 = arith.constant 0 : i32
    %c0_i32_1 = arith.constant 0 : i32
    return %c0_i32, %c0_i32_0 : i32, i32
  }
  func.func @transform_18(%arg0: i32, %arg1: i32) -> (i32, i32) {
    %c0_i32 = arith.constant 0 : i32
    %c0_i32_0 = arith.constant 0 : i32
    %c0_i32_1 = arith.constant 0 : i32
    return %c0_i32, %c0_i32_0 : i32, i32
  }
  func.func @transform_19(%arg0: i32, %arg1: i32) -> (i32, i32, i32) {
    %c0_i32 = arith.constant 0 : i32
    %c0_i32_0 = arith.constant 0 : i32
    return %arg0, %arg1, %c0_i32 : i32, i32, i32
  }
}

</mosaic_0001>

<llo_original>
// kernel: tpu_custom_call.1
$region0: #{tpu_custom_call.1}
  #allocation0 [shape = 'u32[]', space=smem, size = 0x4, offset = 0x4, fixed_abs, tag = 'smem constant byte address 0x4 - core index']
  #allocation1 [shape = 'u32[144,128]{1,0:T(1,128)}', space=vmem, size = 0x12000, scoped, tag = 'internal scratch']
  #allocation2 [shape = 'bf16[128,128]{1,0:T(16,128)(2,1)}', space=vmem, size = 0x8000, scoped, tag = 'scratch operand']
  #allocation3 [shape = 'bf16[128,128]{1,0:T(16,128)(2,1)}', space=vmem, size = 0x8000, scoped, tag = 'scratch operand']
  %s0 = inlined_call_operand.hbm [shape: f32[2,1,128], index: 0, kind: input, shape index: {}]
  %s1 = inlined_call_operand.hbm [shape: bf16[2,128,128], index: 1, kind: input, shape index: {}]
  %s2 = inlined_call_operand.hbm [shape: f32[2,128,128], index: 2, kind: input, shape index: {}]
  %s3 = inlined_call_operand.hbm [shape: bf16[128,128], index: 3, kind: input, shape index: {}]
  %s4 = inlined_call_operand.vmem [shape: f32[1,128], index: 4, kind: input, shape index: {}]
  %s5 = inlined_call_operand.hbm [shape: bf16[128,128], index: 5, kind: input, shape index: {}]
  %s6 = inlined_call_operand.vmem [shape: f32[1,128], index: 6, kind: input, shape index: {}]
  %s7 = inlined_call_operand.hbm [shape: bf16[128,128], index: 7, kind: input, shape index: {}]
  %s8 = inlined_call_operand.vmem [shape: f32[1,128], index: 8, kind: input, shape index: {}]
  %s9 = inlined_call_operand.hbm [shape: bf16[128,128], index: 9, kind: input, shape index: {}]
  %s10 = inlined_call_operand.vmem [shape: f32[1,128], index: 10, kind: input, shape index: {}]
  %s11 = inlined_call_operand.vmem [shape: f32[1,128], index: 11, kind: input, shape index: {}]
  %s12 = inlined_call_operand.vmem [shape: f32[1,128], index: 12, kind: input, shape index: {}]
  %s13 = inlined_call_operand.hbm [shape: bf16[128,256], index: 13, kind: input, shape index: {}]
  %s14 = inlined_call_operand.vmem [shape: f32[1,256], index: 14, kind: input, shape index: {}]
  %s15 = inlined_call_operand.hbm [shape: bf16[256,128], index: 15, kind: input, shape index: {}]
  %s16 = inlined_call_operand.vmem [shape: f32[1,128], index: 16, kind: input, shape index: {}]
  %s17 = inlined_call_operand.vmem [shape: f32[1,128], index: 17, kind: input, shape index: {}]
  %s18 = inlined_call_operand.vmem [shape: f32[1,128], index: 18, kind: input, shape index: {}]
  %s19 = inlined_call_operand.hbm [shape: f32[2,128,128], index: 19, kind: output, shape index: {}]
  %s20 = sld [smem:[#allocation0]]
  $region149: #{tpu_custom_call.1} parent=0
    _
  %s22 = ssub.s32 1, %s20
  %s23 = scalar_select 0, %s22, %s20
  $region1: #{tpu_custom_call.1} parent=0
    #allocation4 [shape = 'u8[1024]{0}', space=vmem, size = 0x400, scoped, tag = 'input window, operand 0']
    #allocation5 [shape = 's32[2]{0}', space=sflag, size = 0x8, scoped, tag = 'scoped memory for tpu_custom_call.1']
    #allocation6 [shape = 's32[2]{0}', space=sflag, size = 0x8, scoped, tag = 'scoped memory for tpu_custom_call.1']
    #allocation7 [shape = 'u8[65536]{0}', space=vmem, size = 0x10000, scoped, tag = 'input window, operand 1']
    #allocation8 [shape = 's32[2]{0}', space=sflag, size = 0x8, scoped, tag = 'scoped memory for tpu_custom_call.1']
    #allocation9 [shape = 'u8[65536]{0}', space=vmem, size = 0x10000, scoped, tag = 'input window, operand 2']
    #allocation10 [shape = 'u8[32768]{0}', space=vmem, size = 0x8000, scoped, tag = 'input window, operand 3, single buffered']
    #allocation11 [shape = 's32[1]{0}', space=sflag, size = 0x4, scoped, tag = 'scoped memory for tpu_custom_call.1']
    #allocation12 [shape = 'u8[32768]{0}', space=vmem, size = 0x8000, scoped, tag = 'input window, operand 5, single buffered']
    #allocation13 [shape = 'u8[32768]{0}', space=vmem, size = 0x8000, scoped, tag = 'input window, operand 7, single buffered']
    #allocation14 [shape = 's32[1]{0}', space=sflag, size = 0x4, scoped, tag = 'scoped memory for tpu_custom_call.1']
    #allocation15 [shape = 'u8[32768]{0}', space=vmem, size = 0x8000, scoped, tag = 'input window, operand 9, single buffered']
    #allocation16 [shape = 'u8[65536]{0}', space=vmem, size = 0x10000, scoped, tag = 'input window, operand 13, single buffered']
    #allocation17 [shape = 's32[1]{0}', space=sflag, size = 0x4, scoped, tag = 'scoped memory for tpu_custom_call.1']
    #allocation18 [shape = 'u8[65536]{0}', space=vmem, size = 0x10000, scoped, tag = 'input window, operand 15, single buffered']
    #allocation19 [shape = 'u8[65536]{0}', space=vmem, size = 0x10000, scoped, tag = 'output window, operand 0']
    %24 = vsyncpa [#allocation5], 0
    %s25 = scalar_lea.sflag [#allocation5], 1
    %26 = vsyncpa %s25, 0
    %27 = vsyncpa [#allocation8], 0
    %s28 = scalar_lea.sflag [#allocation8], 1
    %29 = vsyncpa %s28, 0
    %30 = vsyncpa [#allocation11], 0
    %31 = vsyncpa [#allocation14], 0
    %32 = vsyncpa [#allocation17], 0
    %33 = vsyncpa [#allocation6], 0
    %s34 = scalar_lea.sflag [#allocation6], 1
    %35 = vsyncpa %s34, 0
    loop: start=0, step=1, limit=6
    $region2: #{tpu_custom_call.1} parent=1 // loop_pre_header
      _
    $region3: #{tpu_custom_call.1} parent=1 // loop_header
      %s37 = sphi 0, %s41
      %p38 = scmp.ge.s32.totalorder %s37, 6
      %s44 = sphi 0, %s56
      %s45 = sphi 0, %s52
      %s46 = sphi 0, %s44
      %s47 = sphi 0, %s45
      %s48 = sphi 0, %s46
      %s49 = sphi 0, %s47
      %s59 = sphi 0, %s61
      %s62 = sphi 0, %s59
      %s63 = sphi 0, %s62
      %s79 = sphi 0, %s63
      %s85 = sphi 0, %s87
      %s88 = sphi 0, %s85
      %s89 = sphi 0, %s88
      %s105 = sphi 0, %s89
      %s113 = sphi 0, %s115
      %s116 = sphi 0, %s113
      %s117 = sphi 0, %s116
      %s133 = sphi 0, %s117
      %s137 = sphi 0, %s137
      %s139 = sphi 0, %s137
      %s140 = sphi 0, %s139
      %s154 = sphi 0, %s140
      %s158 = sphi 0, %s158
      %s160 = sphi 0, %s158
      %s161 = sphi 0, %s160
      %s175 = sphi 0, %s161
      %s179 = sphi 0, %s179
      %s181 = sphi 0, %s179
      %s182 = sphi 0, %s181
      %s196 = sphi 0, %s182
      %s200 = sphi 0, %s200
      %s202 = sphi 0, %s200
      %s203 = sphi 0, %s202
      %s217 = sphi 0, %s203
      %s221 = sphi 0, %s221
      %s223 = sphi 0, %s221
      %s224 = sphi 0, %s223
      %s238 = sphi 0, %s224
      %s242 = sphi 0, %s242
      %s244 = sphi 0, %s242
      %s245 = sphi 0, %s244
      %s259 = sphi 0, %s245
      %s263 = sphi 0, %s263
      %s265 = sphi 0, %s263
      %s266 = sphi 0, %s265
      %s280 = sphi 0, %s266
      %s284 = sphi 0, %s284
      %s286 = sphi 0, %s284
      %s287 = sphi 0, %s286
      %s301 = sphi 0, %s287
      %s305 = sphi 0, %s305
      %s307 = sphi 0, %s305
      %s308 = sphi 0, %s307
      %s322 = sphi 0, %s308
      %s326 = sphi 0, %s326
      %s328 = sphi 0, %s326
      %s329 = sphi 0, %s328
      %s343 = sphi 0, %s329
      %s347 = sphi 0, %s347
      %s349 = sphi 0, %s347
      %s350 = sphi 0, %s349
      %s364 = sphi 0, %s350
      %s368 = sphi 0, %s368
      %s370 = sphi 0, %s368
      %s371 = sphi 0, %s370
      %s385 = sphi 0, %s371
      %s389 = sphi 0, %s389
      %s391 = sphi 0, %s389
      %s392 = sphi 0, %s391
      %s406 = sphi 0, %s392
      %s410 = sphi 0, %s410
      %s412 = sphi 0, %s410
      %s413 = sphi 0, %s412
      %s427 = sphi 0, %s413
      %s431 = sphi 0, %s431
      %s433 = sphi 0, %s431
      %s434 = sphi 0, %s433
      %s448 = sphi 0, %s434
      %s452 = sphi 0, %s452
      %s454 = sphi 0, %s452
      %s455 = sphi 0, %s454
      %s469 = sphi 0, %s455
      %s477 = sphi 0, %s479
      %s480 = sphi 0, %s477
      %s481 = sphi 0, %s480
      %s497 = sphi 0, %s481
    $region4: #{tpu_custom_call.1} parent=1 // loop_header_branch
      %40 = sbr.rel (%p38) target = $region8
    $region5: #{tpu_custom_call.1} parent=1 // loop_body
      %s42 = ssub.s32 %s37, 1
      %s43 = ssub.s32 %s37, 2
      %s50 = sadd.s32 1, %s45
      %p51 = scmp.ge.s32.totalorder %s50, 2
      %s52 = scalar_select %p51, 0, %s50
      %s53 = sadd.s32 1, %s44
      %s54 = scalar_select %p51, %s53, %s44
      %p55 = scmp.ge.s32.totalorder %s54, 2
      %s56 = scalar_select %p55, 0, %s54
      %s57 = ssub.s32 %s44, %s56
      %p58 = scmp.eq.s32.totalorder %s57, 0
      %s60 = sadd.s32 %s59, 1
      %s61 = scalar_select %p58, %s59, %s60
      %p64 = pneg %p58
      %p65 = scmp.eq.s32.totalorder %s37, 3
      %p66 = por %p64, %p65
      %p67 = scmp.ne.s32.totalorder %s59, %s62
      %p68 = scmp.eq.s32.totalorder %s37, 0
      %p69 = por %p67, %p68
      %p70 = scmp.ne.s32.totalorder %s59, %s62
      %p71 = scmp.eq.s32.totalorder %s42, 3
      %p72 = por %p70, %p71
      %p73 = scmp.ne.s32.totalorder %s62, %s63
      %p74 = scmp.eq.s32.totalorder %s42, 0
      %p75 = por %p73, %p74
      %p76 = scmp.ne.s32.totalorder %s62, %s63
      %p77 = scmp.eq.s32.totalorder %s43, 3
      %p78 = por %p76, %p77
      %p80 = scmp.ne.s32.totalorder %s63, %s79
      %p81 = scmp.eq.s32.totalorder %s43, 0
      %p82 = por %p80, %p81
      %s83 = ssub.s32 %s44, %s56
      %p84 = scmp.eq.s32.totalorder %s83, 0
      %s86 = sadd.s32 %s85, 1
      %s87 = scalar_select %p84, %s85, %s86
      %p90 = pneg %p84
      %p91 = scmp.eq.s32.totalorder %s37, 3
      %p92 = por %p90, %p91
      %p93 = scmp.ne.s32.totalorder %s85, %s88
      %p94 = scmp.eq.s32.totalorder %s37, 0
      %p95 = por %p93, %p94
      %p96 = scmp.ne.s32.totalorder %s85, %s88
      %p97 = scmp.eq.s32.totalorder %s42, 3
      %p98 = por %p96, %p97
      %p99 = scmp.ne.s32.totalorder %s88, %s89
      %p100 = scmp.eq.s32.totalorder %s42, 0
      %p101 = por %p99, %p100
      %p102 = scmp.ne.s32.totalorder %s88, %s89
      %p103 = scmp.eq.s32.totalorder %s43, 3
      %p104 = por %p102, %p103
      %p106 = scmp.ne.s32.totalorder %s89, %s105
      %p107 = scmp.eq.s32.totalorder %s43, 0
      %p108 = por %p106, %p107
      %s109 = ssub.s32 %s44, %s56
      %s110 = ssub.s32 %s45, %s52
      %s111 = sor.u32 %s109, %s110
      %p112 = scmp.eq.s32.totalorder %s111, 0
      %s114 = sadd.s32 %s113, 1
      %s115 = scalar_select %p112, %s113, %s114
      %p118 = pneg %p112
      %p119 = scmp.eq.s32.totalorder %s37, 3
      %p120 = por %p118, %p119
      %p121 = scmp.ne.s32.totalorder %s113, %s116
      %p122 = scmp.eq.s32.totalorder %s37, 0
      %p123 = por %p121, %p122
      %p124 = scmp.ne.s32.totalorder %s113, %s116
      %p125 = scmp.eq.s32.totalorder %s42, 3
      %p126 = por %p124, %p125
      %p127 = scmp.ne.s32.totalorder %s116, %s117
      %p128 = scmp.eq.s32.totalorder %s42, 0
      %p129 = por %p127, %p128
      %p130 = scmp.ne.s32.totalorder %s116, %s117
      %p131 = scmp.eq.s32.totalorder %s43, 3
      %p132 = por %p130, %p131
      %p134 = scmp.ne.s32.totalorder %s117, %s133
      %p135 = scmp.eq.s32.totalorder %s43, 0
      %p136 = por %p134, %p135
      %s138 = sadd.s32 %s137, 1
      %p141 = scmp.eq.s32.totalorder %s37, 3
      %p142 = scmp.ne.s32.totalorder %s137, %s139
      %p143 = scmp.eq.s32.totalorder %s37, 0
      %p144 = por %p142, %p143
      %p145 = scmp.ne.s32.totalorder %s137, %s139
      %p146 = scmp.eq.s32.totalorder %s42, 3
      %p147 = por %p145, %p146
      %p148 = scmp.ne.s32.totalorder %s139, %s140
      %p149 = scmp.eq.s32.totalorder %s42, 0
      %p150 = por %p148, %p149
      %p151 = scmp.ne.s32.totalorder %s139, %s140
      %p152 = scmp.eq.s32.totalorder %s43, 3
      %p153 = por %p151, %p152
      %p155 = scmp.ne.s32.totalorder %s140, %s154
      %p156 = scmp.eq.s32.totalorder %s43, 0
      %p157 = por %p155, %p156
      %s159 = sadd.s32 %s158, 1
      %p162 = scmp.eq.s32.totalorder %s37, 3
      %p163 = scmp.ne.s32.totalorder %s158, %s160
      %p164 = scmp.eq.s32.totalorder %s37, 0
      %p165 = por %p163, %p164
      %p166 = scmp.ne.s32.totalorder %s158, %s160
      %p167 = scmp.eq.s32.totalorder %s42, 3
      %p168 = por %p166, %p167
      %p169 = scmp.ne.s32.totalorder %s160, %s161
      %p170 = scmp.eq.s32.totalorder %s42, 0
      %p171 = por %p169, %p170
      %p172 = scmp.ne.s32.totalorder %s160, %s161
      %p173 = scmp.eq.s32.totalorder %s43, 3
      %p174 = por %p172, %p173
      %p176 = scmp.ne.s32.totalorder %s161, %s175
      %p177 = scmp.eq.s32.totalorder %s43, 0
      %p178 = por %p176, %p177
      %s180 = sadd.s32 %s179, 1
      %p183 = scmp.eq.s32.totalorder %s37, 3
      %p184 = scmp.ne.s32.totalorder %s179, %s181
      %p185 = scmp.eq.s32.totalorder %s37, 0
      %p186 = por %p184, %p185
      %p187 = scmp.ne.s32.totalorder %s179, %s181
      %p188 = scmp.eq.s32.totalorder %s42, 3
      %p189 = por %p187, %p188
      %p190 = scmp.ne.s32.totalorder %s181, %s182
      %p191 = scmp.eq.s32.totalorder %s42, 0
      %p192 = por %p190, %p191
      %p193 = scmp.ne.s32.totalorder %s181, %s182
      %p194 = scmp.eq.s32.totalorder %s43, 3
      %p195 = por %p193, %p194
      %p197 = scmp.ne.s32.totalorder %s182, %s196
      %p198 = scmp.eq.s32.totalorder %s43, 0
      %p199 = por %p197, %p198
      %s201 = sadd.s32 %s200, 1
      %p204 = scmp.eq.s32.totalorder %s37, 3
      %p205 = scmp.ne.s32.totalorder %s200, %s202
      %p206 = scmp.eq.s32.totalorder %s37, 0
      %p207 = por %p205, %p206
      %p208 = scmp.ne.s32.totalorder %s200, %s202
      %p209 = scmp.eq.s32.totalorder %s42, 3
      %p210 = por %p208, %p209
      %p211 = scmp.ne.s32.totalorder %s202, %s203
      %p212 = scmp.eq.s32.totalorder %s42, 0
      %p213 = por %p211, %p212
      %p214 = scmp.ne.s32.totalorder %s202, %s203
      %p215 = scmp.eq.s32.totalorder %s43, 3
      %p216 = por %p214, %p215
      %p218 = scmp.ne.s32.totalorder %s203, %s217
      %p219 = scmp.eq.s32.totalorder %s43, 0
      %p220 = por %p218, %p219
      %s222 = sadd.s32 %s221, 1
      %p225 = scmp.eq.s32.totalorder %s37, 3
      %p226 = scmp.ne.s32.totalorder %s221, %s223
      %p227 = scmp.eq.s32.totalorder %s37, 0
      %p228 = por %p226, %p227
      %p229 = scmp.ne.s32.totalorder %s221, %s223
      %p230 = scmp.eq.s32.totalorder %s42, 3
      %p231 = por %p229, %p230
      %p232 = scmp.ne.s32.totalorder %s223, %s224
      %p233 = scmp.eq.s32.totalorder %s42, 0
      %p234 = por %p232, %p233
      %p235 = scmp.ne.s32.totalorder %s223, %s224
      %p236 = scmp.eq.s32.totalorder %s43, 3
      %p237 = por %p235, %p236
      %p239 = scmp.ne.s32.totalorder %s224, %s238
      %p240 = scmp.eq.s32.totalorder %s43, 0
      %p241 = por %p239, %p240
      %s243 = sadd.s32 %s242, 1
      %p246 = scmp.eq.s32.totalorder %s37, 3
      %p247 = scmp.ne.s32.totalorder %s242, %s244
      %p248 = scmp.eq.s32.totalorder %s37, 0
      %p249 = por %p247, %p248
      %p250 = scmp.ne.s32.totalorder %s242, %s244
      %p251 = scmp.eq.s32.totalorder %s42, 3
      %p252 = por %p250, %p251
      %p253 = scmp.ne.s32.totalorder %s244, %s245
      %p254 = scmp.eq.s32.totalorder %s42, 0
      %p255 = por %p253, %p254
      %p256 = scmp.ne.s32.totalorder %s244, %s245
      %p257 = scmp.eq.s32.totalorder %s43, 3
      %p258 = por %p256, %p257
      %p260 = scmp.ne.s32.totalorder %s245, %s259
      %p261 = scmp.eq.s32.totalorder %s43, 0
      %p262 = por %p260, %p261
      %s264 = sadd.s32 %s263, 1
      %p267 = scmp.eq.s32.totalorder %s37, 3
      %p268 = scmp.ne.s32.totalorder %s263, %s265
      %p269 = scmp.eq.s32.totalorder %s37, 0
      %p270 = por %p268, %p269
      %p271 = scmp.ne.s32.totalorder %s263, %s265
      %p272 = scmp.eq.s32.totalorder %s42, 3
      %p273 = por %p271, %p272
      %p274 = scmp.ne.s32.totalorder %s265, %s266
      %p275 = scmp.eq.s32.totalorder %s42, 0
      %p276 = por %p274, %p275
      %p277 = scmp.ne.s32.totalorder %s265, %s266
      %p278 = scmp.eq.s32.totalorder %s43, 3
      %p279 = por %p277, %p278
      %p281 = scmp.ne.s32.totalorder %s266, %s280
      %p282 = scmp.eq.s32.totalorder %s43, 0
      %p283 = por %p281, %p282
      %s285 = sadd.s32 %s284, 1
      %p288 = scmp.eq.s32.totalorder %s37, 3
      %p289 = scmp.ne.s32.totalorder %s284, %s286
      %p290 = scmp.eq.s32.totalorder %s37, 0
      %p291 = por %p289, %p290
      %p292 = scmp.ne.s32.totalorder %s284, %s286
      %p293 = scmp.eq.s32.totalorder %s42, 3
      %p294 = por %p292, %p293
      %p295 = scmp.ne.s32.totalorder %s286, %s287
      %p296 = scmp.eq.s32.totalorder %s42, 0
      %p297 = por %p295, %p296
      %p298 = scmp.ne.s32.totalorder %s286, %s287
      %p299 = scmp.eq.s32.totalorder %s43, 3
      %p300 = por %p298, %p299
      %p302 = scmp.ne.s32.totalorder %s287, %s301
      %p303 = scmp.eq.s32.totalorder %s43, 0
      %p304 = por %p302, %p303
      %s306 = sadd.s32 %s305, 1
      %p309 = scmp.eq.s32.totalorder %s37, 3
      %p310 = scmp.ne.s32.totalorder %s305, %s307
      %p311 = scmp.eq.s32.totalorder %s37, 0
      %p312 = por %p310, %p311
      %p313 = scmp.ne.s32.totalorder %s305, %s307
      %p314 = scmp.eq.s32.totalorder %s42, 3
      %p315 = por %p313, %p314
      %p316 = scmp.ne.s32.totalorder %s307, %s308
      %p317 = scmp.eq.s32.totalorder %s42, 0
      %p318 = por %p316, %p317
      %p319 = scmp.ne.s32.totalorder %s307, %s308
      %p320 = scmp.eq.s32.totalorder %s43, 3
      %p321 = por %p319, %p320
      %p323 = scmp.ne.s32.totalorder %s308, %s322
      %p324 = scmp.eq.s32.totalorder %s43, 0
      %p325 = por %p323, %p324
      %s327 = sadd.s32 %s326, 1
      %p330 = scmp.eq.s32.totalorder %s37, 3
      %p331 = scmp.ne.s32.totalorder %s326, %s328
      %p332 = scmp.eq.s32.totalorder %s37, 0
      %p333 = por %p331, %p332
      %p334 = scmp.ne.s32.totalorder %s326, %s328
      %p335 = scmp.eq.s32.totalorder %s42, 3
      %p336 = por %p334, %p335
      %p337 = scmp.ne.s32.totalorder %s328, %s329
      %p338 = scmp.eq.s32.totalorder %s42, 0
      %p339 = por %p337, %p338
      %p340 = scmp.ne.s32.totalorder %s328, %s329
      %p341 = scmp.eq.s32.totalorder %s43, 3
      %p342 = por %p340, %p341
      %p344 = scmp.ne.s32.totalorder %s329, %s343
      %p345 = scmp.eq.s32.totalorder %s43, 0
      %p346 = por %p344, %p345
      %s348 = sadd.s32 %s347, 1
      %p351 = scmp.eq.s32.totalorder %s37, 3
      %p352 = scmp.ne.s32.totalorder %s347, %s349
      %p353 = scmp.eq.s32.totalorder %s37, 0
      %p354 = por %p352, %p353
      %p355 = scmp.ne.s32.totalorder %s347, %s349
      %p356 = scmp.eq.s32.totalorder %s42, 3
      %p357 = por %p355, %p356
      %p358 = scmp.ne.s32.totalorder %s349, %s350
      %p359 = scmp.eq.s32.totalorder %s42, 0
      %p360 = por %p358, %p359
      %p361 = scmp.ne.s32.totalorder %s349, %s350
      %p362 = scmp.eq.s32.totalorder %s43, 3
      %p363 = por %p361, %p362
      %p365 = scmp.ne.s32.totalorder %s350, %s364
      %p366 = scmp.eq.s32.totalorder %s43, 0
      %p367 = por %p365, %p366
      %s369 = sadd.s32 %s368, 1
      %p372 = scmp.eq.s32.totalorder %s37, 3
      %p373 = scmp.ne.s32.totalorder %s368, %s370
      %p374 = scmp.eq.s32.totalorder %s37, 0
      %p375 = por %p373, %p374
      %p376 = scmp.ne.s32.totalorder %s368, %s370
      %p377 = scmp.eq.s32.totalorder %s42, 3
      %p378 = por %p376, %p377
      %p379 = scmp.ne.s32.totalorder %s370, %s371
      %p380 = scmp.eq.s32.totalorder %s42, 0
      %p381 = por %p379, %p380
      %p382 = scmp.ne.s32.totalorder %s370, %s371
      %p383 = scmp.eq.s32.totalorder %s43, 3
      %p384 = por %p382, %p383
      %p386 = scmp.ne.s32.totalorder %s371, %s385
      %p387 = scmp.eq.s32.totalorder %s43, 0
      %p388 = por %p386, %p387
      %s390 = sadd.s32 %s389, 1
      %p393 = scmp.eq.s32.totalorder %s37, 3
      %p394 = scmp.ne.s32.totalorder %s389, %s391
      %p395 = scmp.eq.s32.totalorder %s37, 0
      %p396 = por %p394, %p395
      %p397 = scmp.ne.s32.totalorder %s389, %s391
      %p398 = scmp.eq.s32.totalorder %s42, 3
      %p399 = por %p397, %p398
      %p400 = scmp.ne.s32.totalorder %s391, %s392
      %p401 = scmp.eq.s32.totalorder %s42, 0
      %p402 = por %p400, %p401
      %p403 = scmp.ne.s32.totalorder %s391, %s392
      %p404 = scmp.eq.s32.totalorder %s43, 3
      %p405 = por %p403, %p404
      %p407 = scmp.ne.s32.totalorder %s392, %s406
      %p408 = scmp.eq.s32.totalorder %s43, 0
      %p409 = por %p407, %p408
      %s411 = sadd.s32 %s410, 1
      %p414 = scmp.eq.s32.totalorder %s37, 3
      %p415 = scmp.ne.s32.totalorder %s410, %s412
      %p416 = scmp.eq.s32.totalorder %s37, 0
      %p417 = por %p415, %p416
      %p418 = scmp.ne.s32.totalorder %s410, %s412
      %p419 = scmp.eq.s32.totalorder %s42, 3
      %p420 = por %p418, %p419
      %p421 = scmp.ne.s32.totalorder %s412, %s413
      %p422 = scmp.eq.s32.totalorder %s42, 0
      %p423 = por %p421, %p422
      %p424 = scmp.ne.s32.totalorder %s412, %s413
      %p425 = scmp.eq.s32.totalorder %s43, 3
      %p426 = por %p424, %p425
      %p428 = scmp.ne.s32.totalorder %s413, %s427
      %p429 = scmp.eq.s32.totalorder %s43, 0
      %p430 = por %p428, %p429
      %s432 = sadd.s32 %s431, 1
      %p435 = scmp.eq.s32.totalorder %s37, 3
      %p436 = scmp.ne.s32.totalorder %s431, %s433
      %p437 = scmp.eq.s32.totalorder %s37, 0
      %p438 = por %p436, %p437
      %p439 = scmp.ne.s32.totalorder %s431, %s433
      %p440 = scmp.eq.s32.totalorder %s42, 3
      %p441 = por %p439, %p440
      %p442 = scmp.ne.s32.totalorder %s433, %s434
      %p443 = scmp.eq.s32.totalorder %s42, 0
      %p444 = por %p442, %p443
      %p445 = scmp.ne.s32.totalorder %s433, %s434
      %p446 = scmp.eq.s32.totalorder %s43, 3
      %p447 = por %p445, %p446
      %p449 = scmp.ne.s32.totalorder %s434, %s448
      %p450 = scmp.eq.s32.totalorder %s43, 0
      %p451 = por %p449, %p450
      %s453 = sadd.s32 %s452, 1
      %p456 = scmp.eq.s32.totalorder %s37, 3
      %p457 = scmp.ne.s32.totalorder %s452, %s454
      %p458 = scmp.eq.s32.totalorder %s37, 0
      %p459 = por %p457, %p458
      %p460 = scmp.ne.s32.totalorder %s452, %s454
      %p461 = scmp.eq.s32.totalorder %s42, 3
      %p462 = por %p460, %p461
      %p463 = scmp.ne.s32.totalorder %s454, %s455
      %p464 = scmp.eq.s32.totalorder %s42, 0
      %p465 = por %p463, %p464
      %p466 = scmp.ne.s32.totalorder %s454, %s455
      %p467 = scmp.eq.s32.totalorder %s43, 3
      %p468 = por %p466, %p467
      %p470 = scmp.ne.s32.totalorder %s455, %s469
      %p471 = scmp.eq.s32.totalorder %s43, 0
      %p472 = por %p470, %p471
      %s473 = ssub.s32 %s44, %s56
      %s474 = ssub.s32 %s45, %s52
      %s475 = sor.u32 %s473, %s474
      %p476 = scmp.eq.s32.totalorder %s475, 0
      %s478 = sadd.s32 %s477, 1
      %s479 = scalar_select %p476, %s477, %s478
      %p482 = pneg %p476
      %p483 = scmp.eq.s32.totalorder %s37, 3
      %p484 = por %p482, %p483
      %p485 = scmp.ne.s32.totalorder %s477, %s480
      %p486 = scmp.eq.s32.totalorder %s37, 0
      %p487 = por %p485, %p486
      %p488 = scmp.ne.s32.totalorder %s477, %s480
      %p489 = scmp.eq.s32.totalorder %s42, 3
      %p490 = por %p488, %p489
      %p491 = scmp.ne.s32.totalorder %s480, %s481
      %p492 = scmp.eq.s32.totalorder %s42, 0
      %p493 = por %p491, %p492
      %p494 = scmp.ne.s32.totalorder %s480, %s481
      %p495 = scmp.eq.s32.totalorder %s43, 3
      %p496 = por %p494, %p495
      %p498 = scmp.ne.s32.totalorder %s481, %s497
      %p499 = scmp.eq.s32.totalorder %s43, 0
      %p500 = por %p498, %p499
      %p501 = scmp.le.s32.totalorder 1, %s37
      %p502 = scmp.lt.s32.totalorder %s37, 5
      %p503 = pnand %p501, %p502
      %p504 = pneg %p503
      // Predicated region
      $region9: #{tpu_custom_call.1} parent=5 // pred_check
        _
      $region10: #{tpu_custom_call.1} parent=5 // pred_check_branch
        %506 = sbr.rel (%p503) target = $region12
      $region11: #{tpu_custom_call.1} parent=5 // pred_region
        %s507 = ssub.s32 %s37, 1
        // Predicated region
        $region13: #{tpu_custom_call.1} parent=11 // pred_check
          %p508 = pneg %p150
        $region14: #{tpu_custom_call.1} parent=11 // pred_check_branch
          %510 = sbr.rel (%p508) target = $region16
        $region15: #{tpu_custom_call.1} parent=11 // pred_region
          %s512 = ssub.s32 1024, 1024
          %513 = vsyncadd [#allocation11], %s512
          %s514 = sshll.u32 [#allocation10], 4
          %s515 = int_to_ptr.vmem [resolvable:$true] %s514
          %520 = dma.hbm_to_vmem [thread:$0]  %s3, 1024, %s515, [#allocation11], 64, 64, 4
        $region16: #{tpu_custom_call.1} parent=11 // pred_fallthru
          _
        // Predicated region
        $region17: #{tpu_custom_call.1} parent=11 // pred_check
          %p521 = pneg %p171
        $region18: #{tpu_custom_call.1} parent=11 // pred_check_branch
          %523 = sbr.rel (%p521) target = $region20
        $region19: #{tpu_custom_call.1} parent=11 // pred_region
          _
        $region20: #{tpu_custom_call.1} parent=11 // pred_fallthru
          _
        // Predicated region
        $region21: #{tpu_custom_call.1} parent=11 // pred_check
          %p524 = pneg %p192
        $region22: #{tpu_custom_call.1} parent=11 // pred_check_branch
          %526 = sbr.rel (%p524) target = $region24
        $region23: #{tpu_custom_call.1} parent=11 // pred_region
          %s528 = ssub.s32 1024, 1024
          %529 = vsyncadd [#allocation11], %s528
          %s530 = sshll.u32 [#allocation12], 4
          %s531 = int_to_ptr.vmem [resolvable:$true] %s530
          %536 = dma.hbm_to_vmem [thread:$0]  %s5, 1024, %s531, [#allocation11], 64, 64, 4
        $region24: #{tpu_custom_call.1} parent=11 // pred_fallthru
          _
        // Predicated region
        $region25: #{tpu_custom_call.1} parent=11 // pred_check
          %p537 = pneg %p213
        $region26: #{tpu_custom_call.1} parent=11 // pred_check_branch
          %539 = sbr.rel (%p537) target = $region28
        $region27: #{tpu_custom_call.1} parent=11 // pred_region
          _
        $region28: #{tpu_custom_call.1} parent=11 // pred_fallthru
          _
        // Predicated region
        $region29: #{tpu_custom_call.1} parent=11 // pred_check
          %p540 = pneg %p234
        $region30: #{tpu_custom_call.1} parent=11 // pred_check_branch
          %542 = sbr.rel (%p540) target = $region32
        $region31: #{tpu_custom_call.1} parent=11 // pred_region
          %s544 = ssub.s32 1024, 1024
          %545 = vsyncadd [#allocation14], %s544
          %s546 = sshll.u32 [#allocation13], 4
          %s547 = int_to_ptr.vmem [resolvable:$true] %s546
          %552 = dma.hbm_to_vmem [thread:$0]  %s7, 1024, %s547, [#allocation14], 64, 64, 4
        $region32: #{tpu_custom_call.1} parent=11 // pred_fallthru
          _
        // Predicated region
        $region33: #{tpu_custom_call.1} parent=11 // pred_check
          %p553 = pneg %p255
        $region34: #{tpu_custom_call.1} parent=11 // pred_check_branch
          %555 = sbr.rel (%p553) target = $region36
        $region35: #{tpu_custom_call.1} parent=11 // pred_region
          _
        $region36: #{tpu_custom_call.1} parent=11 // pred_fallthru
          _
        // Predicated region
        $region37: #{tpu_custom_call.1} parent=11 // pred_check
          %p556 = pneg %p276
        $region38: #{tpu_custom_call.1} parent=11 // pred_check_branch
          %558 = sbr.rel (%p556) target = $region40
        $region39: #{tpu_custom_call.1} parent=11 // pred_region
          %s560 = ssub.s32 1024, 1024
          %561 = vsyncadd [#allocation14], %s560
          %s562 = sshll.u32 [#allocation15], 4
          %s563 = int_to_ptr.vmem [resolvable:$true] %s562
          %568 = dma.hbm_to_vmem [thread:$0]  %s9, 1024, %s563, [#allocation14], 64, 64, 4
        $region40: #{tpu_custom_call.1} parent=11 // pred_fallthru
          _
        // Predicated region
        $region41: #{tpu_custom_call.1} parent=11 // pred_check
          %p569 = pneg %p297
        $region42: #{tpu_custom_call.1} parent=11 // pred_check_branch
          %571 = sbr.rel (%p569) target = $region44
        $region43: #{tpu_custom_call.1} parent=11 // pred_region
          _
        $region44: #{tpu_custom_call.1} parent=11 // pred_fallthru
          _
        // Predicated region
        $region45: #{tpu_custom_call.1} parent=11 // pred_check
          %p572 = pneg %p318
        $region46: #{tpu_custom_call.1} parent=11 // pred_check_branch
          %574 = sbr.rel (%p572) target = $region48
        $region47: #{tpu_custom_call.1} parent=11 // pred_region
          _
        $region48: #{tpu_custom_call.1} parent=11 // pred_fallthru
          _
        // Predicated region
        $region49: #{tpu_custom_call.1} parent=11 // pred_check
          %p575 = pneg %p339
        $region50: #{tpu_custom_call.1} parent=11 // pred_check_branch
          %577 = sbr.rel (%p575) target = $region52
        $region51: #{tpu_custom_call.1} parent=11 // pred_region
          _
        $region52: #{tpu_custom_call.1} parent=11 // pred_fallthru
          _
        // Predicated region
        $region53: #{tpu_custom_call.1} parent=11 // pred_check
          %p578 = pneg %p360
        $region54: #{tpu_custom_call.1} parent=11 // pred_check_branch
          %580 = sbr.rel (%p578) target = $region56
        $region55: #{tpu_custom_call.1} parent=11 // pred_region
          %s582 = ssub.s32 2048, 2048
          %583 = vsyncadd [#allocation17], %s582
          %s584 = sshll.u32 [#allocation16], 4
          %s585 = int_to_ptr.vmem [resolvable:$true] %s584
          %590 = dma.hbm_to_vmem [thread:$0]  %s13, 2048, %s585, [#allocation17], 128, 128, 8
        $region56: #{tpu_custom_call.1} parent=11 // pred_fallthru
          _
        // Predicated region
        $region57: #{tpu_custom_call.1} parent=11 // pred_check
          %p591 = pneg %p381
        $region58: #{tpu_custom_call.1} parent=11 // pred_check_branch
          %593 = sbr.rel (%p591) target = $region60
        $region59: #{tpu_custom_call.1} parent=11 // pred_region
          _
        $region60: #{tpu_custom_call.1} parent=11 // pred_fallthru
          _
        // Predicated region
        $region61: #{tpu_custom_call.1} parent=11 // pred_check
          %p594 = pneg %p402
        $region62: #{tpu_custom_call.1} parent=11 // pred_check_branch
          %596 = sbr.rel (%p594) target = $region64
        $region63: #{tpu_custom_call.1} parent=11 // pred_region
          %s598 = ssub.s32 2048, 2048
          %599 = vsyncadd [#allocation17], %s598
          %s600 = sshll.u32 [#allocation18], 4
          %s601 = int_to_ptr.vmem [resolvable:$true] %s600
          %606 = dma.hbm_to_vmem [thread:$0]  %s15, 2048, %s601, [#allocation17], 64, 64, 4
        $region64: #{tpu_custom_call.1} parent=11 // pred_fallthru
          _
        // Predicated region
        $region65: #{tpu_custom_call.1} parent=11 // pred_check
          %p607 = pneg %p423
        $region66: #{tpu_custom_call.1} parent=11 // pred_check_branch
          %609 = sbr.rel (%p607) target = $region68
        $region67: #{tpu_custom_call.1} parent=11 // pred_region
          _
        $region68: #{tpu_custom_call.1} parent=11 // pred_fallthru
          _
        // Predicated region
        $region69: #{tpu_custom_call.1} parent=11 // pred_check
          %p610 = pneg %p444
        $region70: #{tpu_custom_call.1} parent=11 // pred_check_branch
          %612 = sbr.rel (%p610) target = $region72
        $region71: #{tpu_custom_call.1} parent=11 // pred_region
          _
        $region72: #{tpu_custom_call.1} parent=11 // pred_fallthru
          _
        // Predicated region
        $region73: #{tpu_custom_call.1} parent=11 // pred_check
          %p613 = pneg %p465
        $region74: #{tpu_custom_call.1} parent=11 // pred_check_branch
          %615 = sbr.rel (%p613) target = $region76
        $region75: #{tpu_custom_call.1} parent=11 // pred_region
          _
        $region76: #{tpu_custom_call.1} parent=11 // pred_fallthru
          _
      $region12: #{tpu_custom_call.1} parent=5 // pred_fallthru
        _
      %p616 = scmp.lt.s32.totalorder %s37, 4
      // Predicated region
      $region77: #{tpu_custom_call.1} parent=5 // pred_check
        %p617 = pneg %p616
      $region78: #{tpu_custom_call.1} parent=5 // pred_check_branch
        %619 = sbr.rel (%p617) target = $region80
      $region79: #{tpu_custom_call.1} parent=5 // pred_region
        // Predicated region
        $region81: #{tpu_custom_call.1} parent=79 // pred_check
          %p620 = pneg %p69
        $region82: #{tpu_custom_call.1} parent=79 // pred_check_branch
          %622 = sbr.rel (%p620) target = $region84
        $region83: #{tpu_custom_call.1} parent=79 // pred_region
          %s623 = sand.u32 %s59, 1
          %s624 = scalar_lea.sflag [#allocation5], %s623
          %s625 = sand.u32 %s59, 1
          %s626 = scalar_lea.vmem [#allocation4], %s625
          %s628 = ssub.s32 16, 16
          %629 = vsyncadd %s624, %s628
          %s630 = smul.addr %s44, 16
          %s631 = scalar_lea.hbm %s0, %s630
          %s633 = sshll.u32 %s626, 4
          %s634 = int_to_ptr.vmem [resolvable:$true] %s633
          %636 = dma.hbm_to_vmem [thread:$0]  %s631, 16, %s634, %s624
        $region84: #{tpu_custom_call.1} parent=79 // pred_fallthru
          _
        // Predicated region
        $region85: #{tpu_custom_call.1} parent=79 // pred_check
          %p637 = pneg %p95
        $region86: #{tpu_custom_call.1} parent=79 // pred_check_branch
          %639 = sbr.rel (%p637) target = $region88
        $region87: #{tpu_custom_call.1} parent=79 // pred_region
          %s640 = sand.u32 %s37, 1
          %s641 = scalar_lea.sflag [#allocation8], %s640
          %s642 = sand.u32 %s85, 1
          %s643 = smul.addr %s642, 64
          %s644 = scalar_lea.vmem [#allocation7], %s643
          %s646 = ssub.s32 1024, 1024
          %647 = vsyncadd %s641, %s646
          %s648 = smul.addr %s44, 16
          %s649 = smul.addr %s648, 64
          %s650 = scalar_lea.hbm %s1, %s649
          %s651 = sshll.u32 %s644, 4
          %s652 = int_to_ptr.vmem [resolvable:$true] %s651
          %657 = dma.hbm_to_vmem [thread:$0]  %s650, 1024, %s652, %s641, 64, 64, 4
        $region88: #{tpu_custom_call.1} parent=79 // pred_fallthru
          _
        // Predicated region
        $region89: #{tpu_custom_call.1} parent=79 // pred_check
          %p658 = pneg %p123
        $region90: #{tpu_custom_call.1} parent=79 // pred_check_branch
          %660 = sbr.rel (%p658) target = $region92
        $region91: #{tpu_custom_call.1} parent=79 // pred_region
          %s661 = sand.u32 %s37, 1
          %s662 = scalar_lea.sflag [#allocation8], %s661
          %s663 = sand.u32 %s113, 1
          %s664 = smul.addr %s663, 64
          %s665 = scalar_lea.vmem [#allocation9], %s664
          %s666 = smul.u32 8, %s45
          %s668 = ssub.s32 1024, 1024
          %669 = vsyncadd %s662, %s668
          %s670 = smul.addr %s44, 16
          %s671 = sadd.s32 %s666, %s670
          %s672 = smul.addr %s671, 128
          %s673 = scalar_lea.hbm %s2, %s672
          %s674 = sshll.u32 %s665, 4
          %s675 = int_to_ptr.vmem [resolvable:$true] %s674
          %680 = dma.hbm_to_vmem [thread:$0]  %s673, 1024, %s675, %s662, 128, 128, 8
        $region92: #{tpu_custom_call.1} parent=79 // pred_fallthru
          _
      $region80: #{tpu_custom_call.1} parent=5 // pred_fallthru
        _
      %p681 = scmp.le.s32.totalorder 1, %s37
      %p682 = scmp.lt.s32.totalorder %s37, 5
      %p683 = pnand %p681, %p682
      %p684 = pneg %p683
      // Predicated region
      $region93: #{tpu_custom_call.1} parent=5 // pred_check
        _
      $region94: #{tpu_custom_call.1} parent=5 // pred_check_branch
        %686 = sbr.rel (%p683) target = $region96
      $region95: #{tpu_custom_call.1} parent=5 // pred_region
        %s687 = ssub.s32 %s37, 1
        %s688 = sand.u32 %s62, 1
        %s689 = scalar_lea.sflag [#allocation5], %s688
        %s690 = sand.u32 %s62, 1
        %s691 = scalar_lea.vmem [#allocation4], %s690
        // Predicated region
        $region97: #{tpu_custom_call.1} parent=95 // pred_check
          %p692 = pneg %p75
        $region98: #{tpu_custom_call.1} parent=95 // pred_check_branch
          %694 = sbr.rel (%p692) target = $region100
        $region99: #{tpu_custom_call.1} parent=95 // pred_region
          %695 = dma.done %s689, 16
        $region100: #{tpu_custom_call.1} parent=95 // pred_fallthru
          _
        %s696 = sand.u32 %s42, 1
        %s697 = scalar_lea.sflag [#allocation8], %s696
        %s698 = sand.u32 %s88, 1
        %s699 = smul.addr %s698, 64
        %s700 = scalar_lea.vmem [#allocation7], %s699
        // Predicated region
        $region101: #{tpu_custom_call.1} parent=95 // pred_check
          %p701 = pneg %p101
        $region102: #{tpu_custom_call.1} parent=95 // pred_check_branch
          %703 = sbr.rel (%p701) target = $region104
        $region103: #{tpu_custom_call.1} parent=95 // pred_region
          %704 = dma.done %s697, 1024
        $region104: #{tpu_custom_call.1} parent=95 // pred_fallthru
          _
        %s705 = sand.u32 %s42, 1
        %s706 = scalar_lea.sflag [#allocation8], %s705
        %s707 = sand.u32 %s116, 1
        %s708 = smul.addr %s707, 64
        %s709 = scalar_lea.vmem [#allocation9], %s708
        // Predicated region
        $region105: #{tpu_custom_call.1} parent=95 // pred_check
          %p710 = pneg %p129
        $region106: #{tpu_custom_call.1} parent=95 // pred_check_branch
          %712 = sbr.rel (%p710) target = $region108
        $region107: #{tpu_custom_call.1} parent=95 // pred_region
          %713 = dma.done %s706, 1024
        $region108: #{tpu_custom_call.1} parent=95 // pred_fallthru
          _
        // Predicated region
        $region109: #{tpu_custom_call.1} parent=95 // pred_check
          %p714 = pneg %p150
        $region110: #{tpu_custom_call.1} parent=95 // pred_check_branch
          %716 = sbr.rel (%p714) target = $region112
        $region111: #{tpu_custom_call.1} parent=95 // pred_region
          %717 = dma.done [#allocation11], 1024
        $region112: #{tpu_custom_call.1} parent=95 // pred_fallthru
          _
        // Predicated region
        $region113: #{tpu_custom_call.1} parent=95 // pred_check
          %p718 = pneg %p192
        $region114: #{tpu_custom_call.1} parent=95 // pred_check_branch
          %720 = sbr.rel (%p718) target = $region116
        $region115: #{tpu_custom_call.1} parent=95 // pred_region
          %721 = dma.done [#allocation11], 1024
        $region116: #{tpu_custom_call.1} parent=95 // pred_fallthru
          _
        // Predicated region
        $region117: #{tpu_custom_call.1} parent=95 // pred_check
          %p722 = pneg %p234
        $region118: #{tpu_custom_call.1} parent=95 // pred_check_branch
          %724 = sbr.rel (%p722) target = $region120
        $region119: #{tpu_custom_call.1} parent=95 // pred_region
          %725 = dma.done [#allocation14], 1024
        $region120: #{tpu_custom_call.1} parent=95 // pred_fallthru
          _
        // Predicated region
        $region121: #{tpu_custom_call.1} parent=95 // pred_check
          %p726 = pneg %p276
        $region122: #{tpu_custom_call.1} parent=95 // pred_check_branch
          %728 = sbr.rel (%p726) target = $region124
        $region123: #{tpu_custom_call.1} parent=95 // pred_region
          %729 = dma.done [#allocation14], 1024
        $region124: #{tpu_custom_call.1} parent=95 // pred_fallthru
          _
        // Predicated region
        $region125: #{tpu_custom_call.1} parent=95 // pred_check
          %p730 = pneg %p360
        $region126: #{tpu_custom_call.1} parent=95 // pred_check_branch
          %732 = sbr.rel (%p730) target = $region128
        $region127: #{tpu_custom_call.1} parent=95 // pred_region
          %733 = dma.done [#allocation17], 2048
        $region128: #{tpu_custom_call.1} parent=95 // pred_fallthru
          _
        // Predicated region
        $region129: #{tpu_custom_call.1} parent=95 // pred_check
          %p734 = pneg %p402
        $region130: #{tpu_custom_call.1} parent=95 // pred_check_branch
          %736 = sbr.rel (%p734) target = $region132
        $region131: #{tpu_custom_call.1} parent=95 // pred_region
          %737 = dma.done [#allocation17], 2048
        $region132: #{tpu_custom_call.1} parent=95 // pred_fallthru
          _
        %s738 = sand.u32 %s62, 1
        %s739 = scalar_lea.sflag [#allocation5], %s738
        %s740 = sand.u32 %s62, 1
        %s741 = scalar_lea.vmem [#allocation4], %s740
        %p742 = pneg %p75
        %p743 = pneg %p72
        %s744 = sand.u32 %s42, 1
        %s745 = scalar_lea.sflag [#allocation8], %s744
        %s746 = sand.u32 %s88, 1
        %s747 = smul.addr %s746, 64
        %s748 = scalar_lea.vmem [#allocation7], %s747
        %p749 = pneg %p101
        %p750 = pneg %p98
        %s751 = sand.u32 %s42, 1
        %s752 = scalar_lea.sflag [#allocation8], %s751
        %s753 = sand.u32 %s116, 1
        %s754 = smul.addr %s753, 64
        %s755 = scalar_lea.vmem [#allocation9], %s754
        %p756 = pneg %p129
        %p757 = pneg %p126
        %p758 = pneg %p150
        %p759 = pneg %p147
        %p760 = pneg %p171
        %p761 = pneg %p168
        %p762 = pneg %p192
        %p763 = pneg %p189
        %p764 = pneg %p213
        %p765 = pneg %p210
        %p766 = pneg %p234
        %p767 = pneg %p231
        %p768 = pneg %p255
        %p769 = pneg %p252
        %p770 = pneg %p276
        %p771 = pneg %p273
        %p772 = pneg %p297
        %p773 = pneg %p294
        %p774 = pneg %p318
        %p775 = pneg %p315
        %p776 = pneg %p339
        %p777 = pneg %p336
        %p778 = pneg %p360
        %p779 = pneg %p357
        %p780 = pneg %p381
        %p781 = pneg %p378
        %p782 = pneg %p402
        %p783 = pneg %p399
        %p784 = pneg %p423
        %p785 = pneg %p420
        %p786 = pneg %p444
        %p787 = pneg %p441
        %p788 = pneg %p465
        %p789 = pneg %p462
        %p790 = pneg %p493
        %p791 = pneg %p490
        %s792 = sand.u32 %s480, 1
        %s793 = scalar_lea.sflag [#allocation6], %s792
        %s794 = sand.u32 %s480, 1
        %s795 = smul.addr %s794, 64
        %s796 = scalar_lea.vmem [#allocation19], %s795
        %s797 = smul.u32 8, %s47
        %s798 = smul.u32 8, %s47
        %p800 = scmp.eq.s32.totalorder %s47, 0
        // Predicated region
        $region133: #{tpu_custom_call.1} parent=95 // pred_check
          %p801 = pneg %p800
        $region134: #{tpu_custom_call.1} parent=95 // pred_check_branch
          %803 = sbr.rel (%p801) target = $region136
        $region135: #{tpu_custom_call.1} parent=95 // pred_region
          %v804 = vld [vmem:[%s700] sm:$0xf]
          %v805 = vld [vmem:[%s700 + $0x4] sm:$0xf]
          %v806 = vld [vmem:[%s700 + $0x8] sm:$0xf]
          %v807 = vld [vmem:[%s700 + $0xc] sm:$0xf]
          %v808 = vld [vmem:[%s700 + $0x10] sm:$0xf]
          %v809 = vld [vmem:[%s700 + $0x14] sm:$0xf]
          %v810 = vld [vmem:[%s700 + $0x18] sm:$0xf]
          %v811 = vld [vmem:[%s700 + $0x1c] sm:$0xf]
          %v812 = vld [vmem:[%s700 + $0x20] sm:$0xf]
          %v813 = vld [vmem:[%s700 + $0x24] sm:$0xf]
          %v814 = vld [vmem:[%s700 + $0x28] sm:$0xf]
          %v815 = vld [vmem:[%s700 + $0x2c] sm:$0xf]
          %v816 = vld [vmem:[%s700 + $0x30] sm:$0xf]
          %v817 = vld [vmem:[%s700 + $0x34] sm:$0xf]
          %v818 = vld [vmem:[%s700 + $0x38] sm:$0xf]
          %v819 = vld [vmem:[%s700 + $0x3c] sm:$0xf]
          %v820 = vld [vmem:[#allocation12] sm:$0xf]
          %v821 = vld [vmem:[#allocation12 + $0x4] sm:$0xf]
          %v822 = vld [vmem:[#allocation12 + $0x8] sm:$0xf]
          %v823 = vld [vmem:[#allocation12 + $0xc] sm:$0xf]
          %v824 = vld [vmem:[#allocation12 + $0x10] sm:$0xf]
          %v825 = vld [vmem:[#allocation12 + $0x14] sm:$0xf]
          %v826 = vld [vmem:[#allocation12 + $0x18] sm:$0xf]
          %v827 = vld [vmem:[#allocation12 + $0x1c] sm:$0xf]
          %v828 = vld [vmem:[#allocation12 + $0x20] sm:$0xf]
          %v829 = vld [vmem:[#allocation12 + $0x24] sm:$0xf]
          %v830 = vld [vmem:[#allocation12 + $0x28] sm:$0xf]
          %v831 = vld [vmem:[#allocation12 + $0x2c] sm:$0xf]
          %v832 = vld [vmem:[#allocation12 + $0x30] sm:$0xf]
          %v833 = vld [vmem:[#allocation12 + $0x34] sm:$0xf]
          %v834 = vld [vmem:[#allocation12 + $0x38] sm:$0xf]
          %v835 = vld [vmem:[#allocation12 + $0x3c] sm:$0xf]
          %v836 = vld [vmem:[%s6] sm:$0x1]
          %v838 = vlaneseq
          %v839 = vshrl.u32 %v838, 7
          %v840 = vsub.s32 0, %v839
          %v841 = vrot.slane %v836, %v840
          %v859 = vunpack.c.l.b16 %v804
          %v860 = vunpack.c.l.b16 %v805
          %v861 = vunpack.c.l.b16 %v806
          %v862 = vunpack.c.l.b16 %v807
          %v863 = vunpack.c.l.b16 %v808
          %v864 = vunpack.c.l.b16 %v809
          %v865 = vunpack.c.l.b16 %v810
          %v866 = vunpack.c.l.b16 %v811
          %v867 = vunpack.c.l.b16 %v812
          %v868 = vunpack.c.l.b16 %v813
          %v869 = vunpack.c.l.b16 %v814
          %v870 = vunpack.c.l.b16 %v815
          %v871 = vunpack.c.l.b16 %v816
          %v872 = vunpack.c.l.b16 %v817
          %v873 = vunpack.c.l.b16 %v818
          %v874 = vunpack.c.l.b16 %v819
          %v875 = vpack.c.b16 %v860, %v859
          %v876 = vpack.c.b16 %v862, %v861
          %v877 = vpack.c.b16 %v864, %v863
          %v878 = vpack.c.b16 %v866, %v865
          %v879 = vpack.c.b16 %v868, %v867
          %v880 = vpack.c.b16 %v870, %v869
          %v881 = vpack.c.b16 %v872, %v871
          %v882 = vpack.c.b16 %v874, %v873
          %v907 = vunpack.c.l.b16 %v820
          %v908 = vunpack.c.l.b16 %v821
          %v909 = vunpack.c.l.b16 %v822
          %v910 = vunpack.c.l.b16 %v823
          %v911 = vunpack.c.l.b16 %v824
          %v912 = vunpack.c.l.b16 %v825
          %v913 = vunpack.c.l.b16 %v826
          %v914 = vunpack.c.l.b16 %v827
          %v915 = vunpack.c.l.b16 %v828
          %v916 = vunpack.c.l.b16 %v829
          %v917 = vunpack.c.l.b16 %v830
          %v918 = vunpack.c.l.b16 %v831
          %v919 = vunpack.c.l.b16 %v832
          %v920 = vunpack.c.l.b16 %v833
          %v921 = vunpack.c.l.b16 %v834
          %v922 = vunpack.c.l.b16 %v835
          %v923 = vpack.c.b16 %v908, %v907
          %v924 = vpack.c.b16 %v910, %v909
          %v925 = vpack.c.b16 %v912, %v911
          %v926 = vpack.c.b16 %v914, %v913
          %v927 = vpack.c.b16 %v916, %v915
          %v928 = vpack.c.b16 %v918, %v917
          %v929 = vpack.c.b16 %v920, %v919
          %v930 = vpack.c.b16 %v922, %v921
          %939 = vmatprep.subr.bf16.mxu0 0
          %940 = vmatpush1.bf16.msra.mxu0 %v923
          %941 = vmatprep.subr.bf16.mxu0 0
          %942 = vmatpush1.bf16.msra.mxu0 %v924
          %943 = vmatprep.subr.bf16.mxu0 0
          %944 = vmatpush1.bf16.msra.mxu0 %v925
          %945 = vmatprep.subr.bf16.mxu0 0
          %946 = vmatpush1.bf16.msra.mxu0 %v926
          %947 = vmatprep.subr.bf16.mxu0 0
          %948 = vmatpush1.bf16.msra.mxu0 %v927
          %949 = vmatprep.subr.bf16.mxu0 0
          %950 = vmatpush1.bf16.msra.mxu0 %v928
          %951 = vmatprep.subr.bf16.mxu0 0
          %952 = vmatpush1.bf16.msra.mxu0 %v929
          %953 = vmatprep.subr.bf16.mxu0 0
          %954 = vmatpush1.bf16.msra.mxu0 %v930
          %955 = vmatprep.subr.bf16.mxu0 0
          %956 = vmatpush1.bf16.msra.mxu0 0
          %957 = vmatprep.subr.bf16.mxu0 0
          %958 = vmatpush1.bf16.msra.mxu0 0
          %959 = vmatprep.subr.bf16.mxu0 0
          %960 = vmatpush1.bf16.msra.mxu0 0
          %961 = vmatprep.subr.bf16.mxu0 0
          %962 = vmatpush1.bf16.msra.mxu0 0
          %963 = vmatprep.subr.bf16.mxu0 0
          %964 = vmatpush1.bf16.msra.mxu0 0
          %965 = vmatprep.subr.bf16.mxu0 0
          %966 = vmatpush1.bf16.msra.mxu0 0
          %967 = vmatprep.subr.bf16.mxu0 0
          %968 = vmatpush1.bf16.msra.mxu0 0
          %969 = vmatprep.subr.bf16.mxu0 0
          %970 = vmatpush1.bf16.msra.mxu0 0
          %971 = vmatprep.mubr.bf16.mxu0 0
          %972 = vmatmul.mubr.bf16.gmra.mrb[0].mxu0 %v875
          %v973 = vpop.f32.mrb[0].mxu0
          %v974 = vadd.f32 %v841, %v973
          %v975 = vpop.f32.mrb[0].mxu0
          %v976 = vpop.f32.mrb[0].mxu0
          %v977 = vadd.f32 %v841, %v976
          %v978 = vpop.f32.mrb[0].mxu0
          %979 = vmatprep.mubr.bf16.mxu0 0
          %980 = vmatmul.mubr.bf16.gmra.mrb[0].mxu0 %v876
          %v981 = vpop.f32.mrb[0].mxu0
          %v982 = vadd.f32 %v841, %v981
          %v983 = vpop.f32.mrb[0].mxu0
          %v984 = vpop.f32.mrb[0].mxu0
          %v985 = vadd.f32 %v841, %v984
          %v986 = vpop.f32.mrb[0].mxu0
          %987 = vmatprep.mubr.bf16.mxu0 0
          %988 = vmatmul.mubr.bf16.gmra.mrb[0].mxu0 %v877
          %v989 = vpop.f32.mrb[0].mxu0
          %v990 = vadd.f32 %v841, %v989
          %v991 = vpop.f32.mrb[0].mxu0
          %v992 = vpop.f32.mrb[0].mxu0
          %v993 = vadd.f32 %v841, %v992
          %v994 = vpop.f32.mrb[0].mxu0
          %995 = vmatprep.mubr.bf16.mxu0 0
          %996 = vmatmul.mubr.bf16.gmra.mrb[0].mxu0 %v878
          %v997 = vpop.f32.mrb[0].mxu0
          %v998 = vadd.f32 %v841, %v997
          %v999 = vpop.f32.mrb[0].mxu0
          %v1000 = vpop.f32.mrb[0].mxu0
          %v1001 = vadd.f32 %v841, %v1000
          %v1002 = vpop.f32.mrb[0].mxu0
          %1003 = vmatprep.mubr.bf16.mxu0 0
          %1004 = vmatmul.mubr.bf16.gmra.mrb[0].mxu0 %v879
          %v1005 = vpop.f32.mrb[0].mxu0
          %v1006 = vadd.f32 %v841, %v1005
          %v1007 = vpop.f32.mrb[0].mxu0
          %v1008 = vpop.f32.mrb[0].mxu0
          %v1009 = vadd.f32 %v841, %v1008
          %v1010 = vpop.f32.mrb[0].mxu0
          %1011 = vmatprep.mubr.bf16.mxu0 0
          %1012 = vmatmul.mubr.bf16.gmra.mrb[0].mxu0 %v880
          %v1013 = vpop.f32.mrb[0].mxu0
          %v1014 = vadd.f32 %v841, %v1013
          %v1015 = vpop.f32.mrb[0].mxu0
          %v1016 = vpop.f32.mrb[0].mxu0
          %v1017 = vadd.f32 %v841, %v1016
          %v1018 = vpop.f32.mrb[0].mxu0
          %1019 = vmatprep.mubr.bf16.mxu0 0
          %1020 = vmatmul.mubr.bf16.gmra.mrb[0].mxu0 %v881
          %v1021 = vpop.f32.mrb[0].mxu0
          %v1022 = vadd.f32 %v841, %v1021
          %v1023 = vpop.f32.mrb[0].mxu0
          %v1024 = vpop.f32.mrb[0].mxu0
          %v1025 = vadd.f32 %v841, %v1024
          %v1026 = vpop.f32.mrb[0].mxu0
          %1027 = vmatprep.mubr.bf16.mxu0 0
          %1028 = vmatmul.mubr.bf16.gmra.mrb[0].mxu0 %v882
          %v1029 = vpop.f32.mrb[0].mxu0
          %v1030 = vadd.f32 %v841, %v1029
          %v1031 = vpop.f32.mrb[0].mxu0
          %v1032 = vpop.f32.mrb[0].mxu0
          %v1033 = vadd.f32 %v841, %v1032
          %v1034 = vpop.f32.mrb[0].mxu0
          %1035 = vdwg.mxu0
          %v1036 = vld [vmem:[#allocation13] sm:$0xf]
          %v1037 = vld [vmem:[#allocation13 + $0x4] sm:$0xf]
          %v1038 = vld [vmem:[#allocation13 + $0x8] sm:$0xf]
          %v1039 = vld [vmem:[#allocation13 + $0xc] sm:$0xf]
          %v1040 = vld [vmem:[#allocation13 + $0x10] sm:$0xf]
          %v1041 = vld [vmem:[#allocation13 + $0x14] sm:$0xf]
          %v1042 = vld [vmem:[#allocation13 + $0x18] sm:$0xf]
          %v1043 = vld [vmem:[#allocation13 + $0x1c] sm:$0xf]
          %v1044 = vld [vmem:[#allocation13 + $0x20] sm:$0xf]
          %v1045 = vld [vmem:[#allocation13 + $0x24] sm:$0xf]
          %v1046 = vld [vmem:[#allocation13 + $0x28] sm:$0xf]
          %v1047 = vld [vmem:[#allocation13 + $0x2c] sm:$0xf]
          %v1048 = vld [vmem:[#allocation13 + $0x30] sm:$0xf]
          %v1049 = vld [vmem:[#allocation13 + $0x34] sm:$0xf]
          %v1050 = vld [vmem:[#allocation13 + $0x38] sm:$0xf]
          %v1051 = vld [vmem:[#allocation13 + $0x3c] sm:$0xf]
          %v1052 = vld [vmem:[%s8] sm:$0x1]
          %v1054 = vlaneseq
          %v1055 = vshrl.u32 %v1054, 7
          %v1056 = vsub.s32 0, %v1055
          %v1057 = vrot.slane %v1052, %v1056
          %v1075 = vunpack.c.l.b16 %v1036
          %v1076 = vunpack.c.l.b16 %v1037
          %v1077 = vunpack.c.l.b16 %v1038
          %v1078 = vunpack.c.l.b16 %v1039
          %v1079 = vunpack.c.l.b16 %v1040
          %v1080 = vunpack.c.l.b16 %v1041
          %v1081 = vunpack.c.l.b16 %v1042
          %v1082 = vunpack.c.l.b16 %v1043
          %v1083 = vunpack.c.l.b16 %v1044
          %v1084 = vunpack.c.l.b16 %v1045
          %v1085 = vunpack.c.l.b16 %v1046
          %v1086 = vunpack.c.l.b16 %v1047
          %v1087 = vunpack.c.l.b16 %v1048
          %v1088 = vunpack.c.l.b16 %v1049
          %v1089 = vunpack.c.l.b16 %v1050
          %v1090 = vunpack.c.l.b16 %v1051
          %v1091 = vpack.c.b16 %v1076, %v1075
          %v1092 = vpack.c.b16 %v1078, %v1077
          %v1093 = vpack.c.b16 %v1080, %v1079
          %v1094 = vpack.c.b16 %v1082, %v1081
          %v1095 = vpack.c.b16 %v1084, %v1083
          %v1096 = vpack.c.b16 %v1086, %v1085
          %v1097 = vpack.c.b16 %v1088, %v1087
          %v1098 = vpack.c.b16 %v1090, %v1089
          %1107 = vmatprep.subr.bf16.mxu0 0
          %1108 = vmatpush1.bf16.msra.mxu0 %v1091
          %1109 = vmatprep.subr.bf16.mxu0 0
          %1110 = vmatpush1.bf16.msra.mxu0 %v1092
          %1111 = vmatprep.subr.bf16.mxu0 0
          %1112 = vmatpush1.bf16.msra.mxu0 %v1093
          %1113 = vmatprep.subr.bf16.mxu0 0
          %1114 = vmatpush1.bf16.msra.mxu0 %v1094
          %1115 = vmatprep.subr.bf16.mxu0 0
          %1116 = vmatpush1.bf16.msra.mxu0 %v1095
          %1117 = vmatprep.subr.bf16.mxu0 0
          %1118 = vmatpush1.bf16.msra.mxu0 %v1096
          %1119 = vmatprep.subr.bf16.mxu0 0
          %1120 = vmatpush1.bf16.msra.mxu0 %v1097
          %1121 = vmatprep.subr.bf16.mxu0 0
          %1122 = vmatpush1.bf16.msra.mxu0 %v1098
          %1123 = vmatprep.subr.bf16.mxu0 0
          %1124 = vmatpush1.bf16.msra.mxu0 0
          %1125 = vmatprep.subr.bf16.mxu0 0
          %1126 = vmatpush1.bf16.msra.mxu0 0
          %1127 = vmatprep.subr.bf16.mxu0 0
          %1128 = vmatpush1.bf16.msra.mxu0 0
          %1129 = vmatprep.subr.bf16.mxu0 0
          %1130 = vmatpush1.bf16.msra.mxu0 0
          %1131 = vmatprep.subr.bf16.mxu0 0
          %1132 = vmatpush1.bf16.msra.mxu0 0
          %1133 = vmatprep.subr.bf16.mxu0 0
          %1134 = vmatpush1.bf16.msra.mxu0 0
          %1135 = vmatprep.subr.bf16.mxu0 0
          %1136 = vmatpush1.bf16.msra.mxu0 0
          %1137 = vmatprep.subr.bf16.mxu0 0
          %1138 = vmatpush1.bf16.msra.mxu0 0
          %1139 = vmatprep.mubr.bf16.mxu0 0
          %1140 = vmatmul.mubr.bf16.gmra.mrb[0].mxu0 %v875
          %v1141 = vpop.f32.mrb[0].mxu0
          %v1142 = vadd.f32 %v1057, %v1141
          %v1143 = vpop.f32.mrb[0].mxu0
          %v1144 = vpop.f32.mrb[0].mxu0
          %v1145 = vadd.f32 %v1057, %v1144
          %v1146 = vpop.f32.mrb[0].mxu0
          %1147 = vmatprep.mubr.bf16.mxu0 0
          %1148 = vmatmul.mubr.bf16.gmra.mrb[0].mxu0 %v876
          %v1149 = vpop.f32.mrb[0].mxu0
          %v1150 = vadd.f32 %v1057, %v1149
          %v1151 = vpop.f32.mrb[0].mxu0
          %v1152 = vpop.f32.mrb[0].mxu0
          %v1153 = vadd.f32 %v1057, %v1152
          %v1154 = vpop.f32.mrb[0].mxu0
          %1155 = vmatprep.mubr.bf16.mxu0 0
          %1156 = vmatmul.mubr.bf16.gmra.mrb[0].mxu0 %v877
          %v1157 = vpop.f32.mrb[0].mxu0
          %v1158 = vadd.f32 %v1057, %v1157
          %v1159 = vpop.f32.mrb[0].mxu0
          %v1160 = vpop.f32.mrb[0].mxu0
          %v1161 = vadd.f32 %v1057, %v1160
          %v1162 = vpop.f32.mrb[0].mxu0
          %1163 = vmatprep.mubr.bf16.mxu0 0
          %1164 = vmatmul.mubr.bf16.gmra.mrb[0].mxu0 %v878
          %v1165 = vpop.f32.mrb[0].mxu0
          %v1166 = vadd.f32 %v1057, %v1165
          %v1167 = vpop.f32.mrb[0].mxu0
          %v1168 = vpop.f32.mrb[0].mxu0
          %v1169 = vadd.f32 %v1057, %v1168
          %v1170 = vpop.f32.mrb[0].mxu0
          %1171 = vmatprep.mubr.bf16.mxu0 0
          %1172 = vmatmul.mubr.bf16.gmra.mrb[0].mxu0 %v879
          %v1173 = vpop.f32.mrb[0].mxu0
          %v1174 = vadd.f32 %v1057, %v1173
          %v1175 = vpop.f32.mrb[0].mxu0
          %v1176 = vpop.f32.mrb[0].mxu0
          %v1177 = vadd.f32 %v1057, %v1176
          %v1178 = vpop.f32.mrb[0].mxu0
          %1179 = vmatprep.mubr.bf16.mxu0 0
          %1180 = vmatmul.mubr.bf16.gmra.mrb[0].mxu0 %v880
          %v1181 = vpop.f32.mrb[0].mxu0
          %v1182 = vadd.f32 %v1057, %v1181
          %v1183 = vpop.f32.mrb[0].mxu0
          %v1184 = vpop.f32.mrb[0].mxu0
          %v1185 = vadd.f32 %v1057, %v1184
          %v1186 = vpop.f32.mrb[0].mxu0
          %1187 = vmatprep.mubr.bf16.mxu0 0
          %1188 = vmatmul.mubr.bf16.gmra.mrb[0].mxu0 %v881
          %v1189 = vpop.f32.mrb[0].mxu0
          %v1190 = vadd.f32 %v1057, %v1189
          %v1191 = vpop.f32.mrb[0].mxu0
          %v1192 = vpop.f32.mrb[0].mxu0
          %v1193 = vadd.f32 %v1057, %v1192
          %v1194 = vpop.f32.mrb[0].mxu0
          %1195 = vmatprep.mubr.bf16.mxu0 0
          %1196 = vmatmul.mubr.bf16.gmra.mrb[0].mxu0 %v882
          %v1197 = vpop.f32.mrb[0].mxu0
          %v1198 = vadd.f32 %v1057, %v1197
          %v1199 = vpop.f32.mrb[0].mxu0
          %v1200 = vpop.f32.mrb[0].mxu0
          %v1201 = vadd.f32 %v1057, %v1200
          %v1202 = vpop.f32.mrb[0].mxu0
          %1203 = vdwg.mxu0
          %v1204 = vpack.c.bf16 %v977, %v974
          %v1205 = vpack.c.bf16 %v985, %v982
          %v1206 = vpack.c.bf16 %v993, %v990
          %v1207 = vpack.c.bf16 %v1001, %v998
          %v1208 = vpack.c.bf16 %v1009, %v1006
          %v1209 = vpack.c.bf16 %v1017, %v1014
          %v1210 = vpack.c.bf16 %v1025, %v1022
          %v1211 = vpack.c.bf16 %v1033, %v1030
          %1212 = vst [vmem:[#allocation2] sm:$0xff] %v1204
          %1213 = vst [vmem:[#allocation2 + $0x8] sm:$0xff] %v1205
          %1214 = vst [vmem:[#allocation2 + $0x10] sm:$0xff] %v1206
          %1215 = vst [vmem:[#allocation2 + $0x18] sm:$0xff] %v1207
          %1216 = vst [vmem:[#allocation2 + $0x20] sm:$0xff] %v1208
          %1217 = vst [vmem:[#allocation2 + $0x28] sm:$0xff] %v1209
          %1218 = vst [vmem:[#allocation2 + $0x30] sm:$0xff] %v1210
          %1219 = vst [vmem:[#allocation2 + $0x38] sm:$0xff] %v1211
          %v1220 = vpack.c.bf16 %v1145, %v1142
          %v1221 = vpack.c.bf16 %v1153, %v1150
          %v1222 = vpack.c.bf16 %v1161, %v1158
          %v1223 = vpack.c.bf16 %v1169, %v1166
          %v1224 = vpack.c.bf16 %v1177, %v1174
          %v1225 = vpack.c.bf16 %v1185, %v1182
          %v1226 = vpack.c.bf16 %v1193, %v1190
          %v1227 = vpack.c.bf16 %v1201, %v1198
          %1228 = vst [vmem:[#allocation3] sm:$0xff] %v1220
          %1229 = vst [vmem:[#allocation3 + $0x8] sm:$0xff] %v1221
          %1230 = vst [vmem:[#allocation3 + $0x10] sm:$0xff] %v1222
          %1231 = vst [vmem:[#allocation3 + $0x18] sm:$0xff] %v1223
          %1232 = vst [vmem:[#allocation3 + $0x20] sm:$0xff] %v1224
          %1233 = vst [vmem:[#allocation3 + $0x28] sm:$0xff] %v1225
          %1234 = vst [vmem:[#allocation3 + $0x30] sm:$0xff] %v1226
          %1235 = vst [vmem:[#allocation3 + $0x38] sm:$0xff] %v1227
        $region136: #{tpu_custom_call.1} parent=95 // pred_fallthru
          _
        %s1236 = smul.u32 %s47, 64
        %s1237 = sshra.s32 %s1236, 3
        %s1238 = sand.u32 %s1236, 7
        %s1239 = smul.addr %s1237, 4
        %s1240 = scalar_lea.vmem %s700, %s1239 [#allocation7]
        %v1241 = vld [vmem:[%s1240] sm:$0xf]
        %v1242 = vld [vmem:[%s1240 + $0x4] sm:$0xf]
        %v1243 = vld [vmem:[%s1240 + $0x8] sm:$0xf]
        %v1244 = vld [vmem:[%s1240 + $0xc] sm:$0xf]
        %v1245 = vld [vmem:[%s1240 + $0x10] sm:$0xf]
        %v1246 = vld [vmem:[%s1240 + $0x14] sm:$0xf]
        %v1247 = vld [vmem:[%s1240 + $0x18] sm:$0xf]
        %v1248 = vld [vmem:[%s1240 + $0x1c] sm:$0xf]
        %v1249 = vld [vmem:[%s709] sm:$0xff]
        %v1250 = vld [vmem:[%s709 + $0x8] sm:$0xff]
        %v1251 = vld [vmem:[%s709 + $0x10] sm:$0xff]
        %v1252 = vld [vmem:[%s709 + $0x18] sm:$0xff]
        %v1253 = vld [vmem:[%s709 + $0x20] sm:$0xff]
        %v1254 = vld [vmem:[%s709 + $0x28] sm:$0xff]
        %v1255 = vld [vmem:[%s709 + $0x30] sm:$0xff]
        %v1256 = vld [vmem:[%s709 + $0x38] sm:$0xff]
        %v1257 = vld [vmem:[#allocation10] sm:$0xf]
        %v1258 = vld [vmem:[#allocation10 + $0x4] sm:$0xf]
        %v1259 = vld [vmem:[#allocation10 + $0x8] sm:$0xf]
        %v1260 = vld [vmem:[#allocation10 + $0xc] sm:$0xf]
        %v1261 = vld [vmem:[#allocation10 + $0x10] sm:$0xf]
        %v1262 = vld [vmem:[#allocation10 + $0x14] sm:$0xf]
        %v1263 = vld [vmem:[#allocation10 + $0x18] sm:$0xf]
        %v1264 = vld [vmem:[#allocation10 + $0x1c] sm:$0xf]
        %v1265 = vld [vmem:[#allocation10 + $0x20] sm:$0xf]
        %v1266 = vld [vmem:[#allocation10 + $0x24] sm:$0xf]
        %v1267 = vld [vmem:[#allocation10 + $0x28] sm:$0xf]
        %v1268 = vld [vmem:[#allocation10 + $0x2c] sm:$0xf]
        %v1269 = vld [vmem:[#allocation10 + $0x30] sm:$0xf]
        %v1270 = vld [vmem:[#allocation10 + $0x34] sm:$0xf]
        %v1271 = vld [vmem:[#allocation10 + $0x38] sm:$0xf]
        %v1272 = vld [vmem:[#allocation10 + $0x3c] sm:$0xf]
        %v1273 = vld [vmem:[%s4] sm:$0x1]
        %v1275 = vlaneseq
        %v1276 = vshrl.u32 %v1275, 7
        %v1277 = vsub.s32 0, %v1276
        %v1278 = vrot.slane %v1273, %v1277
        %v1288 = vunpack.c.l.b16 %v1241
        %v1289 = vunpack.c.l.b16 %v1242
        %v1290 = vunpack.c.l.b16 %v1243
        %v1291 = vunpack.c.l.b16 %v1244
        %v1292 = vunpack.c.l.b16 %v1245
        %v1293 = vunpack.c.l.b16 %v1246
        %v1294 = vunpack.c.l.b16 %v1247
        %v1295 = vunpack.c.l.b16 %v1248
        %v1296 = vpack.c.b16 %v1289, %v1288
        %v1297 = vpack.c.b16 %v1291, %v1290
        %v1298 = vpack.c.b16 %v1293, %v1292
        %v1299 = vpack.c.b16 %v1295, %v1294
        %v1320 = vunpack.c.l.b16 %v1257
        %v1321 = vunpack.c.l.b16 %v1258
        %v1322 = vunpack.c.l.b16 %v1259
        %v1323 = vunpack.c.l.b16 %v1260
        %v1324 = vunpack.c.l.b16 %v1261
        %v1325 = vunpack.c.l.b16 %v1262
        %v1326 = vunpack.c.l.b16 %v1263
        %v1327 = vunpack.c.l.b16 %v1264
        %v1328 = vunpack.c.l.b16 %v1265
        %v1329 = vunpack.c.l.b16 %v1266
        %v1330 = vunpack.c.l.b16 %v1267
        %v1331 = vunpack.c.l.b16 %v1268
        %v1332 = vunpack.c.l.b16 %v1269
        %v1333 = vunpack.c.l.b16 %v1270
        %v1334 = vunpack.c.l.b16 %v1271
        %v1335 = vunpack.c.l.b16 %v1272
        %v1336 = vpack.c.b16 %v1321, %v1320
        %v1337 = vpack.c.b16 %v1323, %v1322
        %v1338 = vpack.c.b16 %v1325, %v1324
        %v1339 = vpack.c.b16 %v1327, %v1326
        %v1340 = vpack.c.b16 %v1329, %v1328
        %v1341 = vpack.c.b16 %v1331, %v1330
        %v1342 = vpack.c.b16 %v1333, %v1332
        %v1343 = vpack.c.b16 %v1335, %v1334
        %1352 = vmatprep.subr.bf16.mxu0 0
        %1353 = vmatpush1.bf16.msra.mxu0 %v1336
        %1354 = vmatprep.subr.bf16.mxu0 0
        %1355 = vmatpush1.bf16.msra.mxu0 %v1337
        %1356 = vmatprep.subr.bf16.mxu0 0
        %1357 = vmatpush1.bf16.msra.mxu0 %v1338
        %1358 = vmatprep.subr.bf16.mxu0 0
        %1359 = vmatpush1.bf16.msra.mxu0 %v1339
        %1360 = vmatprep.subr.bf16.mxu0 0
        %1361 = vmatpush1.bf16.msra.mxu0 %v1340
        %1362 = vmatprep.subr.bf16.mxu0 0
        %1363 = vmatpush1.bf16.msra.mxu0 %v1341
        %1364 = vmatprep.subr.bf16.mxu0 0
        %1365 = vmatpush1.bf16.msra.mxu0 %v1342
        %1366 = vmatprep.subr.bf16.mxu0 0
        %1367 = vmatpush1.bf16.msra.mxu0 %v1343
        %1368 = vmatprep.subr.bf16.mxu0 0
        %1369 = vmatpush1.bf16.msra.mxu0 0
        %1370 = vmatprep.subr.bf16.mxu0 0
        %1371 = vmatpush1.bf16.msra.mxu0 0
        %1372 = vmatprep.subr.bf16.mxu0 0
        %1373 = vmatpush1.bf16.msra.mxu0 0
        %1374 = vmatprep.subr.bf16.mxu0 0
        %1375 = vmatpush1.bf16.msra.mxu0 0
        %1376 = vmatprep.subr.bf16.mxu0 0
        %1377 = vmatpush1.bf16.msra.mxu0 0
        %1378 = vmatprep.subr.bf16.mxu0 0
        %1379 = vmatpush1.bf16.msra.mxu0 0
        %1380 = vmatprep.subr.bf16.mxu0 0
        %1381 = vmatpush1.bf16.msra.mxu0 0
        %1382 = vmatprep.subr.bf16.mxu0 0
        %1383 = vmatpush1.bf16.msra.mxu0 0
        %1384 = vmatprep.mubr.bf16.mxu0 0
        %1385 = vmatmul.mubr.bf16.gmra.mrb[0].mxu0 %v1296
        %v1386 = vpop.f32.mrb[0].mxu0
        %v1387 = vadd.f32 %v1278, %v1386
        %v1388 = vpop.f32.mrb[0].mxu0
        %v1389 = vpop.f32.mrb[0].mxu0
        %v1390 = vadd.f32 %v1278, %v1389
        %v1391 = vpop.f32.mrb[0].mxu0
        %1392 = vmatprep.mubr.bf16.mxu0 0
        %1393 = vmatmul.mubr.bf16.gmra.mrb[0].mxu0 %v1297
        %v1394 = vpop.f32.mrb[0].mxu0
        %v1395 = vadd.f32 %v1278, %v1394
        %v1396 = vpop.f32.mrb[0].mxu0
        %v1397 = vpop.f32.mrb[0].mxu0
        %v1398 = vadd.f32 %v1278, %v1397
        %v1399 = vpop.f32.mrb[0].mxu0
        %1400 = vmatprep.mubr.bf16.mxu0 0
        %1401 = vmatmul.mubr.bf16.gmra.mrb[0].mxu0 %v1298
        %v1402 = vpop.f32.mrb[0].mxu0
        %v1403 = vadd.f32 %v1278, %v1402
        %v1404 = vpop.f32.mrb[0].mxu0
        %v1405 = vpop.f32.mrb[0].mxu0
        %v1406 = vadd.f32 %v1278, %v1405
        %v1407 = vpop.f32.mrb[0].mxu0
        %1408 = vmatprep.mubr.bf16.mxu0 0
        %1409 = vmatmul.mubr.bf16.gmra.mrb[0].mxu0 %v1299
        %v1410 = vpop.f32.mrb[0].mxu0
        %v1411 = vadd.f32 %v1278, %v1410
        %v1412 = vpop.f32.mrb[0].mxu0
        %v1413 = vpop.f32.mrb[0].mxu0
        %v1414 = vadd.f32 %v1278, %v1413
        %v1415 = vpop.f32.mrb[0].mxu0
        %1416 = vdwg.mxu0
        %v1417 = vpack.c.bf16 %v1390, %v1387
        %v1418 = vpack.c.bf16 %v1398, %v1395
        %v1419 = vpack.c.bf16 %v1406, %v1403
        %v1420 = vpack.c.bf16 %v1414, %v1411
        %v1421 = vld [vmem:[#allocation2] sm:$0xff]
        %v1422 = vld [vmem:[#allocation2 + $0x8] sm:$0xff]
        %v1423 = vld [vmem:[#allocation2 + $0x10] sm:$0xff]
        %v1424 = vld [vmem:[#allocation2 + $0x18] sm:$0xff]
        %v1425 = vld [vmem:[#allocation2 + $0x20] sm:$0xff]
        %v1426 = vld [vmem:[#allocation2 + $0x28] sm:$0xff]
        %v1427 = vld [vmem:[#allocation2 + $0x30] sm:$0xff]
        %v1428 = vld [vmem:[#allocation2 + $0x38] sm:$0xff]
        %v1429 = vld [vmem:[#allocation3] sm:$0xff]
        %v1430 = vld [vmem:[#allocation3 + $0x8] sm:$0xff]
        %v1431 = vld [vmem:[#allocation3 + $0x10] sm:$0xff]
        %v1432 = vld [vmem:[#allocation3 + $0x18] sm:$0xff]
        %v1433 = vld [vmem:[#allocation3 + $0x20] sm:$0xff]
        %v1434 = vld [vmem:[#allocation3 + $0x28] sm:$0xff]
        %v1435 = vld [vmem:[#allocation3 + $0x30] sm:$0xff]
        %v1436 = vld [vmem:[#allocation3 + $0x38] sm:$0xff]
        %v1437 = vld [vmem:[%s691] sm:$0x1]
        %v1439 = vlaneseq
        %v1440 = vshrl.u32 %v1439, 7
        %v1441 = vsub.s32 0, %v1440
        %v1442 = vrot.slane %v1437, %v1441
        %vm1444 = vcmask 261120
        %v1446 = vsel %vm1444, %v1417, 0
        %v1449 = vsel %vm1444, %v1418, 0
        %v1452 = vsel %vm1444, %v1419, 0
        %v1455 = vsel %vm1444, %v1420, 0
        %v1458 = vsel %vm1444, %v1421, 0
        %v1461 = vsel %vm1444, %v1422, 0
        %v1464 = vsel %vm1444, %v1423, 0
        %v1467 = vsel %vm1444, %v1424, 0
        %v1470 = vsel %vm1444, %v1425, 0
        %v1473 = vsel %vm1444, %v1426, 0
        %v1476 = vsel %vm1444, %v1427, 0
        %v1479 = vsel %vm1444, %v1428, 0
        %1481 = vmatprep.subr.bf16.mxu0 0
        %1482 = vmatpush1.bf16.xpose.msra.mxu0 %v1458
        %1483 = vmatprep.subr.bf16.mxu0 0
        %1484 = vmatpush1.bf16.xpose.msra.mxu0 %v1461
        %1485 = vmatprep.subr.bf16.mxu0 0
        %1486 = vmatpush1.bf16.xpose.msra.mxu0 %v1464
        %1487 = vmatprep.subr.bf16.mxu0 0
        %1488 = vmatpush1.bf16.xpose.msra.mxu0 %v1467
        %1489 = vmatprep.subr.bf16.mxu0 0
        %1490 = vmatpush1.bf16.xpose.msra.mxu0 %v1470
        %1491 = vmatprep.subr.bf16.mxu0 0
        %1492 = vmatpush1.bf16.xpose.msra.mxu0 %v1473
        %1493 = vmatprep.subr.bf16.mxu0 0
        %1494 = vmatpush1.bf16.xpose.msra.mxu0 %v1476
        %1495 = vmatprep.subr.bf16.mxu0 0
        %1496 = vmatpush1.bf16.xpose.msra.mxu0 %v1479
        %1497 = vmatprep.subr.bf16.mxu0 0
        %1498 = vmatpush1.bf16.xpose.msra.mxu0 0
        %1499 = vmatprep.subr.bf16.mxu0 0
        %1500 = vmatpush1.bf16.xpose.msra.mxu0 0
        %1501 = vmatprep.subr.bf16.mxu0 0
        %1502 = vmatpush1.bf16.xpose.msra.mxu0 0
        %1503 = vmatprep.subr.bf16.mxu0 0
        %1504 = vmatpush1.bf16.xpose.msra.mxu0 0
        %1505 = vmatprep.subr.bf16.mxu0 0
        %1506 = vmatpush1.bf16.xpose.msra.mxu0 0
        %1507 = vmatprep.subr.bf16.mxu0 0
        %1508 = vmatpush1.bf16.xpose.msra.mxu0 0
        %1509 = vmatprep.subr.bf16.mxu0 0
        %1510 = vmatpush1.bf16.xpose.msra.mxu0 0
        %1511 = vmatprep.subr.bf16.mxu0 0
        %1512 = vmatpush1.bf16.xpose.msra.mxu0 0
        %1513 = vmatprep.mubr.bf16.mxu0 0
        %1514 = vmatmul.mubr.bf16.gmra.mrb[0].mxu0 %v1446
        %v1515 = vpop.f32.mrb[0].mxu0
        %v1516 = vadd.f32 %v1442, %v1515
        %v1517 = vpop.f32.mrb[0].mxu0
        %v1518 = vpop.f32.mrb[0].mxu0
        %v1519 = vadd.f32 %v1442, %v1518
        %v1520 = vpop.f32.mrb[0].mxu0
        %1521 = vmatprep.mubr.bf16.mxu0 0
        %1522 = vmatmul.mubr.bf16.gmra.mrb[0].mxu0 %v1449
        %v1523 = vpop.f32.mrb[0].mxu0
        %v1524 = vadd.f32 %v1442, %v1523
        %v1525 = vpop.f32.mrb[0].mxu0
        %v1526 = vpop.f32.mrb[0].mxu0
        %v1527 = vadd.f32 %v1442, %v1526
        %v1528 = vpop.f32.mrb[0].mxu0
        %1529 = vmatprep.mubr.bf16.mxu0 0
        %1530 = vmatmul.mubr.bf16.gmra.mrb[0].mxu0 %v1452
        %v1531 = vpop.f32.mrb[0].mxu0
        %v1532 = vadd.f32 %v1442, %v1531
        %v1533 = vpop.f32.mrb[0].mxu0
        %v1534 = vpop.f32.mrb[0].mxu0
        %v1535 = vadd.f32 %v1442, %v1534
        %v1536 = vpop.f32.mrb[0].mxu0
        %1537 = vmatprep.mubr.bf16.mxu0 0
        %1538 = vmatmul.mubr.bf16.gmra.mrb[0].mxu0 %v1455
        %v1539 = vpop.f32.mrb[0].mxu0
        %v1540 = vadd.f32 %v1442, %v1539
        %v1541 = vpop.f32.mrb[0].mxu0
        %v1542 = vpop.f32.mrb[0].mxu0
        %v1543 = vadd.f32 %v1442, %v1542
        %v1544 = vpop.f32.mrb[0].mxu0
        %1545 = vdwg.mxu0
        %1546 = vmax.xlane.f32.xlu0 %v1516
        %v1547 = vpop.xlane.xlu0 %1546
        %1548 = vmax.xlane.f32.xlu0 %v1519
        %v1549 = vpop.xlane.xlu0 %1548
        %1550 = vmax.xlane.f32.xlu0 %v1524
        %v1551 = vpop.xlane.xlu0 %1550
        %1552 = vmax.xlane.f32.xlu0 %v1527
        %v1553 = vpop.xlane.xlu0 %1552
        %1554 = vmax.xlane.f32.xlu0 %v1532
        %v1555 = vpop.xlane.xlu0 %1554
        %1556 = vmax.xlane.f32.xlu0 %v1535
        %v1557 = vpop.xlane.xlu0 %1556
        %1558 = vmax.xlane.f32.xlu0 %v1540
        %v1559 = vpop.xlane.xlu0 %1558
        %1560 = vmax.xlane.f32.xlu0 %v1543
        %v1561 = vpop.xlane.xlu0 %1560
        %v1562 = vsub.f32 %v1516, %v1547
        %v1563 = vsub.f32 %v1519, %v1549
        %v1564 = vsub.f32 %v1524, %v1551
        %v1565 = vsub.f32 %v1527, %v1553
        %v1566 = vsub.f32 %v1532, %v1555
        %v1567 = vsub.f32 %v1535, %v1557
        %v1568 = vsub.f32 %v1540, %v1559
        %v1569 = vsub.f32 %v1543, %v1561
        %v1570 = vmul.f32 %v1562, 1.442695
        %v1571 = vpow.pop %v1570
        %v1572 = vmul.f32 %v1563, 1.442695
        %v1573 = vpow.pop %v1572
        %v1574 = vmul.f32 %v1564, 1.442695
        %v1575 = vpow.pop %v1574
        %v1576 = vmul.f32 %v1565, 1.442695
        %v1577 = vpow.pop %v1576
        %v1578 = vmul.f32 %v1566, 1.442695
        %v1579 = vpow.pop %v1578
        %v1580 = vmul.f32 %v1567, 1.442695
        %v1581 = vpow.pop %v1580
        %v1582 = vmul.f32 %v1568, 1.442695
        %v1583 = vpow.pop %v1582
        %v1584 = vmul.f32 %v1569, 1.442695
        %v1585 = vpow.pop %v1584
        %1586 = vadd.xlane.f32.xlu0 %v1571
        %v1587 = vpop.xlane.xlu0 %1586
        %1588 = vadd.xlane.f32.xlu0 %v1573
        %v1589 = vpop.xlane.xlu0 %1588
        %1590 = vadd.xlane.f32.xlu0 %v1575
        %v1591 = vpop.xlane.xlu0 %1590
        %1592 = vadd.xlane.f32.xlu0 %v1577
        %v1593 = vpop.xlane.xlu0 %1592
        %1594 = vadd.xlane.f32.xlu0 %v1579
        %v1595 = vpop.xlane.xlu0 %1594
        %1596 = vadd.xlane.f32.xlu0 %v1581
        %v1597 = vpop.xlane.xlu0 %1596
        %1598 = vadd.xlane.f32.xlu0 %v1583
        %v1599 = vpop.xlane.xlu0 %1598
        %1600 = vadd.xlane.f32.xlu0 %v1585
        %v1601 = vpop.xlane.xlu0 %1600
        %v1602 = vrcp.pop %v1587
        %v1603 = vrcp.pop %v1589
        %v1604 = vrcp.pop %v1591
        %v1605 = vrcp.pop %v1593
        %v1606 = vrcp.pop %v1595
        %v1607 = vrcp.pop %v1597
        %v1608 = vrcp.pop %v1599
        %v1609 = vrcp.pop %v1601
        %v1610 = vmul.f32 %v1571, %v1602
        %v1611 = vmul.f32 %v1573, %v1603
        %v1612 = vmul.f32 %v1575, %v1604
        %v1613 = vmul.f32 %v1577, %v1605
        %v1614 = vmul.f32 %v1579, %v1606
        %v1615 = vmul.f32 %v1581, %v1607
        %v1616 = vmul.f32 %v1583, %v1608
        %v1617 = vmul.f32 %v1585, %v1609
        %v1618 = vpack.c.bf16 %v1611, %v1610
        %v1619 = vpack.c.bf16 %v1613, %v1612
        %v1620 = vpack.c.bf16 %v1615, %v1614
        %v1621 = vpack.c.bf16 %v1617, %v1616
        %1622 = vmatprep.subr.bf16.mxu0 0
        %1623 = vmatpush1.bf16.msra.mxu0 %v1429
        %1624 = vmatprep.subr.bf16.mxu0 0
        %1625 = vmatpush1.bf16.msra.mxu0 %v1430
        %1626 = vmatprep.subr.bf16.mxu0 0
        %1627 = vmatpush1.bf16.msra.mxu0 %v1431
        %1628 = vmatprep.subr.bf16.mxu0 0
        %1629 = vmatpush1.bf16.msra.mxu0 %v1432
        %1630 = vmatprep.subr.bf16.mxu0 0
        %1631 = vmatpush1.bf16.msra.mxu0 %v1433
        %1632 = vmatprep.subr.bf16.mxu0 0
        %1633 = vmatpush1.bf16.msra.mxu0 %v1434
        %1634 = vmatprep.subr.bf16.mxu0 0
        %1635 = vmatpush1.bf16.msra.mxu0 %v1435
        %1636 = vmatprep.subr.bf16.mxu0 0
        %1637 = vmatpush1.bf16.msra.mxu0 %v1436
        %1638 = vmatprep.subr.bf16.mxu0 0
        %1639 = vmatpush1.bf16.msra.mxu0 0
        %1640 = vmatprep.subr.bf16.mxu0 0
        %1641 = vmatpush1.bf16.msra.mxu0 0
        %1642 = vmatprep.subr.bf16.mxu0 0
        %1643 = vmatpush1.bf16.msra.mxu0 0
        %1644 = vmatprep.subr.bf16.mxu0 0
        %1645 = vmatpush1.bf16.msra.mxu0 0
        %1646 = vmatprep.subr.bf16.mxu0 0
        %1647 = vmatpush1.bf16.msra.mxu0 0
        %1648 = vmatprep.subr.bf16.mxu0 0
        %1649 = vmatpush1.bf16.msra.mxu0 0
        %1650 = vmatprep.subr.bf16.mxu0 0
        %1651 = vmatpush1.bf16.msra.mxu0 0
        %1652 = vmatprep.subr.bf16.mxu0 0
        %1653 = vmatpush1.bf16.msra.mxu0 0
        %1654 = vmatprep.mubr.bf16.mxu0 0
        %1655 = vmatmul.mubr.bf16.gmra.mrb[0].mxu0 %v1618
        %v1656 = vpop.f32.mrb[0].mxu0
        %v1657 = vadd.f32 0.0, %v1656
        %v1658 = vpop.f32.mrb[0].mxu0
        %v1659 = vpop.f32.mrb[0].mxu0
        %v1660 = vadd.f32 0.0, %v1659
        %v1661 = vpop.f32.mrb[0].mxu0
        %1662 = vmatprep.mubr.bf16.mxu0 0
        %1663 = vmatmul.mubr.bf16.gmra.mrb[0].mxu0 %v1619
        %v1664 = vpop.f32.mrb[0].mxu0
        %v1665 = vadd.f32 0.0, %v1664
        %v1666 = vpop.f32.mrb[0].mxu0
        %v1667 = vpop.f32.mrb[0].mxu0
        %v1668 = vadd.f32 0.0, %v1667
        %v1669 = vpop.f32.mrb[0].mxu0
        %1670 = vmatprep.mubr.bf16.mxu0 0
        %1671 = vmatmul.mubr.bf16.gmra.mrb[0].mxu0 %v1620
        %v1672 = vpop.f32.mrb[0].mxu0
        %v1673 = vadd.f32 0.0, %v1672
        %v1674 = vpop.f32.mrb[0].mxu0
        %v1675 = vpop.f32.mrb[0].mxu0
        %v1676 = vadd.f32 0.0, %v1675
        %v1677 = vpop.f32.mrb[0].mxu0
        %1678 = vmatprep.mubr.bf16.mxu0 0
        %1679 = vmatmul.mubr.bf16.gmra.mrb[0].mxu0 %v1621
        %v1680 = vpop.f32.mrb[0].mxu0
        %v1681 = vadd.f32 0.0, %v1680
        %v1682 = vpop.f32.mrb[0].mxu0
        %v1683 = vpop.f32.mrb[0].mxu0
        %v1684 = vadd.f32 0.0, %v1683
        %v1685 = vpop.f32.mrb[0].mxu0
        %1686 = vdwg.mxu0
        %1691 = vrot.lane.b32.xlu0 %v1417, 96
        %v1692 = vpop.permute.xlu0 %1691
        %1693 = vrot.lane.b32.xlu0 %v1418, 96
        %v1694 = vpop.permute.xlu0 %1693
        %1695 = vrot.lane.b32.xlu0 %v1419, 96
        %v1696 = vpop.permute.xlu0 %1695
        %1697 = vrot.lane.b32.xlu0 %v1420, 96
        %v1698 = vpop.permute.xlu0 %1697
        %1707 = vrot.lane.b32.xlu0 %v1421, 96
        %v1708 = vpop.permute.xlu0 %1707
        %1709 = vrot.lane.b32.xlu0 %v1422, 96
        %v1710 = vpop.permute.xlu0 %1709
        %1711 = vrot.lane.b32.xlu0 %v1423, 96
        %v1712 = vpop.permute.xlu0 %1711
        %1713 = vrot.lane.b32.xlu0 %v1424, 96
        %v1714 = vpop.permute.xlu0 %1713
        %1715 = vrot.lane.b32.xlu0 %v1425, 96
        %v1716 = vpop.permute.xlu0 %1715
        %1717 = vrot.lane.b32.xlu0 %v1426, 96
        %v1718 = vpop.permute.xlu0 %1717
        %1719 = vrot.lane.b32.xlu0 %v1427, 96
        %v1720 = vpop.permute.xlu0 %1719
        %1721 = vrot.lane.b32.xlu0 %v1428, 96
        %v1722 = vpop.permute.xlu0 %1721
        %v1724 = vsel %vm1444, %v1692, 0
        %v1727 = vsel %vm1444, %v1694, 0
        %v1730 = vsel %vm1444, %v1696, 0
        %v1733 = vsel %vm1444, %v1698, 0
        %v1736 = vsel %vm1444, %v1708, 0
        %v1739 = vsel %vm1444, %v1710, 0
        %v1742 = vsel %vm1444, %v1712, 0
        %v1745 = vsel %vm1444, %v1714, 0
        %v1748 = vsel %vm1444, %v1716, 0
        %v1751 = vsel %vm1444, %v1718, 0
        %v1754 = vsel %vm1444, %v1720, 0
        %v1757 = vsel %vm1444, %v1722, 0
        %1759 = vmatprep.subr.bf16.mxu0 0
        %1760 = vmatpush1.bf16.xpose.msra.mxu0 %v1736
        %1761 = vmatprep.subr.bf16.mxu0 0
        %1762 = vmatpush1.bf16.xpose.msra.mxu0 %v1739
        %1763 = vmatprep.subr.bf16.mxu0 0
        %1764 = vmatpush1.bf16.xpose.msra.mxu0 %v1742
        %1765 = vmatprep.subr.bf16.mxu0 0
        %1766 = vmatpush1.bf16.xpose.msra.mxu0 %v1745
        %1767 = vmatprep.subr.bf16.mxu0 0
        %1768 = vmatpush1.bf16.xpose.msra.mxu0 %v1748
        %1769 = vmatprep.subr.bf16.mxu0 0
        %1770 = vmatpush1.bf16.xpose.msra.mxu0 %v1751
        %1771 = vmatprep.subr.bf16.mxu0 0
        %1772 = vmatpush1.bf16.xpose.msra.mxu0 %v1754
        %1773 = vmatprep.subr.bf16.mxu0 0
        %1774 = vmatpush1.bf16.xpose.msra.mxu0 %v1757
        %1775 = vmatprep.subr.bf16.mxu0 0
        %1776 = vmatpush1.bf16.xpose.msra.mxu0 0
        %1777 = vmatprep.subr.bf16.mxu0 0
        %1778 = vmatpush1.bf16.xpose.msra.mxu0 0
        %1779 = vmatprep.subr.bf16.mxu0 0
        %1780 = vmatpush1.bf16.xpose.msra.mxu0 0
        %1781 = vmatprep.subr.bf16.mxu0 0
        %1782 = vmatpush1.bf16.xpose.msra.mxu0 0
        %1783 = vmatprep.subr.bf16.mxu0 0
        %1784 = vmatpush1.bf16.xpose.msra.mxu0 0
        %1785 = vmatprep.subr.bf16.mxu0 0
        %1786 = vmatpush1.bf16.xpose.msra.mxu0 0
        %1787 = vmatprep.subr.bf16.mxu0 0
        %1788 = vmatpush1.bf16.xpose.msra.mxu0 0
        %1789 = vmatprep.subr.bf16.mxu0 0
        %1790 = vmatpush1.bf16.xpose.msra.mxu0 0
        %1791 = vmatprep.mubr.bf16.mxu0 0
        %1792 = vmatmul.mubr.bf16.gmra.mrb[0].mxu0 %v1724
        %v1793 = vpop.f32.mrb[0].mxu0
        %v1794 = vadd.f32 %v1442, %v1793
        %v1795 = vpop.f32.mrb[0].mxu0
        %v1796 = vpop.f32.mrb[0].mxu0
        %v1797 = vadd.f32 %v1442, %v1796
        %v1798 = vpop.f32.mrb[0].mxu0
        %1799 = vmatprep.mubr.bf16.mxu0 0
        %1800 = vmatmul.mubr.bf16.gmra.mrb[0].mxu0 %v1727
        %v1801 = vpop.f32.mrb[0].mxu0
        %v1802 = vadd.f32 %v1442, %v1801
        %v1803 = vpop.f32.mrb[0].mxu0
        %v1804 = vpop.f32.mrb[0].mxu0
        %v1805 = vadd.f32 %v1442, %v1804
        %v1806 = vpop.f32.mrb[0].mxu0
        %1807 = vmatprep.mubr.bf16.mxu0 0
        %1808 = vmatmul.mubr.bf16.gmra.mrb[0].mxu0 %v1730
        %v1809 = vpop.f32.mrb[0].mxu0
        %v1810 = vadd.f32 %v1442, %v1809
        %v1811 = vpop.f32.mrb[0].mxu0
        %v1812 = vpop.f32.mrb[0].mxu0
        %v1813 = vadd.f32 %v1442, %v1812
        %v1814 = vpop.f32.mrb[0].mxu0
        %1815 = vmatprep.mubr.bf16.mxu0 0
        %1816 = vmatmul.mubr.bf16.gmra.mrb[0].mxu0 %v1733
        %v1817 = vpop.f32.mrb[0].mxu0
        %v1818 = vadd.f32 %v1442, %v1817
        %v1819 = vpop.f32.mrb[0].mxu0
        %v1820 = vpop.f32.mrb[0].mxu0
        %v1821 = vadd.f32 %v1442, %v1820
        %v1822 = vpop.f32.mrb[0].mxu0
        %1823 = vdwg.mxu0
        %1824 = vmax.xlane.f32.xlu0 %v1794
        %v1825 = vpop.xlane.xlu0 %1824
        %1826 = vmax.xlane.f32.xlu0 %v1797
        %v1827 = vpop.xlane.xlu0 %1826
        %1828 = vmax.xlane.f32.xlu0 %v1802
        %v1829 = vpop.xlane.xlu0 %1828
        %1830 = vmax.xlane.f32.xlu0 %v1805
        %v1831 = vpop.xlane.xlu0 %1830
        %1832 = vmax.xlane.f32.xlu0 %v1810
        %v1833 = vpop.xlane.xlu0 %1832
        %1834 = vmax.xlane.f32.xlu0 %v1813
        %v1835 = vpop.xlane.xlu0 %1834
        %1836 = vmax.xlane.f32.xlu0 %v1818
        %v1837 = vpop.xlane.xlu0 %1836
        %1838 = vmax.xlane.f32.xlu0 %v1821
        %v1839 = vpop.xlane.xlu0 %1838
        %v1840 = vsub.f32 %v1794, %v1825
        %v1841 = vsub.f32 %v1797, %v1827
        %v1842 = vsub.f32 %v1802, %v1829
        %v1843 = vsub.f32 %v1805, %v1831
        %v1844 = vsub.f32 %v1810, %v1833
        %v1845 = vsub.f32 %v1813, %v1835
        %v1846 = vsub.f32 %v1818, %v1837
        %v1847 = vsub.f32 %v1821, %v1839
        %v1848 = vmul.f32 %v1840, 1.442695
        %v1849 = vpow.pop %v1848
        %v1850 = vmul.f32 %v1841, 1.442695
        %v1851 = vpow.pop %v1850
        %v1852 = vmul.f32 %v1842, 1.442695
        %v1853 = vpow.pop %v1852
        %v1854 = vmul.f32 %v1843, 1.442695
        %v1855 = vpow.pop %v1854
        %v1856 = vmul.f32 %v1844, 1.442695
        %v1857 = vpow.pop %v1856
        %v1858 = vmul.f32 %v1845, 1.442695
        %v1859 = vpow.pop %v1858
        %v1860 = vmul.f32 %v1846, 1.442695
        %v1861 = vpow.pop %v1860
        %v1862 = vmul.f32 %v1847, 1.442695
        %v1863 = vpow.pop %v1862
        %1864 = vadd.xlane.f32.xlu0 %v1849
        %v1865 = vpop.xlane.xlu0 %1864
        %1866 = vadd.xlane.f32.xlu0 %v1851
        %v1867 = vpop.xlane.xlu0 %1866
        %1868 = vadd.xlane.f32.xlu0 %v1853
        %v1869 = vpop.xlane.xlu0 %1868
        %1870 = vadd.xlane.f32.xlu0 %v1855
        %v1871 = vpop.xlane.xlu0 %1870
        %1872 = vadd.xlane.f32.xlu0 %v1857
        %v1873 = vpop.xlane.xlu0 %1872
        %1874 = vadd.xlane.f32.xlu0 %v1859
        %v1875 = vpop.xlane.xlu0 %1874
        %1876 = vadd.xlane.f32.xlu0 %v1861
        %v1877 = vpop.xlane.xlu0 %1876
        %1878 = vadd.xlane.f32.xlu0 %v1863
        %v1879 = vpop.xlane.xlu0 %1878
        %v1880 = vrcp.pop %v1865
        %v1881 = vrcp.pop %v1867
        %v1882 = vrcp.pop %v1869
        %v1883 = vrcp.pop %v1871
        %v1884 = vrcp.pop %v1873
        %v1885 = vrcp.pop %v1875
        %v1886 = vrcp.pop %v1877
        %v1887 = vrcp.pop %v1879
        %v1888 = vmul.f32 %v1849, %v1880
        %v1889 = vmul.f32 %v1851, %v1881
        %v1890 = vmul.f32 %v1853, %v1882
        %v1891 = vmul.f32 %v1855, %v1883
        %v1892 = vmul.f32 %v1857, %v1884
        %v1893 = vmul.f32 %v1859, %v1885
        %v1894 = vmul.f32 %v1861, %v1886
        %v1895 = vmul.f32 %v1863, %v1887
        %v1896 = vpack.c.bf16 %v1889, %v1888
        %v1897 = vpack.c.bf16 %v1891, %v1890
        %v1898 = vpack.c.bf16 %v1893, %v1892
        %v1899 = vpack.c.bf16 %v1895, %v1894
        %1908 = vrot.lane.b32.xlu0 %v1429, 96
        %v1909 = vpop.permute.xlu0 %1908
        %1910 = vrot.lane.b32.xlu0 %v1430, 96
        %v1911 = vpop.permute.xlu0 %1910
        %1912 = vrot.lane.b32.xlu0 %v1431, 96
        %v1913 = vpop.permute.xlu0 %1912
        %1914 = vrot.lane.b32.xlu0 %v1432, 96
        %v1915 = vpop.permute.xlu0 %1914
        %1916 = vrot.lane.b32.xlu0 %v1433, 96
        %v1917 = vpop.permute.xlu0 %1916
        %1918 = vrot.lane.b32.xlu0 %v1434, 96
        %v1919 = vpop.permute.xlu0 %1918
        %1920 = vrot.lane.b32.xlu0 %v1435, 96
        %v1921 = vpop.permute.xlu0 %1920
        %1922 = vrot.lane.b32.xlu0 %v1436, 96
        %v1923 = vpop.permute.xlu0 %1922
        %1932 = vmatprep.subr.bf16.mxu0 0
        %1933 = vmatpush1.bf16.msra.mxu0 %v1909
        %1934 = vmatprep.subr.bf16.mxu0 0
        %1935 = vmatpush1.bf16.msra.mxu0 %v1911
        %1936 = vmatprep.subr.bf16.mxu0 0
        %1937 = vmatpush1.bf16.msra.mxu0 %v1913
        %1938 = vmatprep.subr.bf16.mxu0 0
        %1939 = vmatpush1.bf16.msra.mxu0 %v1915
        %1940 = vmatprep.subr.bf16.mxu0 0
        %1941 = vmatpush1.bf16.msra.mxu0 %v1917
        %1942 = vmatprep.subr.bf16.mxu0 0
        %1943 = vmatpush1.bf16.msra.mxu0 %v1919
        %1944 = vmatprep.subr.bf16.mxu0 0
        %1945 = vmatpush1.bf16.msra.mxu0 %v1921
        %1946 = vmatprep.subr.bf16.mxu0 0
        %1947 = vmatpush1.bf16.msra.mxu0 %v1923
        %1948 = vmatprep.subr.bf16.mxu0 0
        %1949 = vmatpush1.bf16.msra.mxu0 0
        %1950 = vmatprep.subr.bf16.mxu0 0
        %1951 = vmatpush1.bf16.msra.mxu0 0
        %1952 = vmatprep.subr.bf16.mxu0 0
        %1953 = vmatpush1.bf16.msra.mxu0 0
        %1954 = vmatprep.subr.bf16.mxu0 0
        %1955 = vmatpush1.bf16.msra.mxu0 0
        %1956 = vmatprep.subr.bf16.mxu0 0
        %1957 = vmatpush1.bf16.msra.mxu0 0
        %1958 = vmatprep.subr.bf16.mxu0 0
        %1959 = vmatpush1.bf16.msra.mxu0 0
        %1960 = vmatprep.subr.bf16.mxu0 0
        %1961 = vmatpush1.bf16.msra.mxu0 0
        %1962 = vmatprep.subr.bf16.mxu0 0
        %1963 = vmatpush1.bf16.msra.mxu0 0
        %1964 = vmatprep.mubr.bf16.mxu0 0
        %1965 = vmatmul.mubr.bf16.gmra.mrb[0].mxu0 %v1896
        %v1966 = vpop.f32.mrb[0].mxu0
        %v1967 = vadd.f32 0.0, %v1966
        %v1968 = vpop.f32.mrb[0].mxu0
        %v1969 = vpop.f32.mrb[0].mxu0
        %v1970 = vadd.f32 0.0, %v1969
        %v1971 = vpop.f32.mrb[0].mxu0
        %1972 = vmatprep.mubr.bf16.mxu0 0
        %1973 = vmatmul.mubr.bf16.gmra.mrb[0].mxu0 %v1897
        %v1974 = vpop.f32.mrb[0].mxu0
        %v1975 = vadd.f32 0.0, %v1974
        %v1976 = vpop.f32.mrb[0].mxu0
        %v1977 = vpop.f32.mrb[0].mxu0
        %v1978 = vadd.f32 0.0, %v1977
        %v1979 = vpop.f32.mrb[0].mxu0
        %1980 = vmatprep.mubr.bf16.mxu0 0
        %1981 = vmatmul.mubr.bf16.gmra.mrb[0].mxu0 %v1898
        %v1982 = vpop.f32.mrb[0].mxu0
        %v1983 = vadd.f32 0.0, %v1982
        %v1984 = vpop.f32.mrb[0].mxu0
        %v1985 = vpop.f32.mrb[0].mxu0
        %v1986 = vadd.f32 0.0, %v1985
        %v1987 = vpop.f32.mrb[0].mxu0
        %1988 = vmatprep.mubr.bf16.mxu0 0
        %1989 = vmatmul.mubr.bf16.gmra.mrb[0].mxu0 %v1899
        %v1990 = vpop.f32.mrb[0].mxu0
        %v1991 = vadd.f32 0.0, %v1990
        %v1992 = vpop.f32.mrb[0].mxu0
        %v1993 = vpop.f32.mrb[0].mxu0
        %v1994 = vadd.f32 0.0, %v1993
        %v1995 = vpop.f32.mrb[0].mxu0
        %1996 = vdwg.mxu0
        %1997 = vrot.lane.b32.xlu0 %v1417, 64
        %v1998 = vpop.permute.xlu0 %1997
        %1999 = vrot.lane.b32.xlu0 %v1418, 64
        %v2000 = vpop.permute.xlu0 %1999
        %2001 = vrot.lane.b32.xlu0 %v1419, 64
        %v2002 = vpop.permute.xlu0 %2001
        %2003 = vrot.lane.b32.xlu0 %v1420, 64
        %v2004 = vpop.permute.xlu0 %2003
        %2005 = vrot.lane.b32.xlu0 %v1421, 64
        %v2006 = vpop.permute.xlu0 %2005
        %2007 = vrot.lane.b32.xlu0 %v1422, 64
        %v2008 = vpop.permute.xlu0 %2007
        %2009 = vrot.lane.b32.xlu0 %v1423, 64
        %v2010 = vpop.permute.xlu0 %2009
        %2011 = vrot.lane.b32.xlu0 %v1424, 64
        %v2012 = vpop.permute.xlu0 %2011
        %2013 = vrot.lane.b32.xlu0 %v1425, 64
        %v2014 = vpop.permute.xlu0 %2013
        %2015 = vrot.lane.b32.xlu0 %v1426, 64
        %v2016 = vpop.permute.xlu0 %2015
        %2017 = vrot.lane.b32.xlu0 %v1427, 64
        %v2018 = vpop.permute.xlu0 %2017
        %2019 = vrot.lane.b32.xlu0 %v1428, 64
        %v2020 = vpop.permute.xlu0 %2019
        %v2022 = vsel %vm1444, %v1998, 0
        %v2025 = vsel %vm1444, %v2000, 0
        %v2028 = vsel %vm1444, %v2002, 0
        %v2031 = vsel %vm1444, %v2004, 0
        %v2034 = vsel %vm1444, %v2006, 0
        %v2037 = vsel %vm1444, %v2008, 0
        %v2040 = vsel %vm1444, %v2010, 0
        %v2043 = vsel %vm1444, %v2012, 0
        %v2046 = vsel %vm1444, %v2014, 0
        %v2049 = vsel %vm1444, %v2016, 0
        %v2052 = vsel %vm1444, %v2018, 0
        %v2055 = vsel %vm1444, %v2020, 0
        %2057 = vmatprep.subr.bf16.mxu0 0
        %2058 = vmatpush1.bf16.xpose.msra.mxu0 %v2034
        %2059 = vmatprep.subr.bf16.mxu0 0
        %2060 = vmatpush1.bf16.xpose.msra.mxu0 %v2037
        %2061 = vmatprep.subr.bf16.mxu0 0
        %2062 = vmatpush1.bf16.xpose.msra.mxu0 %v2040
        %2063 = vmatprep.subr.bf16.mxu0 0
        %2064 = vmatpush1.bf16.xpose.msra.mxu0 %v2043
        %2065 = vmatprep.subr.bf16.mxu0 0
        %2066 = vmatpush1.bf16.xpose.msra.mxu0 %v2046
        %2067 = vmatprep.subr.bf16.mxu0 0
        %2068 = vmatpush1.bf16.xpose.msra.mxu0 %v2049
        %2069 = vmatprep.subr.bf16.mxu0 0
        %2070 = vmatpush1.bf16.xpose.msra.mxu0 %v2052
        %2071 = vmatprep.subr.bf16.mxu0 0
        %2072 = vmatpush1.bf16.xpose.msra.mxu0 %v2055
        %2073 = vmatprep.subr.bf16.mxu0 0
        %2074 = vmatpush1.bf16.xpose.msra.mxu0 0
        %2075 = vmatprep.subr.bf16.mxu0 0
        %2076 = vmatpush1.bf16.xpose.msra.mxu0 0
        %2077 = vmatprep.subr.bf16.mxu0 0
        %2078 = vmatpush1.bf16.xpose.msra.mxu0 0
        %2079 = vmatprep.subr.bf16.mxu0 0
        %2080 = vmatpush1.bf16.xpose.msra.mxu0 0
        %2081 = vmatprep.subr.bf16.mxu0 0
        %2082 = vmatpush1.bf16.xpose.msra.mxu0 0
        %2083 = vmatprep.subr.bf16.mxu0 0
        %2084 = vmatpush1.bf16.xpose.msra.mxu0 0
        %2085 = vmatprep.subr.bf16.mxu0 0
        %2086 = vmatpush1.bf16.xpose.msra.mxu0 0
        %2087 = vmatprep.subr.bf16.mxu0 0
        %2088 = vmatpush1.bf16.xpose.msra.mxu0 0
        %2089 = vmatprep.mubr.bf16.mxu0 0
        %2090 = vmatmul.mubr.bf16.gmra.mrb[0].mxu0 %v2022
        %v2091 = vpop.f32.mrb[0].mxu0
        %v2092 = vadd.f32 %v1442, %v2091
        %v2093 = vpop.f32.mrb[0].mxu0
        %v2094 = vpop.f32.mrb[0].mxu0
        %v2095 = vadd.f32 %v1442, %v2094
        %v2096 = vpop.f32.mrb[0].mxu0
        %2097 = vmatprep.mubr.bf16.mxu0 0
        %2098 = vmatmul.mubr.bf16.gmra.mrb[0].mxu0 %v2025
        %v2099 = vpop.f32.mrb[0].mxu0
        %v2100 = vadd.f32 %v1442, %v2099
        %v2101 = vpop.f32.mrb[0].mxu0
        %v2102 = vpop.f32.mrb[0].mxu0
        %v2103 = vadd.f32 %v1442, %v2102
        %v2104 = vpop.f32.mrb[0].mxu0
        %2105 = vmatprep.mubr.bf16.mxu0 0
        %2106 = vmatmul.mubr.bf16.gmra.mrb[0].mxu0 %v2028
        %v2107 = vpop.f32.mrb[0].mxu0
        %v2108 = vadd.f32 %v1442, %v2107
        %v2109 = vpop.f32.mrb[0].mxu0
        %v2110 = vpop.f32.mrb[0].mxu0
        %v2111 = vadd.f32 %v1442, %v2110
        %v2112 = vpop.f32.mrb[0].mxu0
        %2113 = vmatprep.mubr.bf16.mxu0 0
        %2114 = vmatmul.mubr.bf16.gmra.mrb[0].mxu0 %v2031
        %v2115 = vpop.f32.mrb[0].mxu0
        %v2116 = vadd.f32 %v1442, %v2115
        %v2117 = vpop.f32.mrb[0].mxu0
        %v2118 = vpop.f32.mrb[0].mxu0
        %v2119 = vadd.f32 %v1442, %v2118
        %v2120 = vpop.f32.mrb[0].mxu0
        %2121 = vdwg.mxu0
        %2122 = vmax.xlane.f32.xlu0 %v2092
        %v2123 = vpop.xlane.xlu0 %2122
        %2124 = vmax.xlane.f32.xlu0 %v2095
        %v2125 = vpop.xlane.xlu0 %2124
        %2126 = vmax.xlane.f32.xlu0 %v2100
        %v2127 = vpop.xlane.xlu0 %2126
        %2128 = vmax.xlane.f32.xlu0 %v2103
        %v2129 = vpop.xlane.xlu0 %2128
        %2130 = vmax.xlane.f32.xlu0 %v2108
        %v2131 = vpop.xlane.xlu0 %2130
        %2132 = vmax.xlane.f32.xlu0 %v2111
        %v2133 = vpop.xlane.xlu0 %2132
        %2134 = vmax.xlane.f32.xlu0 %v2116
        %v2135 = vpop.xlane.xlu0 %2134
        %2136 = vmax.xlane.f32.xlu0 %v2119
        %v2137 = vpop.xlane.xlu0 %2136
        %v2138 = vsub.f32 %v2092, %v2123
        %v2139 = vsub.f32 %v2095, %v2125
        %v2140 = vsub.f32 %v2100, %v2127
        %v2141 = vsub.f32 %v2103, %v2129
        %v2142 = vsub.f32 %v2108, %v2131
        %v2143 = vsub.f32 %v2111, %v2133
        %v2144 = vsub.f32 %v2116, %v2135
        %v2145 = vsub.f32 %v2119, %v2137
        %v2146 = vmul.f32 %v2138, 1.442695
        %v2147 = vpow.pop %v2146
        %v2148 = vmul.f32 %v2139, 1.442695
        %v2149 = vpow.pop %v2148
        %v2150 = vmul.f32 %v2140, 1.442695
        %v2151 = vpow.pop %v2150
        %v2152 = vmul.f32 %v2141, 1.442695
        %v2153 = vpow.pop %v2152
        %v2154 = vmul.f32 %v2142, 1.442695
        %v2155 = vpow.pop %v2154
        %v2156 = vmul.f32 %v2143, 1.442695
        %v2157 = vpow.pop %v2156
        %v2158 = vmul.f32 %v2144, 1.442695
        %v2159 = vpow.pop %v2158
        %v2160 = vmul.f32 %v2145, 1.442695
        %v2161 = vpow.pop %v2160
        %2162 = vadd.xlane.f32.xlu0 %v2147
        %v2163 = vpop.xlane.xlu0 %2162
        %2164 = vadd.xlane.f32.xlu0 %v2149
        %v2165 = vpop.xlane.xlu0 %2164
        %2166 = vadd.xlane.f32.xlu0 %v2151
        %v2167 = vpop.xlane.xlu0 %2166
        %2168 = vadd.xlane.f32.xlu0 %v2153
        %v2169 = vpop.xlane.xlu0 %2168
        %2170 = vadd.xlane.f32.xlu0 %v2155
        %v2171 = vpop.xlane.xlu0 %2170
        %2172 = vadd.xlane.f32.xlu0 %v2157
        %v2173 = vpop.xlane.xlu0 %2172
        %2174 = vadd.xlane.f32.xlu0 %v2159
        %v2175 = vpop.xlane.xlu0 %2174
        %2176 = vadd.xlane.f32.xlu0 %v2161
        %v2177 = vpop.xlane.xlu0 %2176
        %v2178 = vrcp.pop %v2163
        %v2179 = vrcp.pop %v2165
        %v2180 = vrcp.pop %v2167
        %v2181 = vrcp.pop %v2169
        %v2182 = vrcp.pop %v2171
        %v2183 = vrcp.pop %v2173
        %v2184 = vrcp.pop %v2175
        %v2185 = vrcp.pop %v2177
        %v2186 = vmul.f32 %v2147, %v2178
        %v2187 = vmul.f32 %v2149, %v2179
        %v2188 = vmul.f32 %v2151, %v2180
        %v2189 = vmul.f32 %v2153, %v2181
        %v2190 = vmul.f32 %v2155, %v2182
        %v2191 = vmul.f32 %v2157, %v2183
        %v2192 = vmul.f32 %v2159, %v2184
        %v2193 = vmul.f32 %v2161, %v2185
        %v2194 = vpack.c.bf16 %v2187, %v2186
        %v2195 = vpack.c.bf16 %v2189, %v2188
        %v2196 = vpack.c.bf16 %v2191, %v2190
        %v2197 = vpack.c.bf16 %v2193, %v2192
        %2198 = vrot.lane.b32.xlu0 %v1429, 64
        %v2199 = vpop.permute.xlu0 %2198
        %2200 = vrot.lane.b32.xlu0 %v1430, 64
        %v2201 = vpop.permute.xlu0 %2200
        %2202 = vrot.lane.b32.xlu0 %v1431, 64
        %v2203 = vpop.permute.xlu0 %2202
        %2204 = vrot.lane.b32.xlu0 %v1432, 64
        %v2205 = vpop.permute.xlu0 %2204
        %2206 = vrot.lane.b32.xlu0 %v1433, 64
        %v2207 = vpop.permute.xlu0 %2206
        %2208 = vrot.lane.b32.xlu0 %v1434, 64
        %v2209 = vpop.permute.xlu0 %2208
        %2210 = vrot.lane.b32.xlu0 %v1435, 64
        %v2211 = vpop.permute.xlu0 %2210
        %2212 = vrot.lane.b32.xlu0 %v1436, 64
        %v2213 = vpop.permute.xlu0 %2212
        %2222 = vmatprep.subr.bf16.mxu0 0
        %2223 = vmatpush1.bf16.msra.mxu0 %v2199
        %2224 = vmatprep.subr.bf16.mxu0 0
        %2225 = vmatpush1.bf16.msra.mxu0 %v2201
        %2226 = vmatprep.subr.bf16.mxu0 0
        %2227 = vmatpush1.bf16.msra.mxu0 %v2203
        %2228 = vmatprep.subr.bf16.mxu0 0
        %2229 = vmatpush1.bf16.msra.mxu0 %v2205
        %2230 = vmatprep.subr.bf16.mxu0 0
        %2231 = vmatpush1.bf16.msra.mxu0 %v2207
        %2232 = vmatprep.subr.bf16.mxu0 0
        %2233 = vmatpush1.bf16.msra.mxu0 %v2209
        %2234 = vmatprep.subr.bf16.mxu0 0
        %2235 = vmatpush1.bf16.msra.mxu0 %v2211
        %2236 = vmatprep.subr.bf16.mxu0 0
        %2237 = vmatpush1.bf16.msra.mxu0 %v2213
        %2238 = vmatprep.subr.bf16.mxu0 0
        %2239 = vmatpush1.bf16.msra.mxu0 0
        %2240 = vmatprep.subr.bf16.mxu0 0
        %2241 = vmatpush1.bf16.msra.mxu0 0
        %2242 = vmatprep.subr.bf16.mxu0 0
        %2243 = vmatpush1.bf16.msra.mxu0 0
        %2244 = vmatprep.subr.bf16.mxu0 0
        %2245 = vmatpush1.bf16.msra.mxu0 0
        %2246 = vmatprep.subr.bf16.mxu0 0
        %2247 = vmatpush1.bf16.msra.mxu0 0
        %2248 = vmatprep.subr.bf16.mxu0 0
        %2249 = vmatpush1.bf16.msra.mxu0 0
        %2250 = vmatprep.subr.bf16.mxu0 0
        %2251 = vmatpush1.bf16.msra.mxu0 0
        %2252 = vmatprep.subr.bf16.mxu0 0
        %2253 = vmatpush1.bf16.msra.mxu0 0
        %2254 = vmatprep.mubr.bf16.mxu0 0
        %2255 = vmatmul.mubr.bf16.gmra.mrb[0].mxu0 %v2194
        %v2256 = vpop.f32.mrb[0].mxu0
        %v2257 = vadd.f32 0.0, %v2256
        %v2258 = vpop.f32.mrb[0].mxu0
        %v2259 = vpop.f32.mrb[0].mxu0
        %v2260 = vadd.f32 0.0, %v2259
        %v2261 = vpop.f32.mrb[0].mxu0
        %2262 = vmatprep.mubr.bf16.mxu0 0
        %2263 = vmatmul.mubr.bf16.gmra.mrb[0].mxu0 %v2195
        %v2264 = vpop.f32.mrb[0].mxu0
        %v2265 = vadd.f32 0.0, %v2264
        %v2266 = vpop.f32.mrb[0].mxu0
        %v2267 = vpop.f32.mrb[0].mxu0
        %v2268 = vadd.f32 0.0, %v2267
        %v2269 = vpop.f32.mrb[0].mxu0
        %2270 = vmatprep.mubr.bf16.mxu0 0
        %2271 = vmatmul.mubr.bf16.gmra.mrb[0].mxu0 %v2196
        %v2272 = vpop.f32.mrb[0].mxu0
        %v2273 = vadd.f32 0.0, %v2272
        %v2274 = vpop.f32.mrb[0].mxu0
        %v2275 = vpop.f32.mrb[0].mxu0
        %v2276 = vadd.f32 0.0, %v2275
        %v2277 = vpop.f32.mrb[0].mxu0
        %2278 = vmatprep.mubr.bf16.mxu0 0
        %2279 = vmatmul.mubr.bf16.gmra.mrb[0].mxu0 %v2197
        %v2280 = vpop.f32.mrb[0].mxu0
        %v2281 = vadd.f32 0.0, %v2280
        %v2282 = vpop.f32.mrb[0].mxu0
        %v2283 = vpop.f32.mrb[0].mxu0
        %v2284 = vadd.f32 0.0, %v2283
        %v2285 = vpop.f32.mrb[0].mxu0
        %2286 = vdwg.mxu0
        %2287 = vrot.lane.b32.xlu0 %v1417, 32
        %v2288 = vpop.permute.xlu0 %2287
        %2289 = vrot.lane.b32.xlu0 %v1418, 32
        %v2290 = vpop.permute.xlu0 %2289
        %2291 = vrot.lane.b32.xlu0 %v1419, 32
        %v2292 = vpop.permute.xlu0 %2291
        %2293 = vrot.lane.b32.xlu0 %v1420, 32
        %v2294 = vpop.permute.xlu0 %2293
        %2295 = vrot.lane.b32.xlu0 %v1421, 32
        %v2296 = vpop.permute.xlu0 %2295
        %2297 = vrot.lane.b32.xlu0 %v1422, 32
        %v2298 = vpop.permute.xlu0 %2297
        %2299 = vrot.lane.b32.xlu0 %v1423, 32
        %v2300 = vpop.permute.xlu0 %2299
        %2301 = vrot.lane.b32.xlu0 %v1424, 32
        %v2302 = vpop.permute.xlu0 %2301
        %2303 = vrot.lane.b32.xlu0 %v1425, 32
        %v2304 = vpop.permute.xlu0 %2303
        %2305 = vrot.lane.b32.xlu0 %v1426, 32
        %v2306 = vpop.permute.xlu0 %2305
        %2307 = vrot.lane.b32.xlu0 %v1427, 32
        %v2308 = vpop.permute.xlu0 %2307
        %2309 = vrot.lane.b32.xlu0 %v1428, 32
        %v2310 = vpop.permute.xlu0 %2309
        %v2312 = vsel %vm1444, %v2288, 0
        %v2315 = vsel %vm1444, %v2290, 0
        %v2318 = vsel %vm1444, %v2292, 0
        %v2321 = vsel %vm1444, %v2294, 0
        %v2324 = vsel %vm1444, %v2296, 0
        %v2327 = vsel %vm1444, %v2298, 0
        %v2330 = vsel %vm1444, %v2300, 0
        %v2333 = vsel %vm1444, %v2302, 0
        %v2336 = vsel %vm1444, %v2304, 0
        %v2339 = vsel %vm1444, %v2306, 0
        %v2342 = vsel %vm1444, %v2308, 0
        %v2345 = vsel %vm1444, %v2310, 0
        %2347 = vmatprep.subr.bf16.mxu0 0
        %2348 = vmatpush1.bf16.xpose.msra.mxu0 %v2324
        %2349 = vmatprep.subr.bf16.mxu0 0
        %2350 = vmatpush1.bf16.xpose.msra.mxu0 %v2327
        %2351 = vmatprep.subr.bf16.mxu0 0
        %2352 = vmatpush1.bf16.xpose.msra.mxu0 %v2330
        %2353 = vmatprep.subr.bf16.mxu0 0
        %2354 = vmatpush1.bf16.xpose.msra.mxu0 %v2333
        %2355 = vmatprep.subr.bf16.mxu0 0
        %2356 = vmatpush1.bf16.xpose.msra.mxu0 %v2336
        %2357 = vmatprep.subr.bf16.mxu0 0
        %2358 = vmatpush1.bf16.xpose.msra.mxu0 %v2339
        %2359 = vmatprep.subr.bf16.mxu0 0
        %2360 = vmatpush1.bf16.xpose.msra.mxu0 %v2342
        %2361 = vmatprep.subr.bf16.mxu0 0
        %2362 = vmatpush1.bf16.xpose.msra.mxu0 %v2345
        %2363 = vmatprep.subr.bf16.mxu0 0
        %2364 = vmatpush1.bf16.xpose.msra.mxu0 0
        %2365 = vmatprep.subr.bf16.mxu0 0
        %2366 = vmatpush1.bf16.xpose.msra.mxu0 0
        %2367 = vmatprep.subr.bf16.mxu0 0
        %2368 = vmatpush1.bf16.xpose.msra.mxu0 0
        %2369 = vmatprep.subr.bf16.mxu0 0
        %2370 = vmatpush1.bf16.xpose.msra.mxu0 0
        %2371 = vmatprep.subr.bf16.mxu0 0
        %2372 = vmatpush1.bf16.xpose.msra.mxu0 0
        %2373 = vmatprep.subr.bf16.mxu0 0
        %2374 = vmatpush1.bf16.xpose.msra.mxu0 0
        %2375 = vmatprep.subr.bf16.mxu0 0
        %2376 = vmatpush1.bf16.xpose.msra.mxu0 0
        %2377 = vmatprep.subr.bf16.mxu0 0
        %2378 = vmatpush1.bf16.xpose.msra.mxu0 0
        %2379 = vmatprep.mubr.bf16.mxu0 0
        %2380 = vmatmul.mubr.bf16.gmra.mrb[0].mxu0 %v2312
        %v2381 = vpop.f32.mrb[0].mxu0
        %v2382 = vadd.f32 %v1442, %v2381
        %v2383 = vpop.f32.mrb[0].mxu0
        %v2384 = vpop.f32.mrb[0].mxu0
        %v2385 = vadd.f32 %v1442, %v2384
        %v2386 = vpop.f32.mrb[0].mxu0
        %2387 = vmatprep.mubr.bf16.mxu0 0
        %2388 = vmatmul.mubr.bf16.gmra.mrb[0].mxu0 %v2315
        %v2389 = vpop.f32.mrb[0].mxu0
        %v2390 = vadd.f32 %v1442, %v2389
        %v2391 = vpop.f32.mrb[0].mxu0
        %v2392 = vpop.f32.mrb[0].mxu0
        %v2393 = vadd.f32 %v1442, %v2392
        %v2394 = vpop.f32.mrb[0].mxu0
        %2395 = vmatprep.mubr.bf16.mxu0 0
        %2396 = vmatmul.mubr.bf16.gmra.mrb[0].mxu0 %v2318
        %v2397 = vpop.f32.mrb[0].mxu0
        %v2398 = vadd.f32 %v1442, %v2397
        %v2399 = vpop.f32.mrb[0].mxu0
        %v2400 = vpop.f32.mrb[0].mxu0
        %v2401 = vadd.f32 %v1442, %v2400
        %v2402 = vpop.f32.mrb[0].mxu0
        %2403 = vmatprep.mubr.bf16.mxu0 0
        %2404 = vmatmul.mubr.bf16.gmra.mrb[0].mxu0 %v2321
        %v2405 = vpop.f32.mrb[0].mxu0
        %v2406 = vadd.f32 %v1442, %v2405
        %v2407 = vpop.f32.mrb[0].mxu0
        %v2408 = vpop.f32.mrb[0].mxu0
        %v2409 = vadd.f32 %v1442, %v2408
        %v2410 = vpop.f32.mrb[0].mxu0
        %2411 = vdwg.mxu0
        %2412 = vmax.xlane.f32.xlu0 %v2382
        %v2413 = vpop.xlane.xlu0 %2412
        %2414 = vmax.xlane.f32.xlu0 %v2385
        %v2415 = vpop.xlane.xlu0 %2414
        %2416 = vmax.xlane.f32.xlu0 %v2390
        %v2417 = vpop.xlane.xlu0 %2416
        %2418 = vmax.xlane.f32.xlu0 %v2393
        %v2419 = vpop.xlane.xlu0 %2418
        %2420 = vmax.xlane.f32.xlu0 %v2398
        %v2421 = vpop.xlane.xlu0 %2420
        %2422 = vmax.xlane.f32.xlu0 %v2401
        %v2423 = vpop.xlane.xlu0 %2422
        %2424 = vmax.xlane.f32.xlu0 %v2406
        %v2425 = vpop.xlane.xlu0 %2424
        %2426 = vmax.xlane.f32.xlu0 %v2409
        %v2427 = vpop.xlane.xlu0 %2426
        %v2428 = vsub.f32 %v2382, %v2413
        %v2429 = vsub.f32 %v2385, %v2415
        %v2430 = vsub.f32 %v2390, %v2417
        %v2431 = vsub.f32 %v2393, %v2419
        %v2432 = vsub.f32 %v2398, %v2421
        %v2433 = vsub.f32 %v2401, %v2423
        %v2434 = vsub.f32 %v2406, %v2425
        %v2435 = vsub.f32 %v2409, %v2427
        %v2436 = vmul.f32 %v2428, 1.442695
        %v2437 = vpow.pop %v2436
        %v2438 = vmul.f32 %v2429, 1.442695
        %v2439 = vpow.pop %v2438
        %v2440 = vmul.f32 %v2430, 1.442695
        %v2441 = vpow.pop %v2440
        %v2442 = vmul.f32 %v2431, 1.442695
        %v2443 = vpow.pop %v2442
        %v2444 = vmul.f32 %v2432, 1.442695
        %v2445 = vpow.pop %v2444
        %v2446 = vmul.f32 %v2433, 1.442695
        %v2447 = vpow.pop %v2446
        %v2448 = vmul.f32 %v2434, 1.442695
        %v2449 = vpow.pop %v2448
        %v2450 = vmul.f32 %v2435, 1.442695
        %v2451 = vpow.pop %v2450
        %2452 = vadd.xlane.f32.xlu0 %v2437
        %v2453 = vpop.xlane.xlu0 %2452
        %2454 = vadd.xlane.f32.xlu0 %v2439
        %v2455 = vpop.xlane.xlu0 %2454
        %2456 = vadd.xlane.f32.xlu0 %v2441
        %v2457 = vpop.xlane.xlu0 %2456
        %2458 = vadd.xlane.f32.xlu0 %v2443
        %v2459 = vpop.xlane.xlu0 %2458
        %2460 = vadd.xlane.f32.xlu0 %v2445
        %v2461 = vpop.xlane.xlu0 %2460
        %2462 = vadd.xlane.f32.xlu0 %v2447
        %v2463 = vpop.xlane.xlu0 %2462
        %2464 = vadd.xlane.f32.xlu0 %v2449
        %v2465 = vpop.xlane.xlu0 %2464
        %2466 = vadd.xlane.f32.xlu0 %v2451
        %v2467 = vpop.xlane.xlu0 %2466
        %v2468 = vrcp.pop %v2453
        %v2469 = vrcp.pop %v2455
        %v2470 = vrcp.pop %v2457
        %v2471 = vrcp.pop %v2459
        %v2472 = vrcp.pop %v2461
        %v2473 = vrcp.pop %v2463
        %v2474 = vrcp.pop %v2465
        %v2475 = vrcp.pop %v2467
        %v2476 = vmul.f32 %v2437, %v2468
        %v2477 = vmul.f32 %v2439, %v2469
        %v2478 = vmul.f32 %v2441, %v2470
        %v2479 = vmul.f32 %v2443, %v2471
        %v2480 = vmul.f32 %v2445, %v2472
        %v2481 = vmul.f32 %v2447, %v2473
        %v2482 = vmul.f32 %v2449, %v2474
        %v2483 = vmul.f32 %v2451, %v2475
        %v2484 = vpack.c.bf16 %v2477, %v2476
        %v2485 = vpack.c.bf16 %v2479, %v2478
        %v2486 = vpack.c.bf16 %v2481, %v2480
        %v2487 = vpack.c.bf16 %v2483, %v2482
        %2488 = vrot.lane.b32.xlu0 %v1429, 32
        %v2489 = vpop.permute.xlu0 %2488
        %2490 = vrot.lane.b32.xlu0 %v1430, 32
        %v2491 = vpop.permute.xlu0 %2490
        %2492 = vrot.lane.b32.xlu0 %v1431, 32
        %v2493 = vpop.permute.xlu0 %2492
        %2494 = vrot.lane.b32.xlu0 %v1432, 32
        %v2495 = vpop.permute.xlu0 %2494
        %2496 = vrot.lane.b32.xlu0 %v1433, 32
        %v2497 = vpop.permute.xlu0 %2496
        %2498 = vrot.lane.b32.xlu0 %v1434, 32
        %v2499 = vpop.permute.xlu0 %2498
        %2500 = vrot.lane.b32.xlu0 %v1435, 32
        %v2501 = vpop.permute.xlu0 %2500
        %2502 = vrot.lane.b32.xlu0 %v1436, 32
        %v2503 = vpop.permute.xlu0 %2502
        %2512 = vmatprep.subr.bf16.mxu0 0
        %2513 = vmatpush1.bf16.msra.mxu0 %v2489
        %2514 = vmatprep.subr.bf16.mxu0 0
        %2515 = vmatpush1.bf16.msra.mxu0 %v2491
        %2516 = vmatprep.subr.bf16.mxu0 0
        %2517 = vmatpush1.bf16.msra.mxu0 %v2493
        %2518 = vmatprep.subr.bf16.mxu0 0
        %2519 = vmatpush1.bf16.msra.mxu0 %v2495
        %2520 = vmatprep.subr.bf16.mxu0 0
        %2521 = vmatpush1.bf16.msra.mxu0 %v2497
        %2522 = vmatprep.subr.bf16.mxu0 0
        %2523 = vmatpush1.bf16.msra.mxu0 %v2499
        %2524 = vmatprep.subr.bf16.mxu0 0
        %2525 = vmatpush1.bf16.msra.mxu0 %v2501
        %2526 = vmatprep.subr.bf16.mxu0 0
        %2527 = vmatpush1.bf16.msra.mxu0 %v2503
        %2528 = vmatprep.subr.bf16.mxu0 0
        %2529 = vmatpush1.bf16.msra.mxu0 0
        %2530 = vmatprep.subr.bf16.mxu0 0
        %2531 = vmatpush1.bf16.msra.mxu0 0
        %2532 = vmatprep.subr.bf16.mxu0 0
        %2533 = vmatpush1.bf16.msra.mxu0 0
        %2534 = vmatprep.subr.bf16.mxu0 0
        %2535 = vmatpush1.bf16.msra.mxu0 0
        %2536 = vmatprep.subr.bf16.mxu0 0
        %2537 = vmatpush1.bf16.msra.mxu0 0
        %2538 = vmatprep.subr.bf16.mxu0 0
        %2539 = vmatpush1.bf16.msra.mxu0 0
        %2540 = vmatprep.subr.bf16.mxu0 0
        %2541 = vmatpush1.bf16.msra.mxu0 0
        %2542 = vmatprep.subr.bf16.mxu0 0
        %2543 = vmatpush1.bf16.msra.mxu0 0
        %2544 = vmatprep.mubr.bf16.mxu0 0
        %2545 = vmatmul.mubr.bf16.gmra.mrb[0].mxu0 %v2484
        %v2546 = vpop.f32.mrb[0].mxu0
        %v2547 = vadd.f32 0.0, %v2546
        %v2548 = vpop.f32.mrb[0].mxu0
        %v2549 = vpop.f32.mrb[0].mxu0
        %v2550 = vadd.f32 0.0, %v2549
        %v2551 = vpop.f32.mrb[0].mxu0
        %2552 = vmatprep.mubr.bf16.mxu0 0
        %2553 = vmatmul.mubr.bf16.gmra.mrb[0].mxu0 %v2485
        %v2554 = vpop.f32.mrb[0].mxu0
        %v2555 = vadd.f32 0.0, %v2554
        %v2556 = vpop.f32.mrb[0].mxu0
        %v2557 = vpop.f32.mrb[0].mxu0
        %v2558 = vadd.f32 0.0, %v2557
        %v2559 = vpop.f32.mrb[0].mxu0
        %2560 = vmatprep.mubr.bf16.mxu0 0
        %2561 = vmatmul.mubr.bf16.gmra.mrb[0].mxu0 %v2486
        %v2562 = vpop.f32.mrb[0].mxu0
        %v2563 = vadd.f32 0.0, %v2562
        %v2564 = vpop.f32.mrb[0].mxu0
        %v2565 = vpop.f32.mrb[0].mxu0
        %v2566 = vadd.f32 0.0, %v2565
        %v2567 = vpop.f32.mrb[0].mxu0
        %2568 = vmatprep.mubr.bf16.mxu0 0
        %2569 = vmatmul.mubr.bf16.gmra.mrb[0].mxu0 %v2487
        %v2570 = vpop.f32.mrb[0].mxu0
        %v2571 = vadd.f32 0.0, %v2570
        %v2572 = vpop.f32.mrb[0].mxu0
        %v2573 = vpop.f32.mrb[0].mxu0
        %v2574 = vadd.f32 0.0, %v2573
        %v2575 = vpop.f32.mrb[0].mxu0
        %2576 = vdwg.mxu0
        %2585 = vrot.lane.b32.xlu0 %v1967, 32
        %v2586 = vpop.permute.xlu0 %2585
        %2587 = vrot.lane.b32.xlu0 %v1970, 32
        %v2588 = vpop.permute.xlu0 %2587
        %2589 = vrot.lane.b32.xlu0 %v1975, 32
        %v2590 = vpop.permute.xlu0 %2589
        %2591 = vrot.lane.b32.xlu0 %v1978, 32
        %v2592 = vpop.permute.xlu0 %2591
        %2593 = vrot.lane.b32.xlu0 %v1983, 32
        %v2594 = vpop.permute.xlu0 %2593
        %2595 = vrot.lane.b32.xlu0 %v1986, 32
        %v2596 = vpop.permute.xlu0 %2595
        %2597 = vrot.lane.b32.xlu0 %v1991, 32
        %v2598 = vpop.permute.xlu0 %2597
        %2599 = vrot.lane.b32.xlu0 %v1994, 32
        %v2600 = vpop.permute.xlu0 %2599
        %2617 = vrot.lane.b32.xlu0 %v2257, 64
        %v2618 = vpop.permute.xlu0 %2617
        %2619 = vrot.lane.b32.xlu0 %v2260, 64
        %v2620 = vpop.permute.xlu0 %2619
        %2621 = vrot.lane.b32.xlu0 %v2265, 64
        %v2622 = vpop.permute.xlu0 %2621
        %2623 = vrot.lane.b32.xlu0 %v2268, 64
        %v2624 = vpop.permute.xlu0 %2623
        %2625 = vrot.lane.b32.xlu0 %v2273, 64
        %v2626 = vpop.permute.xlu0 %2625
        %2627 = vrot.lane.b32.xlu0 %v2276, 64
        %v2628 = vpop.permute.xlu0 %2627
        %2629 = vrot.lane.b32.xlu0 %v2281, 64
        %v2630 = vpop.permute.xlu0 %2629
        %2631 = vrot.lane.b32.xlu0 %v2284, 64
        %v2632 = vpop.permute.xlu0 %2631
        %2649 = vrot.lane.b32.xlu0 %v2547, 96
        %v2650 = vpop.permute.xlu0 %2649
        %2651 = vrot.lane.b32.xlu0 %v2550, 96
        %v2652 = vpop.permute.xlu0 %2651
        %2653 = vrot.lane.b32.xlu0 %v2555, 96
        %v2654 = vpop.permute.xlu0 %2653
        %2655 = vrot.lane.b32.xlu0 %v2558, 96
        %v2656 = vpop.permute.xlu0 %2655
        %2657 = vrot.lane.b32.xlu0 %v2563, 96
        %v2658 = vpop.permute.xlu0 %2657
        %2659 = vrot.lane.b32.xlu0 %v2566, 96
        %v2660 = vpop.permute.xlu0 %2659
        %2661 = vrot.lane.b32.xlu0 %v2571, 96
        %v2662 = vpop.permute.xlu0 %2661
        %2663 = vrot.lane.b32.xlu0 %v2574, 96
        %v2664 = vpop.permute.xlu0 %2663
        %v2673 = vsel %vm1444, %v1657, %v2586
        %v2674 = vsel %vm1444, %v1660, %v2588
        %v2675 = vsel %vm1444, %v1665, %v2590
        %v2676 = vsel %vm1444, %v1668, %v2592
        %v2677 = vsel %vm1444, %v1673, %v2594
        %v2678 = vsel %vm1444, %v1676, %v2596
        %v2679 = vsel %vm1444, %v1681, %v2598
        %v2680 = vsel %vm1444, %v1684, %v2600
        %vm2681 = vcmask 523264
        %v2682 = vsel %vm2681, %v2673, %v2618
        %v2683 = vsel %vm2681, %v2674, %v2620
        %v2684 = vsel %vm2681, %v2675, %v2622
        %v2685 = vsel %vm2681, %v2676, %v2624
        %v2686 = vsel %vm2681, %v2677, %v2626
        %v2687 = vsel %vm2681, %v2678, %v2628
        %v2688 = vsel %vm2681, %v2679, %v2630
        %v2689 = vsel %vm2681, %v2680, %v2632
        %vm2690 = vcmask 785408
        %v2691 = vsel %vm2690, %v2682, %v2650
        %v2692 = vsel %vm2690, %v2683, %v2652
        %v2693 = vsel %vm2690, %v2684, %v2654
        %v2694 = vsel %vm2690, %v2685, %v2656
        %v2695 = vsel %vm2690, %v2686, %v2658
        %v2696 = vsel %vm2690, %v2687, %v2660
        %v2697 = vsel %vm2690, %v2688, %v2662
        %v2698 = vsel %vm2690, %v2689, %v2664
        %v2699 = vpack.c.bf16 %v2692, %v2691
        %v2700 = vpack.c.bf16 %v2694, %v2693
        %v2701 = vpack.c.bf16 %v2696, %v2695
        %v2702 = vpack.c.bf16 %v2698, %v2697
        %v2703 = vld [vmem:[#allocation15] sm:$0xf]
        %v2704 = vld [vmem:[#allocation15 + $0x4] sm:$0xf]
        %v2705 = vld [vmem:[#allocation15 + $0x8] sm:$0xf]
        %v2706 = vld [vmem:[#allocation15 + $0xc] sm:$0xf]
        %v2707 = vld [vmem:[#allocation15 + $0x10] sm:$0xf]
        %v2708 = vld [vmem:[#allocation15 + $0x14] sm:$0xf]
        %v2709 = vld [vmem:[#allocation15 + $0x18] sm:$0xf]
        %v2710 = vld [vmem:[#allocation15 + $0x1c] sm:$0xf]
        %v2711 = vld [vmem:[#allocation15 + $0x20] sm:$0xf]
        %v2712 = vld [vmem:[#allocation15 + $0x24] sm:$0xf]
        %v2713 = vld [vmem:[#allocation15 + $0x28] sm:$0xf]
        %v2714 = vld [vmem:[#allocation15 + $0x2c] sm:$0xf]
        %v2715 = vld [vmem:[#allocation15 + $0x30] sm:$0xf]
        %v2716 = vld [vmem:[#allocation15 + $0x34] sm:$0xf]
        %v2717 = vld [vmem:[#allocation15 + $0x38] sm:$0xf]
        %v2718 = vld [vmem:[#allocation15 + $0x3c] sm:$0xf]
        %v2719 = vld [vmem:[%s10] sm:$0x1]
        %v2721 = vlaneseq
        %v2722 = vshrl.u32 %v2721, 7
        %v2723 = vsub.s32 0, %v2722
        %v2724 = vrot.slane %v2719, %v2723
        %v2742 = vunpack.c.l.b16 %v2703
        %v2743 = vunpack.c.l.b16 %v2704
        %v2744 = vunpack.c.l.b16 %v2705
        %v2745 = vunpack.c.l.b16 %v2706
        %v2746 = vunpack.c.l.b16 %v2707
        %v2747 = vunpack.c.l.b16 %v2708
        %v2748 = vunpack.c.l.b16 %v2709
        %v2749 = vunpack.c.l.b16 %v2710
        %v2750 = vunpack.c.l.b16 %v2711
        %v2751 = vunpack.c.l.b16 %v2712
        %v2752 = vunpack.c.l.b16 %v2713
        %v2753 = vunpack.c.l.b16 %v2714
        %v2754 = vunpack.c.l.b16 %v2715
        %v2755 = vunpack.c.l.b16 %v2716
        %v2756 = vunpack.c.l.b16 %v2717
        %v2757 = vunpack.c.l.b16 %v2718
        %v2758 = vpack.c.b16 %v2743, %v2742
        %v2759 = vpack.c.b16 %v2745, %v2744
        %v2760 = vpack.c.b16 %v2747, %v2746
        %v2761 = vpack.c.b16 %v2749, %v2748
        %v2762 = vpack.c.b16 %v2751, %v2750
        %v2763 = vpack.c.b16 %v2753, %v2752
        %v2764 = vpack.c.b16 %v2755, %v2754
        %v2765 = vpack.c.b16 %v2757, %v2756
        %2774 = vmatprep.subr.bf16.mxu0 0
        %2775 = vmatpush1.bf16.msra.mxu0 %v2758
        %2776 = vmatprep.subr.bf16.mxu0 0
        %2777 = vmatpush1.bf16.msra.mxu0 %v2759
        %2778 = vmatprep.subr.bf16.mxu0 0
        %2779 = vmatpush1.bf16.msra.mxu0 %v2760
        %2780 = vmatprep.subr.bf16.mxu0 0
        %2781 = vmatpush1.bf16.msra.mxu0 %v2761
        %2782 = vmatprep.subr.bf16.mxu0 0
        %2783 = vmatpush1.bf16.msra.mxu0 %v2762
        %2784 = vmatprep.subr.bf16.mxu0 0
        %2785 = vmatpush1.bf16.msra.mxu0 %v2763
        %2786 = vmatprep.subr.bf16.mxu0 0
        %2787 = vmatpush1.bf16.msra.mxu0 %v2764
        %2788 = vmatprep.subr.bf16.mxu0 0
        %2789 = vmatpush1.bf16.msra.mxu0 %v2765
        %2790 = vmatprep.subr.bf16.mxu0 0
        %2791 = vmatpush1.bf16.msra.mxu0 0
        %2792 = vmatprep.subr.bf16.mxu0 0
        %2793 = vmatpush1.bf16.msra.mxu0 0
        %2794 = vmatprep.subr.bf16.mxu0 0
        %2795 = vmatpush1.bf16.msra.mxu0 0
        %2796 = vmatprep.subr.bf16.mxu0 0
        %2797 = vmatpush1.bf16.msra.mxu0 0
        %2798 = vmatprep.subr.bf16.mxu0 0
        %2799 = vmatpush1.bf16.msra.mxu0 0
        %2800 = vmatprep.subr.bf16.mxu0 0
        %2801 = vmatpush1.bf16.msra.mxu0 0
        %2802 = vmatprep.subr.bf16.mxu0 0
        %2803 = vmatpush1.bf16.msra.mxu0 0
        %2804 = vmatprep.subr.bf16.mxu0 0
        %2805 = vmatpush1.bf16.msra.mxu0 0
        %2806 = vmatprep.mubr.bf16.mxu0 0
        %2807 = vmatmul.mubr.bf16.gmra.mrb[0].mxu0 %v2699
        %v2808 = vpop.f32.mrb[0].mxu0
        %v2809 = vadd.f32 %v2724, %v2808
        %v2810 = vpop.f32.mrb[0].mxu0
        %v2811 = vpop.f32.mrb[0].mxu0
        %v2812 = vadd.f32 %v2724, %v2811
        %v2813 = vpop.f32.mrb[0].mxu0
        %2814 = vmatprep.mubr.bf16.mxu0 0
        %2815 = vmatmul.mubr.bf16.gmra.mrb[0].mxu0 %v2700
        %v2816 = vpop.f32.mrb[0].mxu0
        %v2817 = vadd.f32 %v2724, %v2816
        %v2818 = vpop.f32.mrb[0].mxu0
        %v2819 = vpop.f32.mrb[0].mxu0
        %v2820 = vadd.f32 %v2724, %v2819
        %v2821 = vpop.f32.mrb[0].mxu0
        %2822 = vmatprep.mubr.bf16.mxu0 0
        %2823 = vmatmul.mubr.bf16.gmra.mrb[0].mxu0 %v2701
        %v2824 = vpop.f32.mrb[0].mxu0
        %v2825 = vadd.f32 %v2724, %v2824
        %v2826 = vpop.f32.mrb[0].mxu0
        %v2827 = vpop.f32.mrb[0].mxu0
        %v2828 = vadd.f32 %v2724, %v2827
        %v2829 = vpop.f32.mrb[0].mxu0
        %2830 = vmatprep.mubr.bf16.mxu0 0
        %2831 = vmatmul.mubr.bf16.gmra.mrb[0].mxu0 %v2702
        %v2832 = vpop.f32.mrb[0].mxu0
        %v2833 = vadd.f32 %v2724, %v2832
        %v2834 = vpop.f32.mrb[0].mxu0
        %v2835 = vpop.f32.mrb[0].mxu0
        %v2836 = vadd.f32 %v2724, %v2835
        %v2837 = vpop.f32.mrb[0].mxu0
        %2838 = vdwg.mxu0
        %v2839 = vadd.f32 %v1249, %v2809
        %v2840 = vadd.f32 %v1250, %v2812
        %v2841 = vadd.f32 %v1251, %v2817
        %v2842 = vadd.f32 %v1252, %v2820
        %v2843 = vadd.f32 %v1253, %v2825
        %v2844 = vadd.f32 %v1254, %v2828
        %v2845 = vadd.f32 %v1255, %v2833
        %v2846 = vadd.f32 %v1256, %v2836
        %v2847 = vld [vmem:[%s11] sm:$0x1]
        %v2848 = vld [vmem:[%s12] sm:$0x1]
        %2849 = vadd.xlane.f32.xlu0 %v2839
        %v2850 = vpop.xlane.xlu0 %2849
        %2851 = vadd.xlane.f32.xlu0 %v2840
        %v2852 = vpop.xlane.xlu0 %2851
        %2853 = vadd.xlane.f32.xlu0 %v2841
        %v2854 = vpop.xlane.xlu0 %2853
        %2855 = vadd.xlane.f32.xlu0 %v2842
        %v2856 = vpop.xlane.xlu0 %2855
        %2857 = vadd.xlane.f32.xlu0 %v2843
        %v2858 = vpop.xlane.xlu0 %2857
        %2859 = vadd.xlane.f32.xlu0 %v2844
        %v2860 = vpop.xlane.xlu0 %2859
        %2861 = vadd.xlane.f32.xlu0 %v2845
        %v2862 = vpop.xlane.xlu0 %2861
        %2863 = vadd.xlane.f32.xlu0 %v2846
        %v2864 = vpop.xlane.xlu0 %2863
        %v2865 = vrcp.pop 128.0
        %v2866 = vmul.f32 %v2850, %v2865
        %v2867 = vmul.f32 %v2852, %v2865
        %v2868 = vmul.f32 %v2854, %v2865
        %v2869 = vmul.f32 %v2856, %v2865
        %v2870 = vmul.f32 %v2858, %v2865
        %v2871 = vmul.f32 %v2860, %v2865
        %v2872 = vmul.f32 %v2862, %v2865
        %v2873 = vmul.f32 %v2864, %v2865
        %v2874 = vsub.f32 %v2839, %v2866
        %v2875 = vsub.f32 %v2840, %v2867
        %v2876 = vsub.f32 %v2841, %v2868
        %v2877 = vsub.f32 %v2842, %v2869
        %v2878 = vsub.f32 %v2843, %v2870
        %v2879 = vsub.f32 %v2844, %v2871
        %v2880 = vsub.f32 %v2845, %v2872
        %v2881 = vsub.f32 %v2846, %v2873
        %v2882 = vmul.f32 %v2874, %v2874
        %v2883 = vmul.f32 %v2875, %v2875
        %v2884 = vmul.f32 %v2876, %v2876
        %v2885 = vmul.f32 %v2877, %v2877
        %v2886 = vmul.f32 %v2878, %v2878
        %v2887 = vmul.f32 %v2879, %v2879
        %v2888 = vmul.f32 %v2880, %v2880
        %v2889 = vmul.f32 %v2881, %v2881
        %2890 = vadd.xlane.f32.xlu0 %v2882
        %v2891 = vpop.xlane.xlu0 %2890
        %2892 = vadd.xlane.f32.xlu0 %v2883
        %v2893 = vpop.xlane.xlu0 %2892
        %2894 = vadd.xlane.f32.xlu0 %v2884
        %v2895 = vpop.xlane.xlu0 %2894
        %2896 = vadd.xlane.f32.xlu0 %v2885
        %v2897 = vpop.xlane.xlu0 %2896
        %2898 = vadd.xlane.f32.xlu0 %v2886
        %v2899 = vpop.xlane.xlu0 %2898
        %2900 = vadd.xlane.f32.xlu0 %v2887
        %v2901 = vpop.xlane.xlu0 %2900
        %2902 = vadd.xlane.f32.xlu0 %v2888
        %v2903 = vpop.xlane.xlu0 %2902
        %2904 = vadd.xlane.f32.xlu0 %v2889
        %v2905 = vpop.xlane.xlu0 %2904
        %v2906 = vmul.f32 %v2891, %v2865
        %v2907 = vmul.f32 %v2893, %v2865
        %v2908 = vmul.f32 %v2895, %v2865
        %v2909 = vmul.f32 %v2897, %v2865
        %v2910 = vmul.f32 %v2899, %v2865
        %v2911 = vmul.f32 %v2901, %v2865
        %v2912 = vmul.f32 %v2903, %v2865
        %v2913 = vmul.f32 %v2905, %v2865
        %v2914 = vadd.f32 %v2906, 1e-05
        %v2915 = vadd.f32 %v2907, 1e-05
        %v2916 = vadd.f32 %v2908, 1e-05
        %v2917 = vadd.f32 %v2909, 1e-05
        %v2918 = vadd.f32 %v2910, 1e-05
        %v2919 = vadd.f32 %v2911, 1e-05
        %v2920 = vadd.f32 %v2912, 1e-05
        %v2921 = vadd.f32 %v2913, 1e-05
        %v2922 = vrsqrt.pop %v2914
        %v2923 = vrsqrt.pop %v2915
        %v2924 = vrsqrt.pop %v2916
        %v2925 = vrsqrt.pop %v2917
        %v2926 = vrsqrt.pop %v2918
        %v2927 = vrsqrt.pop %v2919
        %v2928 = vrsqrt.pop %v2920
        %v2929 = vrsqrt.pop %v2921
        %v2930 = vmul.f32 %v2874, %v2922
        %v2931 = vmul.f32 %v2875, %v2923
        %v2932 = vmul.f32 %v2876, %v2924
        %v2933 = vmul.f32 %v2877, %v2925
        %v2934 = vmul.f32 %v2878, %v2926
        %v2935 = vmul.f32 %v2879, %v2927
        %v2936 = vmul.f32 %v2880, %v2928
        %v2937 = vmul.f32 %v2881, %v2929
        %v2939 = vlaneseq
        %v2940 = vshrl.u32 %v2939, 7
        %v2941 = vsub.s32 0, %v2940
        %v2942 = vrot.slane %v2847, %v2941
        %v2944 = vmul.f32 %v2930, %v2942
        %v2945 = vmul.f32 %v2931, %v2942
        %v2946 = vmul.f32 %v2932, %v2942
        %v2947 = vmul.f32 %v2933, %v2942
        %v2948 = vmul.f32 %v2934, %v2942
        %v2949 = vmul.f32 %v2935, %v2942
        %v2950 = vmul.f32 %v2936, %v2942
        %v2951 = vmul.f32 %v2937, %v2942
        %v2953 = vlaneseq
        %v2954 = vshrl.u32 %v2953, 7
        %v2955 = vsub.s32 0, %v2954
        %v2956 = vrot.slane %v2848, %v2955
        %v2958 = vadd.f32 %v2944, %v2956
        %v2959 = vadd.f32 %v2945, %v2956
        %v2960 = vadd.f32 %v2946, %v2956
        %v2961 = vadd.f32 %v2947, %v2956
        %v2962 = vadd.f32 %v2948, %v2956
        %v2963 = vadd.f32 %v2949, %v2956
        %v2964 = vadd.f32 %v2950, %v2956
        %v2965 = vadd.f32 %v2951, %v2956
        %v2966 = vpack.c.bf16 %v2959, %v2958
        %v2967 = vpack.c.bf16 %v2961, %v2960
        %v2968 = vpack.c.bf16 %v2963, %v2962
        %v2969 = vpack.c.bf16 %v2965, %v2964
        %v2970 = vld [vmem:[#allocation16] sm:$0xff]
        %v2971 = vld [vmem:[#allocation16 + $0x8] sm:$0xff]
        %v2972 = vld [vmem:[#allocation16 + $0x10] sm:$0xff]
        %v2973 = vld [vmem:[#allocation16 + $0x18] sm:$0xff]
        %v2974 = vld [vmem:[#allocation16 + $0x20] sm:$0xff]
        %v2975 = vld [vmem:[#allocation16 + $0x28] sm:$0xff]
        %v2976 = vld [vmem:[#allocation16 + $0x30] sm:$0xff]
        %v2977 = vld [vmem:[#allocation16 + $0x38] sm:$0xff]
        %v2978 = vld [vmem:[#allocation16 + $0x40] sm:$0xff]
        %v2979 = vld [vmem:[#allocation16 + $0x48] sm:$0xff]
        %v2980 = vld [vmem:[#allocation16 + $0x50] sm:$0xff]
        %v2981 = vld [vmem:[#allocation16 + $0x58] sm:$0xff]
        %v2982 = vld [vmem:[#allocation16 + $0x60] sm:$0xff]
        %v2983 = vld [vmem:[#allocation16 + $0x68] sm:$0xff]
        %v2984 = vld [vmem:[#allocation16 + $0x70] sm:$0xff]
        %v2985 = vld [vmem:[#allocation16 + $0x78] sm:$0xff]
        %v2986 = vld [vmem:[%s14] sm:$0x3]
        %v2988 = vlaneseq
        %v2989 = vshrl.u32 %v2988, 7
        %v2990 = vsub.s32 0, %v2989
        %v2991 = vrot.slane %v2986, %v2990
        %v2992 = vlaneseq
        %v2993 = vshrl.u32 %v2992, 7
        %v2994 = vsub.s32 1, %v2993
        %v2995 = vrot.slane %v2986, %v2994
        %v3014 = vunpack.c.l.b16 %v2970
        %v3015 = vunpack.c.h.b16 %v2970
        %v3016 = vunpack.c.l.b16 %v2971
        %v3017 = vunpack.c.h.b16 %v2971
        %v3018 = vunpack.c.l.b16 %v2972
        %v3019 = vunpack.c.h.b16 %v2972
        %v3020 = vunpack.c.l.b16 %v2973
        %v3021 = vunpack.c.h.b16 %v2973
        %v3022 = vunpack.c.l.b16 %v2974
        %v3023 = vunpack.c.h.b16 %v2974
        %v3024 = vunpack.c.l.b16 %v2975
        %v3025 = vunpack.c.h.b16 %v2975
        %v3026 = vunpack.c.l.b16 %v2976
        %v3027 = vunpack.c.h.b16 %v2976
        %v3028 = vunpack.c.l.b16 %v2977
        %v3029 = vunpack.c.h.b16 %v2977
        %v3030 = vunpack.c.l.b16 %v2978
        %v3031 = vunpack.c.h.b16 %v2978
        %v3032 = vunpack.c.l.b16 %v2979
        %v3033 = vunpack.c.h.b16 %v2979
        %v3034 = vunpack.c.l.b16 %v2980
        %v3035 = vunpack.c.h.b16 %v2980
        %v3036 = vunpack.c.l.b16 %v2981
        %v3037 = vunpack.c.h.b16 %v2981
        %v3038 = vunpack.c.l.b16 %v2982
        %v3039 = vunpack.c.h.b16 %v2982
        %v3040 = vunpack.c.l.b16 %v2983
        %v3041 = vunpack.c.h.b16 %v2983
        %v3042 = vunpack.c.l.b16 %v2984
        %v3043 = vunpack.c.h.b16 %v2984
        %v3044 = vunpack.c.l.b16 %v2985
        %v3045 = vunpack.c.h.b16 %v2985
        %v3046 = vpack.c.b16 %v3016, %v3014
        %v3047 = vpack.c.b16 %v3017, %v3015
        %v3048 = vpack.c.b16 %v3020, %v3018
        %v3049 = vpack.c.b16 %v3021, %v3019
        %v3050 = vpack.c.b16 %v3024, %v3022
        %v3051 = vpack.c.b16 %v3025, %v3023
        %v3052 = vpack.c.b16 %v3028, %v3026
        %v3053 = vpack.c.b16 %v3029, %v3027
        %v3054 = vpack.c.b16 %v3032, %v3030
        %v3055 = vpack.c.b16 %v3033, %v3031
        %v3056 = vpack.c.b16 %v3036, %v3034
        %v3057 = vpack.c.b16 %v3037, %v3035
        %v3058 = vpack.c.b16 %v3040, %v3038
        %v3059 = vpack.c.b16 %v3041, %v3039
        %v3060 = vpack.c.b16 %v3044, %v3042
        %v3061 = vpack.c.b16 %v3045, %v3043
        %3078 = vmatprep.subr.bf16.mxu0 %v3047
        %3079 = vmatpush1.bf16.msra.mxu0 %v3046
        %3080 = vmatprep.subr.bf16.mxu0 %v3049
        %3081 = vmatpush1.bf16.msra.mxu0 %v3048
        %3082 = vmatprep.subr.bf16.mxu0 %v3051
        %3083 = vmatpush1.bf16.msra.mxu0 %v3050
        %3084 = vmatprep.subr.bf16.mxu0 %v3053
        %3085 = vmatpush1.bf16.msra.mxu0 %v3052
        %3086 = vmatprep.subr.bf16.mxu0 %v3055
        %3087 = vmatpush1.bf16.msra.mxu0 %v3054
        %3088 = vmatprep.subr.bf16.mxu0 %v3057
        %3089 = vmatpush1.bf16.msra.mxu0 %v3056
        %3090 = vmatprep.subr.bf16.mxu0 %v3059
        %3091 = vmatpush1.bf16.msra.mxu0 %v3058
        %3092 = vmatprep.subr.bf16.mxu0 %v3061
        %3093 = vmatpush1.bf16.msra.mxu0 %v3060
        %3094 = vmatprep.subr.bf16.mxu0 0
        %3095 = vmatpush1.bf16.msra.mxu0 0
        %3096 = vmatprep.subr.bf16.mxu0 0
        %3097 = vmatpush1.bf16.msra.mxu0 0
        %3098 = vmatprep.subr.bf16.mxu0 0
        %3099 = vmatpush1.bf16.msra.mxu0 0
        %3100 = vmatprep.subr.bf16.mxu0 0
        %3101 = vmatpush1.bf16.msra.mxu0 0
        %3102 = vmatprep.subr.bf16.mxu0 0
        %3103 = vmatpush1.bf16.msra.mxu0 0
        %3104 = vmatprep.subr.bf16.mxu0 0
        %3105 = vmatpush1.bf16.msra.mxu0 0
        %3106 = vmatprep.subr.bf16.mxu0 0
        %3107 = vmatpush1.bf16.msra.mxu0 0
        %3108 = vmatprep.subr.bf16.mxu0 0
        %3109 = vmatpush1.bf16.msra.mxu0 0
        %3110 = vmatprep.mubr.bf16.mxu0 0
        %3111 = vmatmul.mubr.bf16.gmra.mrb[0].mxu0 %v2966
        %v3112 = vpop.f32.mrb[0].mxu0
        %v3113 = vadd.f32 %v2991, %v3112
        %v3114 = vpop.f32.mrb[0].mxu0
        %v3115 = vadd.f32 %v2995, %v3114
        %v3116 = vpop.f32.mrb[0].mxu0
        %v3117 = vadd.f32 %v2991, %v3116
        %v3118 = vpop.f32.mrb[0].mxu0
        %v3119 = vadd.f32 %v2995, %v3118
        %3120 = vmatprep.mubr.bf16.mxu0 0
        %3121 = vmatmul.mubr.bf16.gmra.mrb[0].mxu0 %v2967
        %v3122 = vpop.f32.mrb[0].mxu0
        %v3123 = vadd.f32 %v2991, %v3122
        %v3124 = vpop.f32.mrb[0].mxu0
        %v3125 = vadd.f32 %v2995, %v3124
        %v3126 = vpop.f32.mrb[0].mxu0
        %v3127 = vadd.f32 %v2991, %v3126
        %v3128 = vpop.f32.mrb[0].mxu0
        %v3129 = vadd.f32 %v2995, %v3128
        %3130 = vmatprep.mubr.bf16.mxu0 0
        %3131 = vmatmul.mubr.bf16.gmra.mrb[0].mxu0 %v2968
        %v3132 = vpop.f32.mrb[0].mxu0
        %v3133 = vadd.f32 %v2991, %v3132
        %v3134 = vpop.f32.mrb[0].mxu0
        %v3135 = vadd.f32 %v2995, %v3134
        %v3136 = vpop.f32.mrb[0].mxu0
        %v3137 = vadd.f32 %v2991, %v3136
        %v3138 = vpop.f32.mrb[0].mxu0
        %v3139 = vadd.f32 %v2995, %v3138
        %3140 = vmatprep.mubr.bf16.mxu0 0
        %3141 = vmatmul.mubr.bf16.gmra.mrb[0].mxu0 %v2969
        %v3142 = vpop.f32.mrb[0].mxu0
        %v3143 = vadd.f32 %v2991, %v3142
        %v3144 = vpop.f32.mrb[0].mxu0
        %v3145 = vadd.f32 %v2995, %v3144
        %v3146 = vpop.f32.mrb[0].mxu0
        %v3147 = vadd.f32 %v2991, %v3146
        %v3148 = vpop.f32.mrb[0].mxu0
        %v3149 = vadd.f32 %v2995, %v3148
        %3150 = vdwg.mxu0
        %v3151 = vmax.f32 %v3113, 0.0
        %v3152 = vmax.f32 %v3115, 0.0
        %v3153 = vmax.f32 %v3117, 0.0
        %v3154 = vmax.f32 %v3119, 0.0
        %v3155 = vmax.f32 %v3123, 0.0
        %v3156 = vmax.f32 %v3125, 0.0
        %v3157 = vmax.f32 %v3127, 0.0
        %v3158 = vmax.f32 %v3129, 0.0
        %v3159 = vmax.f32 %v3133, 0.0
        %v3160 = vmax.f32 %v3135, 0.0
        %v3161 = vmax.f32 %v3137, 0.0
        %v3162 = vmax.f32 %v3139, 0.0
        %v3163 = vmax.f32 %v3143, 0.0
        %v3164 = vmax.f32 %v3145, 0.0
        %v3165 = vmax.f32 %v3147, 0.0
        %v3166 = vmax.f32 %v3149, 0.0
        %v3167 = vpack.c.bf16 %v3153, %v3151
        %v3168 = vpack.c.bf16 %v3154, %v3152
        %v3169 = vpack.c.bf16 %v3157, %v3155
        %v3170 = vpack.c.bf16 %v3158, %v3156
        %v3171 = vpack.c.bf16 %v3161, %v3159
        %v3172 = vpack.c.bf16 %v3162, %v3160
        %v3173 = vpack.c.bf16 %v3165, %v3163
        %v3174 = vpack.c.bf16 %v3166, %v3164
        %v3175 = vld [vmem:[#allocation18] sm:$0xf]
        %v3176 = vld [vmem:[#allocation18 + $0x4] sm:$0xf]
        %v3177 = vld [vmem:[#allocation18 + $0x8] sm:$0xf]
        %v3178 = vld [vmem:[#allocation18 + $0xc] sm:$0xf]
        %v3179 = vld [vmem:[#allocation18 + $0x10] sm:$0xf]
        %v3180 = vld [vmem:[#allocation18 + $0x14] sm:$0xf]
        %v3181 = vld [vmem:[#allocation18 + $0x18] sm:$0xf]
        %v3182 = vld [vmem:[#allocation18 + $0x1c] sm:$0xf]
        %v3183 = vld [vmem:[#allocation18 + $0x20] sm:$0xf]
        %v3184 = vld [vmem:[#allocation18 + $0x24] sm:$0xf]
        %v3185 = vld [vmem:[#allocation18 + $0x28] sm:$0xf]
        %v3186 = vld [vmem:[#allocation18 + $0x2c] sm:$0xf]
        %v3187 = vld [vmem:[#allocation18 + $0x30] sm:$0xf]
        %v3188 = vld [vmem:[#allocation18 + $0x34] sm:$0xf]
        %v3189 = vld [vmem:[#allocation18 + $0x38] sm:$0xf]
        %v3190 = vld [vmem:[#allocation18 + $0x3c] sm:$0xf]
        %v3191 = vld [vmem:[#allocation18 + $0x40] sm:$0xf]
        %v3192 = vld [vmem:[#allocation18 + $0x44] sm:$0xf]
        %v3193 = vld [vmem:[#allocation18 + $0x48] sm:$0xf]
        %v3194 = vld [vmem:[#allocation18 + $0x4c] sm:$0xf]
        %v3195 = vld [vmem:[#allocation18 + $0x50] sm:$0xf]
        %v3196 = vld [vmem:[#allocation18 + $0x54] sm:$0xf]
        %v3197 = vld [vmem:[#allocation18 + $0x58] sm:$0xf]
        %v3198 = vld [vmem:[#allocation18 + $0x5c] sm:$0xf]
        %v3199 = vld [vmem:[#allocation18 + $0x60] sm:$0xf]
        %v3200 = vld [vmem:[#allocation18 + $0x64] sm:$0xf]
        %v3201 = vld [vmem:[#allocation18 + $0x68] sm:$0xf]
        %v3202 = vld [vmem:[#allocation18 + $0x6c] sm:$0xf]
        %v3203 = vld [vmem:[#allocation18 + $0x70] sm:$0xf]
        %v3204 = vld [vmem:[#allocation18 + $0x74] sm:$0xf]
        %v3205 = vld [vmem:[#allocation18 + $0x78] sm:$0xf]
        %v3206 = vld [vmem:[#allocation18 + $0x7c] sm:$0xf]
        %v3207 = vld [vmem:[%s16] sm:$0x1]
        %v3209 = vlaneseq
        %v3210 = vshrl.u32 %v3209, 7
        %v3211 = vsub.s32 0, %v3210
        %v3212 = vrot.slane %v3207, %v3211
        %v3246 = vunpack.c.l.b16 %v3175
        %v3247 = vunpack.c.l.b16 %v3176
        %v3248 = vunpack.c.l.b16 %v3177
        %v3249 = vunpack.c.l.b16 %v3178
        %v3250 = vunpack.c.l.b16 %v3179
        %v3251 = vunpack.c.l.b16 %v3180
        %v3252 = vunpack.c.l.b16 %v3181
        %v3253 = vunpack.c.l.b16 %v3182
        %v3254 = vunpack.c.l.b16 %v3183
        %v3255 = vunpack.c.l.b16 %v3184
        %v3256 = vunpack.c.l.b16 %v3185
        %v3257 = vunpack.c.l.b16 %v3186
        %v3258 = vunpack.c.l.b16 %v3187
        %v3259 = vunpack.c.l.b16 %v3188
        %v3260 = vunpack.c.l.b16 %v3189
        %v3261 = vunpack.c.l.b16 %v3190
        %v3262 = vunpack.c.l.b16 %v3191
        %v3263 = vunpack.c.l.b16 %v3192
        %v3264 = vunpack.c.l.b16 %v3193
        %v3265 = vunpack.c.l.b16 %v3194
        %v3266 = vunpack.c.l.b16 %v3195
        %v3267 = vunpack.c.l.b16 %v3196
        %v3268 = vunpack.c.l.b16 %v3197
        %v3269 = vunpack.c.l.b16 %v3198
        %v3270 = vunpack.c.l.b16 %v3199
        %v3271 = vunpack.c.l.b16 %v3200
        %v3272 = vunpack.c.l.b16 %v3201
        %v3273 = vunpack.c.l.b16 %v3202
        %v3274 = vunpack.c.l.b16 %v3203
        %v3275 = vunpack.c.l.b16 %v3204
        %v3276 = vunpack.c.l.b16 %v3205
        %v3277 = vunpack.c.l.b16 %v3206
        %v3278 = vpack.c.b16 %v3247, %v3246
        %v3279 = vpack.c.b16 %v3249, %v3248
        %v3280 = vpack.c.b16 %v3251, %v3250
        %v3281 = vpack.c.b16 %v3253, %v3252
        %v3282 = vpack.c.b16 %v3255, %v3254
        %v3283 = vpack.c.b16 %v3257, %v3256
        %v3284 = vpack.c.b16 %v3259, %v3258
        %v3285 = vpack.c.b16 %v3261, %v3260
        %v3286 = vpack.c.b16 %v3263, %v3262
        %v3287 = vpack.c.b16 %v3265, %v3264
        %v3288 = vpack.c.b16 %v3267, %v3266
        %v3289 = vpack.c.b16 %v3269, %v3268
        %v3290 = vpack.c.b16 %v3271, %v3270
        %v3291 = vpack.c.b16 %v3273, %v3272
        %v3292 = vpack.c.b16 %v3275, %v3274
        %v3293 = vpack.c.b16 %v3277, %v3276
        %3310 = vmatprep.subr.bf16.mxu0 0
        %3311 = vmatpush1.bf16.msra.mxu0 %v3278
        %3312 = vmatprep.subr.bf16.mxu0 0
        %3313 = vmatpush1.bf16.msra.mxu0 %v3279
        %3314 = vmatprep.subr.bf16.mxu0 0
        %3315 = vmatpush1.bf16.msra.mxu0 %v3280
        %3316 = vmatprep.subr.bf16.mxu0 0
        %3317 = vmatpush1.bf16.msra.mxu0 %v3281
        %3318 = vmatprep.subr.bf16.mxu0 0
        %3319 = vmatpush1.bf16.msra.mxu0 %v3282
        %3320 = vmatprep.subr.bf16.mxu0 0
        %3321 = vmatpush1.bf16.msra.mxu0 %v3283
        %3322 = vmatprep.subr.bf16.mxu0 0
        %3323 = vmatpush1.bf16.msra.mxu0 %v3284
        %3324 = vmatprep.subr.bf16.mxu0 0
        %3325 = vmatpush1.bf16.msra.mxu0 %v3285
        %3326 = vmatprep.subr.bf16.mxu0 0
        %3327 = vmatpush1.bf16.msra.mxu0 %v3286
        %3328 = vmatprep.subr.bf16.mxu0 0
        %3329 = vmatpush1.bf16.msra.mxu0 %v3287
        %3330 = vmatprep.subr.bf16.mxu0 0
        %3331 = vmatpush1.bf16.msra.mxu0 %v3288
        %3332 = vmatprep.subr.bf16.mxu0 0
        %3333 = vmatpush1.bf16.msra.mxu0 %v3289
        %3334 = vmatprep.subr.bf16.mxu0 0
        %3335 = vmatpush1.bf16.msra.mxu0 %v3290
        %3336 = vmatprep.subr.bf16.mxu0 0
        %3337 = vmatpush1.bf16.msra.mxu0 %v3291
        %3338 = vmatprep.subr.bf16.mxu0 0
        %3339 = vmatpush1.bf16.msra.mxu0 %v3292
        %3340 = vmatprep.subr.bf16.mxu0 0
        %3341 = vmatpush1.bf16.msra.mxu0 %v3293
        %3342 = vmatprep.mubr.bf16.mxu0 %v3168
        %3343 = vmatmul.mubr.bf16.gmra.mrb[0].mxu0 %v3167
        %v3344 = vpop.f32.mrb[0].mxu0
        %v3345 = vadd.f32 %v3212, %v3344
        %v3346 = vpop.f32.mrb[0].mxu0
        %v3347 = vpop.f32.mrb[0].mxu0
        %v3348 = vadd.f32 %v3212, %v3347
        %v3349 = vpop.f32.mrb[0].mxu0
        %3350 = vmatprep.mubr.bf16.mxu0 %v3170
        %3351 = vmatmul.mubr.bf16.gmra.mrb[0].mxu0 %v3169
        %v3352 = vpop.f32.mrb[0].mxu0
        %v3353 = vadd.f32 %v3212, %v3352
        %v3354 = vpop.f32.mrb[0].mxu0
        %v3355 = vpop.f32.mrb[0].mxu0
        %v3356 = vadd.f32 %v3212, %v3355
        %v3357 = vpop.f32.mrb[0].mxu0
        %3358 = vmatprep.mubr.bf16.mxu0 %v3172
        %3359 = vmatmul.mubr.bf16.gmra.mrb[0].mxu0 %v3171
        %v3360 = vpop.f32.mrb[0].mxu0
        %v3361 = vadd.f32 %v3212, %v3360
        %v3362 = vpop.f32.mrb[0].mxu0
        %v3363 = vpop.f32.mrb[0].mxu0
        %v3364 = vadd.f32 %v3212, %v3363
        %v3365 = vpop.f32.mrb[0].mxu0
        %3366 = vmatprep.mubr.bf16.mxu0 %v3174
        %3367 = vmatmul.mubr.bf16.gmra.mrb[0].mxu0 %v3173
        %v3368 = vpop.f32.mrb[0].mxu0
        %v3369 = vadd.f32 %v3212, %v3368
        %v3370 = vpop.f32.mrb[0].mxu0
        %v3371 = vpop.f32.mrb[0].mxu0
        %v3372 = vadd.f32 %v3212, %v3371
        %v3373 = vpop.f32.mrb[0].mxu0
        %3374 = vdwg.mxu0
        %v3375 = vadd.f32 %v2958, %v3345
        %v3376 = vadd.f32 %v2959, %v3348
        %v3377 = vadd.f32 %v2960, %v3353
        %v3378 = vadd.f32 %v2961, %v3356
        %v3379 = vadd.f32 %v2962, %v3361
        %v3380 = vadd.f32 %v2963, %v3364
        %v3381 = vadd.f32 %v2964, %v3369
        %v3382 = vadd.f32 %v2965, %v3372
        %v3383 = vld [vmem:[%s17] sm:$0x1]
        %v3384 = vld [vmem:[%s18] sm:$0x1]
        %3385 = vadd.xlane.f32.xlu0 %v3375
        %v3386 = vpop.xlane.xlu0 %3385
        %3387 = vadd.xlane.f32.xlu0 %v3376
        %v3388 = vpop.xlane.xlu0 %3387
        %3389 = vadd.xlane.f32.xlu0 %v3377
        %v3390 = vpop.xlane.xlu0 %3389
        %3391 = vadd.xlane.f32.xlu0 %v3378
        %v3392 = vpop.xlane.xlu0 %3391
        %3393 = vadd.xlane.f32.xlu0 %v3379
        %v3394 = vpop.xlane.xlu0 %3393
        %3395 = vadd.xlane.f32.xlu0 %v3380
        %v3396 = vpop.xlane.xlu0 %3395
        %3397 = vadd.xlane.f32.xlu0 %v3381
        %v3398 = vpop.xlane.xlu0 %3397
        %3399 = vadd.xlane.f32.xlu0 %v3382
        %v3400 = vpop.xlane.xlu0 %3399
        %v3401 = vmul.f32 %v3386, %v2865
        %v3402 = vmul.f32 %v3388, %v2865
        %v3403 = vmul.f32 %v3390, %v2865
        %v3404 = vmul.f32 %v3392, %v2865
        %v3405 = vmul.f32 %v3394, %v2865
        %v3406 = vmul.f32 %v3396, %v2865
        %v3407 = vmul.f32 %v3398, %v2865
        %v3408 = vmul.f32 %v3400, %v2865
        %v3409 = vsub.f32 %v3375, %v3401
        %v3410 = vsub.f32 %v3376, %v3402
        %v3411 = vsub.f32 %v3377, %v3403
        %v3412 = vsub.f32 %v3378, %v3404
        %v3413 = vsub.f32 %v3379, %v3405
        %v3414 = vsub.f32 %v3380, %v3406
        %v3415 = vsub.f32 %v3381, %v3407
        %v3416 = vsub.f32 %v3382, %v3408
        %v3417 = vmul.f32 %v3409, %v3409
        %v3418 = vmul.f32 %v3410, %v3410
        %v3419 = vmul.f32 %v3411, %v3411
        %v3420 = vmul.f32 %v3412, %v3412
        %v3421 = vmul.f32 %v3413, %v3413
        %v3422 = vmul.f32 %v3414, %v3414
        %v3423 = vmul.f32 %v3415, %v3415
        %v3424 = vmul.f32 %v3416, %v3416
        %3425 = vadd.xlane.f32.xlu0 %v3417
        %v3426 = vpop.xlane.xlu0 %3425
        %3427 = vadd.xlane.f32.xlu0 %v3418
        %v3428 = vpop.xlane.xlu0 %3427
        %3429 = vadd.xlane.f32.xlu0 %v3419
        %v3430 = vpop.xlane.xlu0 %3429
        %3431 = vadd.xlane.f32.xlu0 %v3420
        %v3432 = vpop.xlane.xlu0 %3431
        %3433 = vadd.xlane.f32.xlu0 %v3421
        %v3434 = vpop.xlane.xlu0 %3433
        %3435 = vadd.xlane.f32.xlu0 %v3422
        %v3436 = vpop.xlane.xlu0 %3435
        %3437 = vadd.xlane.f32.xlu0 %v3423
        %v3438 = vpop.xlane.xlu0 %3437
        %3439 = vadd.xlane.f32.xlu0 %v3424
        %v3440 = vpop.xlane.xlu0 %3439
        %v3441 = vmul.f32 %v3426, %v2865
        %v3442 = vmul.f32 %v3428, %v2865
        %v3443 = vmul.f32 %v3430, %v2865
        %v3444 = vmul.f32 %v3432, %v2865
        %v3445 = vmul.f32 %v3434, %v2865
        %v3446 = vmul.f32 %v3436, %v2865
        %v3447 = vmul.f32 %v3438, %v2865
        %v3448 = vmul.f32 %v3440, %v2865
        %v3449 = vadd.f32 %v3441, 1e-05
        %v3450 = vadd.f32 %v3442, 1e-05
        %v3451 = vadd.f32 %v3443, 1e-05
        %v3452 = vadd.f32 %v3444, 1e-05
        %v3453 = vadd.f32 %v3445, 1e-05
        %v3454 = vadd.f32 %v3446, 1e-05
        %v3455 = vadd.f32 %v3447, 1e-05
        %v3456 = vadd.f32 %v3448, 1e-05
        %v3457 = vrsqrt.pop %v3449
        %v3458 = vrsqrt.pop %v3450
        %v3459 = vrsqrt.pop %v3451
        %v3460 = vrsqrt.pop %v3452
        %v3461 = vrsqrt.pop %v3453
        %v3462 = vrsqrt.pop %v3454
        %v3463 = vrsqrt.pop %v3455
        %v3464 = vrsqrt.pop %v3456
        %v3465 = vmul.f32 %v3409, %v3457
        %v3466 = vmul.f32 %v3410, %v3458
        %v3467 = vmul.f32 %v3411, %v3459
        %v3468 = vmul.f32 %v3412, %v3460
        %v3469 = vmul.f32 %v3413, %v3461
        %v3470 = vmul.f32 %v3414, %v3462
        %v3471 = vmul.f32 %v3415, %v3463
        %v3472 = vmul.f32 %v3416, %v3464
        %v3474 = vlaneseq
        %v3475 = vshrl.u32 %v3474, 7
        %v3476 = vsub.s32 0, %v3475
        %v3477 = vrot.slane %v3383, %v3476
        %v3479 = vmul.f32 %v3465, %v3477
        %v3480 = vmul.f32 %v3466, %v3477
        %v3481 = vmul.f32 %v3467, %v3477
        %v3482 = vmul.f32 %v3468, %v3477
        %v3483 = vmul.f32 %v3469, %v3477
        %v3484 = vmul.f32 %v3470, %v3477
        %v3485 = vmul.f32 %v3471, %v3477
        %v3486 = vmul.f32 %v3472, %v3477
        %v3488 = vlaneseq
        %v3489 = vshrl.u32 %v3488, 7
        %v3490 = vsub.s32 0, %v3489
        %v3491 = vrot.slane %v3384, %v3490
        %v3493 = vadd.f32 %v3479, %v3491
        %v3494 = vadd.f32 %v3480, %v3491
        %v3495 = vadd.f32 %v3481, %v3491
        %v3496 = vadd.f32 %v3482, %v3491
        %v3497 = vadd.f32 %v3483, %v3491
        %v3498 = vadd.f32 %v3484, %v3491
        %v3499 = vadd.f32 %v3485, %v3491
        %v3500 = vadd.f32 %v3486, %v3491
        %3501 = vst [vmem:[%s796] sm:$0xff] %v3493
        %3502 = vst [vmem:[%s796 + $0x8] sm:$0xff] %v3494
        %3503 = vst [vmem:[%s796 + $0x10] sm:$0xff] %v3495
        %3504 = vst [vmem:[%s796 + $0x18] sm:$0xff] %v3496
        %3505 = vst [vmem:[%s796 + $0x20] sm:$0xff] %v3497
        %3506 = vst [vmem:[%s796 + $0x28] sm:$0xff] %v3498
        %3507 = vst [vmem:[%s796 + $0x30] sm:$0xff] %v3499
        %3508 = vst [vmem:[%s796 + $0x38] sm:$0xff] %v3500
        %s3509 = sand.u32 %s480, 1
        %s3510 = scalar_lea.sflag [#allocation6], %s3509
        %s3511 = sand.u32 %s480, 1
        %s3512 = smul.addr %s3511, 64
        %s3513 = scalar_lea.vmem [#allocation19], %s3512
        // Predicated region
        $region137: #{tpu_custom_call.1} parent=95 // pred_check
          %p3514 = pneg %p490
        $region138: #{tpu_custom_call.1} parent=95 // pred_check_branch
          %3516 = sbr.rel (%p3514) target = $region140
        $region139: #{tpu_custom_call.1} parent=95 // pred_region
          %s3517 = smul.u32 8, %s47
          %s3519 = ssub.s32 1024, 1024
          %3520 = vsyncadd %s3510, %s3519
          %s3521 = smul.addr %s46, 16
          %s3522 = sadd.s32 %s3517, %s3521
          %s3523 = smul.addr %s3522, 128
          %s3524 = scalar_lea.hbm %s19, %s3523
          %s3525 = sshll.u32 %s3513, 4
          %s3526 = int_to_ptr.vmem [resolvable:$true] %s3525
          %3531 = dma.vmem_to_hbm [thread:$0]  %s3526, 1024, %s3524, %s3510, 128, 128, 8
        $region140: #{tpu_custom_call.1} parent=95 // pred_fallthru
          _
      $region96: #{tpu_custom_call.1} parent=5 // pred_fallthru
        _
      %p3532 = scmp.le.s32.totalorder 2, %s37
      // Predicated region
      $region141: #{tpu_custom_call.1} parent=5 // pred_check
        %p3533 = pneg %p3532
      $region142: #{tpu_custom_call.1} parent=5 // pred_check_branch
        %3535 = sbr.rel (%p3533) target = $region144
      $region143: #{tpu_custom_call.1} parent=5 // pred_region
        %s3536 = ssub.s32 %s37, 2
        // Predicated region
        $region145: #{tpu_custom_call.1} parent=143 // pred_check
          %p3537 = pneg %p496
        $region146: #{tpu_custom_call.1} parent=143 // pred_check_branch
          %3539 = sbr.rel (%p3537) target = $region148
        $region147: #{tpu_custom_call.1} parent=143 // pred_region
          %s3540 = sand.u32 %s481, 1
          %s3541 = scalar_lea.sflag [#allocation6], %s3540
          %s3542 = sand.u32 %s481, 1
          %s3543 = smul.addr %s3542, 64
          %s3544 = scalar_lea.vmem [#allocation19], %s3543
          %3545 = dma.done %s3541, 1024
        $region148: #{tpu_custom_call.1} parent=143 // pred_fallthru
          _
      $region144: #{tpu_custom_call.1} parent=5 // pred_fallthru
        _
    $region6: #{tpu_custom_call.1} parent=1 // loop_footer
      %s41 = sadd.s32 1, %s37
    $region7: #{tpu_custom_call.1} parent=1 // loop_footer_branch
      %36 = sbr.rel target = $region3
    $region8: #{tpu_custom_call.1} parent=1 // loop_exit
      _
    %3546 = vsyncpa [#allocation5], 1
    %s3547 = scalar_lea.sflag [#allocation5], 1
    %3548 = vsyncpa %s3547, 1
    %3549 = vsyncpa [#allocation8], 1
    %s3550 = scalar_lea.sflag [#allocation8], 1
    %3551 = vsyncpa %s3550, 1
    %3552 = vsyncpa [#allocation11], 1
    %3553 = vsyncpa [#allocation14], 1
    %3554 = vsyncpa [#allocation17], 1
    %3555 = vsyncpa [#allocation6], 1
    %s3556 = scalar_lea.sflag [#allocation6], 1
    %3557 = vsyncpa %s3556, 1

</llo_original>
